<compile_context>
chip_gen: v7x
topology: tpu7x:2x2x1
jax: 0.10.0
libtpu: 0.0.40
codegen_flags: <defaults>
</compile_context>

<pallas_src>
import functools

import jax
import jax.numpy as jnp
from jax import lax
from jax.experimental import pallas as pl
from jax.experimental.pallas import tpu as pltpu

_LANE = 128
_SUBLANE = 8


def _round_up(x, m):
    return ((x + m - 1) // m) * m


def _whole_spec(shape):
    """Full-array block with a constant index map -> fetched once, VMEM-resident."""
    n = len(shape)
    return pl.BlockSpec(tuple(shape), lambda *args, _n=n: (0,) * _n)


def prepare_params(params):
    """Torch-layout params -> padded, gate-fused, lane-aligned kernel params (once)."""
    f32 = jnp.float32
    emb = params["embedding"].astype(f32)              # (O, E)
    O, E = emb.shape
    H = params["whh0"].shape[0]
    Hp = _round_up(H, _LANE)
    Op = _round_up(O, _LANE)
    Ep = _round_up(E, _LANE)

    def pad2(x, rows, cols):
        x = x.astype(f32)
        return jnp.pad(x, ((0, rows - x.shape[0]), (0, cols - x.shape[1])))

    def fused_gate_w(w, in_pad):
        # (in, 3H) cols ordered [r|z|n] -> (in_pad, 3*Hp), each gate lane-padded to Hp.
        ind = w.shape[0]
        w3 = w.astype(f32).reshape(ind, 3, H)
        w3 = jnp.pad(w3, ((0, in_pad - ind), (0, 0), (0, Hp - H)))
        return w3.reshape(in_pad, 3 * Hp)

    def fused_gate_b(b):
        b3 = b.astype(f32).reshape(3, H)
        b3 = jnp.pad(b3, ((0, 0), (0, Hp - H)))
        return b3.reshape(3 * Hp)

    gru_b = jnp.stack(
        [fused_gate_b(params["bih0"]), fused_gate_b(params["bhh0"]),
         fused_gate_b(params["bih1"]), fused_gate_b(params["bhh1"])], axis=0)  # (4, 3*Hp)

    wc = params["wc"].astype(f32)

    return {
        "emb":   emb,                                   # raw table; wrapper gathers rows
        "wih0":  fused_gate_w(params["wih0"], Ep),      # (Ep, 3*Hp)
        "whh0":  fused_gate_w(params["whh0"], Hp),      # (Hp, 3*Hp)
        "wih1":  fused_gate_w(params["wih1"], Hp),
        "whh1":  fused_gate_w(params["whh1"], Hp),
        "gru_b": gru_b,                                 # rows: bih0, bhh0, bih1, bhh1
        "wc_h":  pad2(wc[:H], Hp, Hp),
        "wc_c":  pad2(wc[H:], Hp, Hp),
        "bc":    pad2(params["bc"], 1, Hp),
        "wo":    pad2(params["wo"], Hp, Op),
        "bo":    pad2(params["bo"], 1, Op),
    }


def decoder_decode(prep, tokens, hidden_state, encoder_outputs, mask, step_block=8):
    """Run T decoder steps (teacher-forced) in ONE pallas_call.

    tokens (T,B) int32, hidden_state (2,B,H), encoder_outputs (S,B,H), mask (B,S).
    Returns (logits (T,B,O), final hidden (2,B,H)).
    """
    T, B = tokens.shape
    H = hidden_state.shape[-1]
    O, E = prep["emb"].shape
    Hp = prep["whh0"].shape[0]
    Ep = prep["wih0"].shape[0]
    Op = prep["wo"].shape[1]
    S = encoder_outputs.shape[0]
    Sp = _round_up(S, _LANE)
    Bp = max(_SUBLANE, _round_up(B, _SUBLANE))
    TB = min(step_block, T)                  # decode steps per grid invocation
    Tpad = _round_up(T, TB)

    # ---- loop-invariant wrapper work: done once per sequence, not per step.
    # Embedding gather for all steps at once (teacher forcing -> ids known).
    tok = jnp.pad(tokens.astype(jnp.int32), ((0, Tpad - T), (0, Bp - B)))
    embedded = prep["emb"][tok]                                          # (Tpad,Bp,E)
    embedded = jnp.pad(embedded, ((0, 0), (0, 0), (0, Ep - E)))          # (Tpad,Bp,Ep)

    h_in = jnp.pad(hidden_state.astype(jnp.float32),
                   ((0, 0), (0, Bp - B), (0, Hp - H)))                   # (2,Bp,Hp)

    enc_c = jnp.transpose(encoder_outputs.astype(jnp.float32), (1, 0, 2))  # (B,S,H)
    enc_c = jnp.pad(enc_c, ((0, Bp - B), (0, Sp - S), (0, Hp - H)))        # (Bp,Sp,Hp)
    enc_s = jnp.transpose(enc_c, (0, 2, 1))                                # (Bp,Hp,Sp)

    bias = jnp.where(mask == 0, jnp.float32(-1e10), jnp.float32(0.0))[:, None, :]
    bias = jnp.pad(bias, ((0, Bp - B), (0, 0), (0, Sp - S)),
                   constant_values=jnp.float32(-1e10))                     # (Bp,1,Sp)

    def kernel(emb_ref, h_in_ref, enc_s_ref, enc_c_ref, bias_ref,
               wih0_ref, whh0_ref, wih1_ref, whh1_ref, gb_ref,
               wch_ref, wcc_ref, bc_ref, wo_ref, bo_ref,
               logits_ref, h_out_ref):
        blk = pl.program_id(0)

        # Initialize the hidden-state carry (lives in the resident output block).
        @pl.when(blk == 0)
        def _():
            h_out_ref[...] = h_in_ref[...]

        gb = gb_ref[...]                                     # (4, 3*Hp)
        bih0, bhh0, bih1, bhh1 = gb[0:1], gb[1:2], gb[2:3], gb[3:4]
        bias_v = bias_ref[...]
        bc = bc_ref[...]
        bo = bo_ref[...]

        def gru_layer(x, h, wih_ref, whh_ref, bih, bhh):
            # Fused-gate matmuls: lane-dense (Bp, 3*Hp) results; r/z/n slices
            # sit at lane offsets 0/Hp/2Hp (multiples of 128 -> whole-vreg picks).
            gi = jnp.dot(x, wih_ref[...], preferred_element_type=jnp.float32) + bih
            gh = jnp.dot(h, whh_ref[...], preferred_element_type=jnp.float32) + bhh
            r = jax.nn.sigmoid(gi[:, 0:Hp] + gh[:, 0:Hp])
            z = jax.nn.sigmoid(gi[:, Hp:2 * Hp] + gh[:, Hp:2 * Hp])
            n = jnp.tanh(gi[:, 2 * Hp:3 * Hp] + r * gh[:, 2 * Hp:3 * Hp])  # bhh_n gated by r
            return (1.0 - z) * n + z * h

        def step(tt, carry):
            h0, h1 = carry
            x = emb_ref[tt]                                  # (Bp, Ep) pre-gathered row
            h0n = gru_layer(x, h0, wih0_ref, whh0_ref, bih0, bhh0)
            h1n = gru_layer(h0n, h1, wih1_ref, whh1_ref, bih1, bhh1)
            gru_out = h1n                                    # (Bp, Hp)

            # Luong "dot" attention; enc_s is pre-transposed so the score
            # contraction is a standard (K on sublane) MXU matmul.
            scores = jnp.einsum("bqh,bhs->bqs", gru_out[:, None, :], enc_s_ref[...],
                                preferred_element_type=jnp.float32) + bias_v
            scores = scores - jnp.max(scores, axis=2, keepdims=True)
            p = jnp.exp(scores)
            attn = p * pl.reciprocal(jnp.sum(p, axis=2, keepdims=True))   # exact
            ctx = jnp.einsum("bqs,bsh->bqh", attn, enc_c_ref[...],
                             preferred_element_type=jnp.float32)[:, 0, :]

            # concat Linear split into two matmuls (no in-kernel concat) + out.
            concat_out = jnp.tanh(
                jnp.dot(gru_out, wch_ref[...], preferred_element_type=jnp.float32)
                + jnp.dot(ctx, wcc_ref[...], preferred_element_type=jnp.float32)
                + bc)
            logits_ref[tt] = jnp.dot(concat_out, wo_ref[...],
                                     preferred_element_type=jnp.float32) + bo

            # Do not advance the hidden carry on padded (t >= T) steps.
            valid = (blk * TB + tt) < T
            return (jnp.where(valid, h0n, h0), jnp.where(valid, h1n, h1))

        h0, h1 = lax.fori_loop(0, TB, step, (h_out_ref[0], h_out_ref[1]), unroll=True)
        h_out_ref[0] = h0
        h_out_ref[1] = h1

    inputs = [
        embedded, h_in, enc_s, enc_c, bias,
        prep["wih0"], prep["whh0"], prep["wih1"], prep["whh1"], prep["gru_b"],
        prep["wc_h"], prep["wc_c"], prep["bc"], prep["wo"], prep["bo"],
    ]

    in_specs = [pl.BlockSpec((TB, Bp, Ep), lambda i: (i, 0, 0))] + \
               [_whole_spec(x.shape) for x in inputs[1:]]
    out_specs = (
        pl.BlockSpec((TB, Bp, Op), lambda i: (i, 0, 0)),     # per-block logits
        _whole_spec((2, Bp, Hp)),                            # resident hidden carry
    )

    grid_spec = pltpu.PrefetchScalarGridSpec(
        num_scalar_prefetch=0,
        grid=(Tpad // TB,),
        in_specs=in_specs,
        out_specs=out_specs,
    )

    logits_p, h_out_p = pl.pallas_call(
        kernel,
        grid_spec=grid_spec,
        out_shape=(
            jax.ShapeDtypeStruct((Tpad, Bp, Op), jnp.float32),
            jax.ShapeDtypeStruct((2, Bp, Hp), jnp.float32),
        ),
        compiler_params=pltpu.CompilerParams(
            dimension_semantics=("arbitrary",),   # sequential carry across step blocks
        ),
    )(*inputs)

    return logits_p[:T, :B, :O], h_out_p[:, :B, :H]


def decoder_forward(prep, current_token, hidden_state, encoder_outputs, mask):
    """Single decode step — matches torch Decoder.forward (eval mode)."""
    logits, hidden = decoder_decode(prep, current_token, hidden_state,
                                    encoder_outputs, mask)
    return logits[0], hidden


def reference_forward(params, current_token, hidden_state, encoder_outputs, mask):
    """Pure-JAX reference replicating the torch forward (eval mode)."""
    H = hidden_state.shape[-1]
    emb = params["embedding"][current_token[0]]

    def gru_cell(x, h, wih, whh, bih, bhh):
        gi = x @ wih + bih
        gh = h @ whh + bhh
        r = jax.nn.sigmoid(gi[:, 0:H] + gh[:, 0:H])
        z = jax.nn.sigmoid(gi[:, H:2 * H] + gh[:, H:2 * H])
        n = jnp.tanh(gi[:, 2 * H:3 * H] + r * gh[:, 2 * H:3 * H])
        return (1.0 - z) * n + z * h

    h0 = gru_cell(emb, hidden_state[0], params["wih0"], params["whh0"],
                  params["bih0"], params["bhh0"])
    h1 = gru_cell(h0, hidden_state[1], params["wih1"], params["whh1"],
                  params["bih1"], params["bhh1"])
    gru_out = h1
    enc_bsh = jnp.transpose(encoder_outputs, (1, 0, 2))
    scores = jnp.einsum("bh,bsh->bs", gru_out, enc_bsh)
    scores = jnp.where(mask == 0, -1e10, scores)
    attn = jax.nn.softmax(scores, axis=1)
    context = jnp.einsum("bs,bsh->bh", attn, enc_bsh)
    concat_in = jnp.concatenate([gru_out, context], axis=1)
    concat_out = jnp.tanh(concat_in @ params["wc"] + params["bc"])
    logits = concat_out @ params["wo"] + params["bo"]
    return logits, jnp.stack([h0, h1], axis=0)


def make_params(key, embedding_size, hidden_size, output_size):
    E, H, O = embedding_size, hidden_size, output_size
    ks = jax.random.split(key, 16)
    s = 0.1
    return {
        "embedding": jax.random.normal(ks[0], (O, E), jnp.float32) * s,
        "wih0": jax.random.normal(ks[1], (E, 3 * H), jnp.float32) * s,
        "whh0": jax.random.normal(ks[2], (H, 3 * H), jnp.float32) * s,
        "bih0": jax.random.normal(ks[3], (1, 3 * H), jnp.float32) * s,
        "bhh0": jax.random.normal(ks[4], (1, 3 * H), jnp.float32) * s,
        "wih1": jax.random.normal(ks[5], (H, 3 * H), jnp.float32) * s,
        "whh1": jax.random.normal(ks[6], (H, 3 * H), jnp.float32) * s,
        "bih1": jax.random.normal(ks[7], (1, 3 * H), jnp.float32) * s,
        "bhh1": jax.random.normal(ks[8], (1, 3 * H), jnp.float32) * s,
        "wc": jax.random.normal(ks[9], (2 * H, H), jnp.float32) * s,
        "bc": jax.random.normal(ks[10], (1, H), jnp.float32) * s,
        "wo": jax.random.normal(ks[11], (H, O), jnp.float32) * s,
        "bo": jax.random.normal(ks[12], (1, O), jnp.float32) * s,
    }


if __name__ == "__main__":
    B, E, H, O, S, T = 4, 16, 32, 40, 8, 6   # batch, embed, hidden, vocab, src_len, steps

    key = jax.random.PRNGKey(0)
    kp, kt, kh, ke, kl = jax.random.split(key, 5)

    params = make_params(kp, E, H, O)
    prep = prepare_params(params)

    tokens = jax.random.randint(kt, (T, B), 0, O, dtype=jnp.int32)
    hidden_state = jax.random.normal(kh, (2, B, H), jnp.float32)
    encoder_outputs = jax.random.normal(ke, (S, B, H), jnp.float32)
    lengths = jax.random.randint(kl, (B,), 3, S + 1)
    mask = (jnp.arange(S)[None, :] < lengths[:, None]).astype(jnp.float32)  # (B, S)

    step_fn = jax.jit(decoder_forward)
    decode_fn = jax.jit(decoder_decode)                                      # TB=T, 1 grid step
    decode_blocked_fn = jax.jit(functools.partial(decoder_decode, step_block=4))  # grid=2, padded tail

    # --- single decode step: exactly the torch module's forward ---
    logits1, hidden1 = step_fn(prep, tokens[:1], hidden_state, encoder_outputs, mask)
    jax.block_until_ready((logits1, hidden1))
    ref_logits1, ref_hidden1 = reference_forward(params, tokens[:1], hidden_state,
                                                 encoder_outputs, mask)
    assert logits1.shape == (B, O) and hidden1.shape == (2, B, H)
    assert jnp.allclose(hidden1, ref_hidden1, atol=1e-3, rtol=1e-3)
    assert jnp.allclose(logits1, ref_logits1, atol=1e-3, rtol=1e-3)

    # --- step-by-step pure-JAX reference for the full decode ---
    ref_logits_all = []
    ref_h = hidden_state
    for t in range(T):
        rl, ref_h = reference_forward(params, tokens[t:t + 1], ref_h,
                                      encoder_outputs, mask)
        ref_logits_all.append(rl)

    # --- fused T-step decode: one pallas_call, weights stay VMEM-resident ---
    for fn in (decode_fn, decode_blocked_fn):
        logits_all, hidden_T = fn(prep, tokens, hidden_state, encoder_outputs, mask)
        jax.block_until_ready((logits_all, hidden_T))
        assert logits_all.shape == (T, B, O) and hidden_T.shape == (2, B, H)
        for t in range(T):
            assert jnp.allclose(logits_all[t], ref_logits_all[t], atol=1e-3, rtol=1e-3)
        assert jnp.allclose(hidden_T, ref_h, atol=1e-3, rtol=1e-3)

    print("KERNEL_OK")
</pallas_src>

<mosaic_0001>
module attributes {stable_mosaic.version = 11 : i64} {
  func.func @kernel(%arg0: i32, %arg1: memref<1x8x128xf32, #tpu.memory_space<vmem>>, %arg2: memref<2x8x128xf32, #tpu.memory_space<vmem>>, %arg3: memref<8x128x128xf32, #tpu.memory_space<vmem>>, %arg4: memref<8x128x128xf32, #tpu.memory_space<vmem>>, %arg5: memref<8x1x128xf32, #tpu.memory_space<vmem>>, %arg6: memref<128x384xf32, #tpu.memory_space<vmem>>, %arg7: memref<128x384xf32, #tpu.memory_space<vmem>>, %arg8: memref<128x384xf32, #tpu.memory_space<vmem>>, %arg9: memref<128x384xf32, #tpu.memory_space<vmem>>, %arg10: memref<4x384xf32, #tpu.memory_space<vmem>>, %arg11: memref<128x128xf32, #tpu.memory_space<vmem>>, %arg12: memref<128x128xf32, #tpu.memory_space<vmem>>, %arg13: memref<1x128xf32, #tpu.memory_space<vmem>>, %arg14: memref<128x128xf32, #tpu.memory_space<vmem>>, %arg15: memref<1x128xf32, #tpu.memory_space<vmem>>, %arg16: memref<1x8x128xf32, #tpu.memory_space<vmem>>, %arg17: memref<2x8x128xf32, #tpu.memory_space<vmem>>) attributes {dimension_semantics = [#tpu.dimension_semantics<arbitrary>], iteration_bounds = array<i64: 1>, scalar_prefetch = 0 : i64, scratch_operands = 0 : i64, tpu.core_type = #tpu.core_type<tc>, window_params = [{transform_indices = @transform_0, window_bounds = array<i64: 1, 8, 128>}, {pipeline_mode = #tpu.pipeline_mode<synchronous>, transform_indices = @transform_1, window_bounds = array<i64: 2, 8, 128>}, {pipeline_mode = #tpu.pipeline_mode<synchronous>, transform_indices = @transform_2, window_bounds = array<i64: 8, 128, 128>}, {pipeline_mode = #tpu.pipeline_mode<synchronous>, transform_indices = @transform_3, window_bounds = array<i64: 8, 128, 128>}, {pipeline_mode = #tpu.pipeline_mode<synchronous>, transform_indices = @transform_4, window_bounds = array<i64: 8, 1, 128>}, {pipeline_mode = #tpu.pipeline_mode<synchronous>, transform_indices = @transform_5, window_bounds = array<i64: 128, 384>}, {pipeline_mode = #tpu.pipeline_mode<synchronous>, transform_indices = @transform_6, window_bounds = array<i64: 128, 384>}, {pipeline_mode = #tpu.pipeline_mode<synchronous>, transform_indices = @transform_7, window_bounds = array<i64: 128, 384>}, {pipeline_mode = #tpu.pipeline_mode<synchronous>, transform_indices = @transform_8, window_bounds = array<i64: 128, 384>}, {pipeline_mode = #tpu.pipeline_mode<synchronous>, transform_indices = @transform_9, window_bounds = array<i64: 4, 384>}, {pipeline_mode = #tpu.pipeline_mode<synchronous>, transform_indices = @transform_10, window_bounds = array<i64: 128, 128>}, {pipeline_mode = #tpu.pipeline_mode<synchronous>, transform_indices = @transform_11, window_bounds = array<i64: 128, 128>}, {pipeline_mode = #tpu.pipeline_mode<synchronous>, transform_indices = @transform_12, window_bounds = array<i64: 1, 128>}, {pipeline_mode = #tpu.pipeline_mode<synchronous>, transform_indices = @transform_13, window_bounds = array<i64: 128, 128>}, {pipeline_mode = #tpu.pipeline_mode<synchronous>, transform_indices = @transform_14, window_bounds = array<i64: 1, 128>}, {transform_indices = @transform_15, window_bounds = array<i64: 1, 8, 128>}, {pipeline_mode = #tpu.pipeline_mode<synchronous>, transform_indices = @transform_16, window_bounds = array<i64: 2, 8, 128>}]} {
    %c0_i32 = arith.constant 0 : i32
    %0 = arith.cmpi eq, %arg0, %c0_i32 : i32
    %1 = arith.extui %0 : i1 to i32
    %c0_i32_0 = arith.constant 0 : i32
    %2 = arith.cmpi ne, %1, %c0_i32_0 : i32
    scf.if %2 {
      %c0_63 = arith.constant 0 : index
      %c0_64 = arith.constant 0 : index
      %c0_65 = arith.constant 0 : index
      %130 = vector.load %arg2[%c0_63, %c0_64, %c0_65] : memref<2x8x128xf32, #tpu.memory_space<vmem>>, vector<2x8x128xf32>
      %c0_66 = arith.constant 0 : index
      %c0_67 = arith.constant 0 : index
      %c0_68 = arith.constant 0 : index
      %131 = vector.load %arg17[%c0_66, %c0_67, %c0_68] : memref<2x8x128xf32, #tpu.memory_space<vmem>>, vector<2x8x128xf32>
      tpu.vector_store %arg17[%c0_66, %c0_67, %c0_68], %130 {strides = array<i32>} : memref<2x8x128xf32, #tpu.memory_space<vmem>>, vector<2x8x128xf32>,
    } else {
    }
    %c0 = arith.constant 0 : index
    %c0_1 = arith.constant 0 : index
    %3 = vector.load %arg10[%c0, %c0_1] : memref<4x384xf32, #tpu.memory_space<vmem>>, vector<4x384xf32>
    %4 = vector.extract_strided_slice %3 {offsets = [0, 0], sizes = [1, 384], strides = [1, 1]} : vector<4x384xf32> to vector<1x384xf32>
    %5 = vector.extract_strided_slice %3 {offsets = [1, 0], sizes = [1, 384], strides = [1, 1]} : vector<4x384xf32> to vector<1x384xf32>
    %6 = vector.extract_strided_slice %3 {offsets = [2, 0], sizes = [1, 384], strides = [1, 1]} : vector<4x384xf32> to vector<1x384xf32>
    %7 = vector.extract_strided_slice %3 {offsets = [3, 0], sizes = [1, 384], strides = [1, 1]} : vector<4x384xf32> to vector<1x384xf32>
    %c0_2 = arith.constant 0 : index
    %c0_3 = arith.constant 0 : index
    %c0_4 = arith.constant 0 : index
    %8 = vector.load %arg5[%c0_2, %c0_3, %c0_4] : memref<8x1x128xf32, #tpu.memory_space<vmem>>, vector<8x1x128xf32>
    %c0_5 = arith.constant 0 : index
    %c0_6 = arith.constant 0 : index
    %9 = vector.load %arg13[%c0_5, %c0_6] : memref<1x128xf32, #tpu.memory_space<vmem>>, vector<1x128xf32>
    %c0_7 = arith.constant 0 : index
    %c0_8 = arith.constant 0 : index
    %10 = vector.load %arg15[%c0_7, %c0_8] : memref<1x128xf32, #tpu.memory_space<vmem>>, vector<1x128xf32>
    %c0_9 = arith.constant 0 : index
    %c0_10 = arith.constant 0 : index
    %c0_11 = arith.constant 0 : index
    %11 = vector.load %arg17[%c0_9, %c0_10, %c0_11] : memref<2x8x128xf32, #tpu.memory_space<vmem>>, vector<1x8x128xf32>
    %12 = vector.shape_cast %11 : vector<1x8x128xf32> to vector<8x128xf32>
    %c1 = arith.constant 1 : index
    %c0_12 = arith.constant 0 : index
    %c0_13 = arith.constant 0 : index
    %13 = vector.load %arg17[%c1, %c0_12, %c0_13] : memref<2x8x128xf32, #tpu.memory_space<vmem>>, vector<1x8x128xf32>
    %14 = vector.shape_cast %13 : vector<1x8x128xf32> to vector<8x128xf32>
    %c0_i32_14 = arith.constant 0 : i32
    %15 = arith.index_cast %c0_i32_14 : i32 to index
    %c0_15 = arith.constant 0 : index
    %c0_16 = arith.constant 0 : index
    %16 = vector.load %arg1[%15, %c0_15, %c0_16] : memref<1x8x128xf32, #tpu.memory_space<vmem>>, vector<1x8x128xf32>
    %17 = vector.shape_cast %16 : vector<1x8x128xf32> to vector<8x128xf32>
    %c0_17 = arith.constant 0 : index
    %c0_18 = arith.constant 0 : index
    %18 = vector.load %arg6[%c0_17, %c0_18] : memref<128x384xf32, #tpu.memory_space<vmem>>, vector<128x384xf32>
    %cst = arith.constant dense<0.000000e+00> : vector<8x384xf32>
    %19 = tpu.matmul %17, %18, %cst {dimension_numbers = #tpu.dot_dimension_numbers<[1], [0], [0], [1], [0, 0, 1, 1], [], []>} : vector<8x128xf32>, vector<128x384xf32>, vector<8x384xf32> -> vector<8x384xf32>
    %20 = vector.broadcast %4 : vector<1x384xf32> to vector<8x384xf32>
    %21 = arith.addf %19, %20 : vector<8x384xf32>
    %c0_19 = arith.constant 0 : index
    %c0_20 = arith.constant 0 : index
    %22 = vector.load %arg7[%c0_19, %c0_20] : memref<128x384xf32, #tpu.memory_space<vmem>>, vector<128x384xf32>
    %cst_21 = arith.constant dense<0.000000e+00> : vector<8x384xf32>
    %23 = tpu.matmul %12, %22, %cst_21 {dimension_numbers = #tpu.dot_dimension_numbers<[1], [0], [0], [1], [0, 0, 1, 1], [], []>} : vector<8x128xf32>, vector<128x384xf32>, vector<8x384xf32> -> vector<8x384xf32>
    %24 = vector.broadcast %5 : vector<1x384xf32> to vector<8x384xf32>
    %25 = arith.addf %23, %24 : vector<8x384xf32>
    %26 = vector.extract_strided_slice %21 {offsets = [0, 0], sizes = [8, 128], strides = [1, 1]} : vector<8x384xf32> to vector<8x128xf32>
    %27 = vector.extract_strided_slice %25 {offsets = [0, 0], sizes = [8, 128], strides = [1, 1]} : vector<8x384xf32> to vector<8x128xf32>
    %28 = arith.addf %26, %27 : vector<8x128xf32>
    %29 = arith.negf %28 : vector<8x128xf32>
    %30 = math.exp %29 : vector<8x128xf32>
    %cst_22 = arith.constant 1.000000e+00 : f32
    %31 = vector.broadcast %cst_22 : f32 to vector<8x128xf32>
    %32 = arith.addf %31, %30 : vector<8x128xf32>
    %33 = arith.divf %31, %32 : vector<8x128xf32>
    %34 = vector.extract_strided_slice %21 {offsets = [0, 128], sizes = [8, 128], strides = [1, 1]} : vector<8x384xf32> to vector<8x128xf32>
    %35 = vector.extract_strided_slice %25 {offsets = [0, 128], sizes = [8, 128], strides = [1, 1]} : vector<8x384xf32> to vector<8x128xf32>
    %36 = arith.addf %34, %35 : vector<8x128xf32>
    %37 = arith.negf %36 : vector<8x128xf32>
    %38 = math.exp %37 : vector<8x128xf32>
    %cst_23 = arith.constant 1.000000e+00 : f32
    %39 = vector.broadcast %cst_23 : f32 to vector<8x128xf32>
    %40 = arith.addf %39, %38 : vector<8x128xf32>
    %41 = arith.divf %39, %40 : vector<8x128xf32>
    %42 = vector.extract_strided_slice %21 {offsets = [0, 256], sizes = [8, 128], strides = [1, 1]} : vector<8x384xf32> to vector<8x128xf32>
    %43 = vector.extract_strided_slice %25 {offsets = [0, 256], sizes = [8, 128], strides = [1, 1]} : vector<8x384xf32> to vector<8x128xf32>
    %44 = arith.mulf %33, %43 : vector<8x128xf32>
    %45 = arith.addf %42, %44 : vector<8x128xf32>
    %46 = math.tanh %45 : vector<8x128xf32>
    %cst_24 = arith.constant 1.000000e+00 : f32
    %47 = vector.broadcast %cst_24 : f32 to vector<8x128xf32>
    %48 = arith.subf %47, %41 : vector<8x128xf32>
    %49 = arith.mulf %48, %46 : vector<8x128xf32>
    %50 = arith.mulf %41, %12 : vector<8x128xf32>
    %51 = arith.addf %49, %50 : vector<8x128xf32>
    %c0_25 = arith.constant 0 : index
    %c0_26 = arith.constant 0 : index
    %52 = vector.load %arg8[%c0_25, %c0_26] : memref<128x384xf32, #tpu.memory_space<vmem>>, vector<128x384xf32>
    %cst_27 = arith.constant dense<0.000000e+00> : vector<8x384xf32>
    %53 = tpu.matmul %51, %52, %cst_27 {dimension_numbers = #tpu.dot_dimension_numbers<[1], [0], [0], [1], [0, 0, 1, 1], [], []>} : vector<8x128xf32>, vector<128x384xf32>, vector<8x384xf32> -> vector<8x384xf32>
    %54 = vector.broadcast %6 : vector<1x384xf32> to vector<8x384xf32>
    %55 = arith.addf %53, %54 : vector<8x384xf32>
    %c0_28 = arith.constant 0 : index
    %c0_29 = arith.constant 0 : index
    %56 = vector.load %arg9[%c0_28, %c0_29] : memref<128x384xf32, #tpu.memory_space<vmem>>, vector<128x384xf32>
    %cst_30 = arith.constant dense<0.000000e+00> : vector<8x384xf32>
    %57 = tpu.matmul %14, %56, %cst_30 {dimension_numbers = #tpu.dot_dimension_numbers<[1], [0], [0], [1], [0, 0, 1, 1], [], []>} : vector<8x128xf32>, vector<128x384xf32>, vector<8x384xf32> -> vector<8x384xf32>
    %58 = vector.broadcast %7 : vector<1x384xf32> to vector<8x384xf32>
    %59 = arith.addf %57, %58 : vector<8x384xf32>
    %60 = vector.extract_strided_slice %55 {offsets = [0, 0], sizes = [8, 128], strides = [1, 1]} : vector<8x384xf32> to vector<8x128xf32>
    %61 = vector.extract_strided_slice %59 {offsets = [0, 0], sizes = [8, 128], strides = [1, 1]} : vector<8x384xf32> to vector<8x128xf32>
    %62 = arith.addf %60, %61 : vector<8x128xf32>
    %63 = arith.negf %62 : vector<8x128xf32>
    %64 = math.exp %63 : vector<8x128xf32>
    %cst_31 = arith.constant 1.000000e+00 : f32
    %65 = vector.broadcast %cst_31 : f32 to vector<8x128xf32>
    %66 = arith.addf %65, %64 : vector<8x128xf32>
    %67 = arith.divf %65, %66 : vector<8x128xf32>
    %68 = vector.extract_strided_slice %55 {offsets = [0, 128], sizes = [8, 128], strides = [1, 1]} : vector<8x384xf32> to vector<8x128xf32>
    %69 = vector.extract_strided_slice %59 {offsets = [0, 128], sizes = [8, 128], strides = [1, 1]} : vector<8x384xf32> to vector<8x128xf32>
    %70 = arith.addf %68, %69 : vector<8x128xf32>
    %71 = arith.negf %70 : vector<8x128xf32>
    %72 = math.exp %71 : vector<8x128xf32>
    %cst_32 = arith.constant 1.000000e+00 : f32
    %73 = vector.broadcast %cst_32 : f32 to vector<8x128xf32>
    %74 = arith.addf %73, %72 : vector<8x128xf32>
    %75 = arith.divf %73, %74 : vector<8x128xf32>
    %76 = vector.extract_strided_slice %55 {offsets = [0, 256], sizes = [8, 128], strides = [1, 1]} : vector<8x384xf32> to vector<8x128xf32>
    %77 = vector.extract_strided_slice %59 {offsets = [0, 256], sizes = [8, 128], strides = [1, 1]} : vector<8x384xf32> to vector<8x128xf32>
    %78 = arith.mulf %67, %77 : vector<8x128xf32>
    %79 = arith.addf %76, %78 : vector<8x128xf32>
    %80 = math.tanh %79 : vector<8x128xf32>
    %cst_33 = arith.constant 1.000000e+00 : f32
    %81 = vector.broadcast %cst_33 : f32 to vector<8x128xf32>
    %82 = arith.subf %81, %75 : vector<8x128xf32>
    %83 = arith.mulf %82, %80 : vector<8x128xf32>
    %84 = arith.mulf %75, %14 : vector<8x128xf32>
    %85 = arith.addf %83, %84 : vector<8x128xf32>
    %86 = vector.shape_cast %85 : vector<8x128xf32> to vector<8x1x128xf32>
    %c0_34 = arith.constant 0 : index
    %c0_35 = arith.constant 0 : index
    %c0_36 = arith.constant 0 : index
    %87 = vector.load %arg3[%c0_34, %c0_35, %c0_36] : memref<8x128x128xf32, #tpu.memory_space<vmem>>, vector<8x128x128xf32>
    "tpu.trace_start"() <{level = 10 : i32, message = "bqh,bhs->bqs"}> : () -> ()
    %cst_37 = arith.constant dense<0.000000e+00> : vector<8x1x128xf32>
    %88 = tpu.matmul %86, %87, %cst_37 {dimension_numbers = #tpu.dot_dimension_numbers<[2], [1], [1], [2], [0, 0, 0, 1, 1, 2], [0], [0]>} : vector<8x1x128xf32>, vector<8x128x128xf32>, vector<8x1x128xf32> -> vector<8x1x128xf32>
    "tpu.trace_stop"() : () -> ()
    %89 = arith.addf %88, %8 : vector<8x1x128xf32>
    %cst_38 = arith.constant dense<0xFF800000> : vector<8x1xf32>
    %90 = vector.multi_reduction <maximumf>, %89, %cst_38 [2] : vector<8x1x128xf32> to vector<8x1xf32>
    %91 = vector.shape_cast %90 : vector<8x1xf32> to vector<8x1x1xf32>
    %92 = vector.broadcast %91 : vector<8x1x1xf32> to vector<8x1x128xf32>
    %93 = arith.subf %89, %92 : vector<8x1x128xf32>
    %94 = math.exp %93 : vector<8x1x128xf32>
    %cst_39 = arith.constant dense<0.000000e+00> : vector<8x1xf32>
    %95 = vector.multi_reduction <add>, %94, %cst_39 [2] : vector<8x1x128xf32> to vector<8x1xf32>
    %96 = vector.shape_cast %95 : vector<8x1xf32> to vector<8x1x1xf32>
    %97 = tpu.reciprocal %96 : vector<8x1x1xf32> -> vector<8x1x1xf32>
    %98 = vector.broadcast %97 : vector<8x1x1xf32> to vector<8x1x128xf32>
    %99 = arith.mulf %94, %98 : vector<8x1x128xf32>
    %c0_40 = arith.constant 0 : index
    %c0_41 = arith.constant 0 : index
    %c0_42 = arith.constant 0 : index
    %100 = vector.load %arg4[%c0_40, %c0_41, %c0_42] : memref<8x128x128xf32, #tpu.memory_space<vmem>>, vector<8x128x128xf32>
    "tpu.trace_start"() <{level = 10 : i32, message = "bqs,bsh->bqh"}> : () -> ()
    %cst_43 = arith.constant dense<0.000000e+00> : vector<8x1x128xf32>
    %101 = tpu.matmul %99, %100, %cst_43 {dimension_numbers = #tpu.dot_dimension_numbers<[2], [1], [1], [2], [0, 0, 0, 1, 1, 2], [0], [0]>} : vector<8x1x128xf32>, vector<8x128x128xf32>, vector<8x1x128xf32> -> vector<8x1x128xf32>
    "tpu.trace_stop"() : () -> ()
    %102 = vector.shape_cast %101 : vector<8x1x128xf32> to vector<8x128xf32>
    %c0_44 = arith.constant 0 : index
    %c0_45 = arith.constant 0 : index
    %103 = vector.load %arg11[%c0_44, %c0_45] : memref<128x128xf32, #tpu.memory_space<vmem>>, vector<128x128xf32>
    %cst_46 = arith.constant dense<0.000000e+00> : vector<8x128xf32>
    %104 = tpu.matmul %85, %103, %cst_46 {dimension_numbers = #tpu.dot_dimension_numbers<[1], [0], [0], [1], [0, 0, 1, 1], [], []>} : vector<8x128xf32>, vector<128x128xf32>, vector<8x128xf32> -> vector<8x128xf32>
    %c0_47 = arith.constant 0 : index
    %c0_48 = arith.constant 0 : index
    %105 = vector.load %arg12[%c0_47, %c0_48] : memref<128x128xf32, #tpu.memory_space<vmem>>, vector<128x128xf32>
    %cst_49 = arith.constant dense<0.000000e+00> : vector<8x128xf32>
    %106 = tpu.matmul %102, %105, %cst_49 {dimension_numbers = #tpu.dot_dimension_numbers<[1], [0], [0], [1], [0, 0, 1, 1], [], []>} : vector<8x128xf32>, vector<128x128xf32>, vector<8x128xf32> -> vector<8x128xf32>
    %107 = arith.addf %104, %106 : vector<8x128xf32>
    %108 = vector.broadcast %9 : vector<1x128xf32> to vector<8x128xf32>
    %109 = arith.addf %107, %108 : vector<8x128xf32>
    %110 = math.tanh %109 : vector<8x128xf32>
    %c0_50 = arith.constant 0 : index
    %c0_51 = arith.constant 0 : index
    %111 = vector.load %arg14[%c0_50, %c0_51] : memref<128x128xf32, #tpu.memory_space<vmem>>, vector<128x128xf32>
    %cst_52 = arith.constant dense<0.000000e+00> : vector<8x128xf32>
    %112 = tpu.matmul %110, %111, %cst_52 {dimension_numbers = #tpu.dot_dimension_numbers<[1], [0], [0], [1], [0, 0, 1, 1], [], []>} : vector<8x128xf32>, vector<128x128xf32>, vector<8x128xf32> -> vector<8x128xf32>
    %113 = vector.broadcast %10 : vector<1x128xf32> to vector<8x128xf32>
    %114 = arith.addf %112, %113 : vector<8x128xf32>
    %115 = arith.index_cast %c0_i32_14 : i32 to index
    %c0_53 = arith.constant 0 : index
    %c0_54 = arith.constant 0 : index
    %116 = vector.load %arg16[%115, %c0_53, %c0_54] : memref<1x8x128xf32, #tpu.memory_space<vmem>>, vector<1x8x128xf32>
    %117 = vector.shape_cast %116 : vector<1x8x128xf32> to vector<8x128xf32>
    %118 = vector.shape_cast %114 : vector<8x128xf32> to vector<1x8x128xf32>
    tpu.vector_store %arg16[%115, %c0_53, %c0_54], %118 {strides = array<i32>} : memref<1x8x128xf32, #tpu.memory_space<vmem>>, vector<1x8x128xf32>,
    %c1_i32 = arith.constant 1 : i32
    %119 = arith.muli %arg0, %c1_i32 : i32
    %120 = arith.addi %119, %c0_i32_14 : i32
    %c1_i32_55 = arith.constant 1 : i32
    %121 = arith.cmpi slt, %120, %c1_i32_55 : i32
    %122 = arith.select %121, %51, %12 : vector<8x128xf32>
    %123 = arith.select %121, %85, %14 : vector<8x128xf32>
    %c1_i32_56 = arith.constant 1 : i32
    %c0_57 = arith.constant 0 : index
    %c0_58 = arith.constant 0 : index
    %c0_59 = arith.constant 0 : index
    %124 = vector.load %arg17[%c0_57, %c0_58, %c0_59] : memref<2x8x128xf32, #tpu.memory_space<vmem>>, vector<1x8x128xf32>
    %125 = vector.shape_cast %124 : vector<1x8x128xf32> to vector<8x128xf32>
    %126 = vector.shape_cast %122 : vector<8x128xf32> to vector<1x8x128xf32>
    tpu.vector_store %arg17[%c0_57, %c0_58, %c0_59], %126 {strides = array<i32>} : memref<2x8x128xf32, #tpu.memory_space<vmem>>, vector<1x8x128xf32>,
    %c1_60 = arith.constant 1 : index
    %c0_61 = arith.constant 0 : index
    %c0_62 = arith.constant 0 : index
    %127 = vector.load %arg17[%c1_60, %c0_61, %c0_62] : memref<2x8x128xf32, #tpu.memory_space<vmem>>, vector<1x8x128xf32>
    %128 = vector.shape_cast %127 : vector<1x8x128xf32> to vector<8x128xf32>
    %129 = vector.shape_cast %123 : vector<8x128xf32> to vector<1x8x128xf32>
    tpu.vector_store %arg17[%c1_60, %c0_61, %c0_62], %129 {strides = array<i32>} : memref<2x8x128xf32, #tpu.memory_space<vmem>>, vector<1x8x128xf32>,
    return
  }
  func.func @transform_0(%arg0: i32) -> (i32, i32, i32) {
    %c0_i32 = arith.constant 0 : i32
    %c0_i32_0 = arith.constant 0 : i32
    %c0_i32_1 = arith.constant 0 : i32
    return %arg0, %c0_i32, %c0_i32_0 : i32, i32, i32
  }
  func.func @transform_1(%arg0: i32) -> (i32, i32, i32) {
    %c0_i32 = arith.constant 0 : i32
    %c0_i32_0 = arith.constant 0 : i32
    %c0_i32_1 = arith.constant 0 : i32
    %c0_i32_2 = arith.constant 0 : i32
    return %c0_i32, %c0_i32_0, %c0_i32_1 : i32, i32, i32
  }
  func.func @transform_2(%arg0: i32) -> (i32, i32, i32) {
    %c0_i32 = arith.constant 0 : i32
    %c0_i32_0 = arith.constant 0 : i32
    %c0_i32_1 = arith.constant 0 : i32
    %c0_i32_2 = arith.constant 0 : i32
    return %c0_i32, %c0_i32_0, %c0_i32_1 : i32, i32, i32
  }
  func.func @transform_3(%arg0: i32) -> (i32, i32, i32) {
    %c0_i32 = arith.constant 0 : i32
    %c0_i32_0 = arith.constant 0 : i32
    %c0_i32_1 = arith.constant 0 : i32
    %c0_i32_2 = arith.constant 0 : i32
    return %c0_i32, %c0_i32_0, %c0_i32_1 : i32, i32, i32
  }
  func.func @transform_4(%arg0: i32) -> (i32, i32, i32) {
    %c0_i32 = arith.constant 0 : i32
    %c0_i32_0 = arith.constant 0 : i32
    %c0_i32_1 = arith.constant 0 : i32
    %c0_i32_2 = arith.constant 0 : i32
    return %c0_i32, %c0_i32_0, %c0_i32_1 : i32, i32, i32
  }
  func.func @transform_5(%arg0: i32) -> (i32, i32) {
    %c0_i32 = arith.constant 0 : i32
    %c0_i32_0 = arith.constant 0 : i32
    %c0_i32_1 = arith.constant 0 : i32
    return %c0_i32, %c0_i32_0 : i32, i32
  }
  func.func @transform_6(%arg0: i32) -> (i32, i32) {
    %c0_i32 = arith.constant 0 : i32
    %c0_i32_0 = arith.constant 0 : i32
    %c0_i32_1 = arith.constant 0 : i32
    return %c0_i32, %c0_i32_0 : i32, i32
  }
  func.func @transform_7(%arg0: i32) -> (i32, i32) {
    %c0_i32 = arith.constant 0 : i32
    %c0_i32_0 = arith.constant 0 : i32
    %c0_i32_1 = arith.constant 0 : i32
    return %c0_i32, %c0_i32_0 : i32, i32
  }
  func.func @transform_8(%arg0: i32) -> (i32, i32) {
    %c0_i32 = arith.constant 0 : i32
    %c0_i32_0 = arith.constant 0 : i32
    %c0_i32_1 = arith.constant 0 : i32
    return %c0_i32, %c0_i32_0 : i32, i32
  }
  func.func @transform_9(%arg0: i32) -> (i32, i32) {
    %c0_i32 = arith.constant 0 : i32
    %c0_i32_0 = arith.constant 0 : i32
    %c0_i32_1 = arith.constant 0 : i32
    return %c0_i32, %c0_i32_0 : i32, i32
  }
  func.func @transform_10(%arg0: i32) -> (i32, i32) {
    %c0_i32 = arith.constant 0 : i32
    %c0_i32_0 = arith.constant 0 : i32
    %c0_i32_1 = arith.constant 0 : i32
    return %c0_i32, %c0_i32_0 : i32, i32
  }
  func.func @transform_11(%arg0: i32) -> (i32, i32) {
    %c0_i32 = arith.constant 0 : i32
    %c0_i32_0 = arith.constant 0 : i32
    %c0_i32_1 = arith.constant 0 : i32
    return %c0_i32, %c0_i32_0 : i32, i32
  }
  func.func @transform_12(%arg0: i32) -> (i32, i32) {
    %c0_i32 = arith.constant 0 : i32
    %c0_i32_0 = arith.constant 0 : i32
    %c0_i32_1 = arith.constant 0 : i32
    return %c0_i32, %c0_i32_0 : i32, i32
  }
  func.func @transform_13(%arg0: i32) -> (i32, i32) {
    %c0_i32 = arith.constant 0 : i32
    %c0_i32_0 = arith.constant 0 : i32
    %c0_i32_1 = arith.constant 0 : i32
    return %c0_i32, %c0_i32_0 : i32, i32
  }
  func.func @transform_14(%arg0: i32) -> (i32, i32) {
    %c0_i32 = arith.constant 0 : i32
    %c0_i32_0 = arith.constant 0 : i32
    %c0_i32_1 = arith.constant 0 : i32
    return %c0_i32, %c0_i32_0 : i32, i32
  }
  func.func @transform_15(%arg0: i32) -> (i32, i32, i32) {
    %c0_i32 = arith.constant 0 : i32
    %c0_i32_0 = arith.constant 0 : i32
    %c0_i32_1 = arith.constant 0 : i32
    return %arg0, %c0_i32, %c0_i32_0 : i32, i32, i32
  }
  func.func @transform_16(%arg0: i32) -> (i32, i32, i32) {
    %c0_i32 = arith.constant 0 : i32
    %c0_i32_0 = arith.constant 0 : i32
    %c0_i32_1 = arith.constant 0 : i32
    %c0_i32_2 = arith.constant 0 : i32
    return %c0_i32, %c0_i32_0, %c0_i32_1 : i32, i32, i32
  }
}

</mosaic_0001>

<llo_original>
// kernel: decoder_forward.1
$region0: #{decoder_forward.1}
  #allocation0 [shape = 'u32[]', space=smem, size = 0x4, offset = 0x4, fixed_abs, tag = 'smem constant byte address 0x4 - core index']
  #allocation1 [shape = 'u32[144,128]{1,0:T(1,128)}', space=vmem, size = 0x12000, scoped, tag = 'internal scratch']
  %s0 = inlined_call_operand.vmem [shape: f32[1,8,128], index: 0, kind: input, shape index: {}]
  %s1 = inlined_call_operand.vmem [shape: f32[2,8,128], index: 1, kind: input, shape index: {}]
  %s2 = inlined_call_operand.vmem [shape: f32[8,128,128], index: 2, kind: input, shape index: {}]
  %s3 = inlined_call_operand.vmem [shape: f32[8,128,128], index: 3, kind: input, shape index: {}]
  %s4 = inlined_call_operand.vmem [shape: f32[8,1,128], index: 4, kind: input, shape index: {}]
  %s5 = inlined_call_operand.vmem [shape: f32[128,384], index: 5, kind: input, shape index: {}]
  %s6 = inlined_call_operand.vmem [shape: f32[128,384], index: 6, kind: input, shape index: {}]
  %s7 = inlined_call_operand.vmem [shape: f32[128,384], index: 7, kind: input, shape index: {}]
  %s8 = inlined_call_operand.vmem [shape: f32[128,384], index: 8, kind: input, shape index: {}]
  %s9 = inlined_call_operand.vmem [shape: f32[4,384], index: 9, kind: input, shape index: {}]
  %s10 = inlined_call_operand.vmem [shape: f32[128,128], index: 10, kind: input, shape index: {}]
  %s11 = inlined_call_operand.vmem [shape: f32[128,128], index: 11, kind: input, shape index: {}]
  %s12 = inlined_call_operand.vmem [shape: f32[1,128], index: 12, kind: input, shape index: {}]
  %s13 = inlined_call_operand.vmem [shape: f32[128,128], index: 13, kind: input, shape index: {}]
  %s14 = inlined_call_operand.vmem [shape: f32[1,128], index: 14, kind: input, shape index: {}]
  %s15 = inlined_call_operand.vmem [shape: f32[1,8,128], index: 15, kind: output, shape index: {0}]
  %s16 = inlined_call_operand.vmem [shape: f32[2,8,128], index: 16, kind: output, shape index: {1}]
  %17 = xla_tuple %s15, %s16
  %s18 = sld [smem:[#allocation0]]
  $region82: #{decoder_forward.1} parent=0
    _
  %s20 = ssub.s32 1, %s18
  %s21 = scalar_select 0, %s20, %s18
  // Predicated region
  $region2: #{decoder_forward.1} parent=0 // pred_check
    _
  $region3: #{decoder_forward.1} parent=0 // pred_check_branch
    %23 = sbr.rel (0) target = $region5
  $region4: #{decoder_forward.1} parent=0 // pred_region
    _
  $region5: #{decoder_forward.1} parent=0 // pred_fallthru
    _
  // Predicated region
  $region6: #{decoder_forward.1} parent=0 // pred_check
    _
  $region7: #{decoder_forward.1} parent=0 // pred_check_branch
    %25 = sbr.rel (0) target = $region9
  $region8: #{decoder_forward.1} parent=0 // pred_region
    _
  $region9: #{decoder_forward.1} parent=0 // pred_fallthru
    _
  // Predicated region
  $region10: #{decoder_forward.1} parent=0 // pred_check
    _
  $region11: #{decoder_forward.1} parent=0 // pred_check_branch
    %27 = sbr.rel (0) target = $region13
  $region12: #{decoder_forward.1} parent=0 // pred_region
    _
  $region13: #{decoder_forward.1} parent=0 // pred_fallthru
    _
  // Predicated region
  $region14: #{decoder_forward.1} parent=0 // pred_check
    _
  $region15: #{decoder_forward.1} parent=0 // pred_check_branch
    %29 = sbr.rel (0) target = $region17
  $region16: #{decoder_forward.1} parent=0 // pred_region
    _
  $region17: #{decoder_forward.1} parent=0 // pred_fallthru
    _
  // Predicated region
  $region18: #{decoder_forward.1} parent=0 // pred_check
    _
  $region19: #{decoder_forward.1} parent=0 // pred_check_branch
    %31 = sbr.rel (0) target = $region21
  $region20: #{decoder_forward.1} parent=0 // pred_region
    _
  $region21: #{decoder_forward.1} parent=0 // pred_fallthru
    _
  // Predicated region
  $region22: #{decoder_forward.1} parent=0 // pred_check
    _
  $region23: #{decoder_forward.1} parent=0 // pred_check_branch
    %33 = sbr.rel (0) target = $region25
  $region24: #{decoder_forward.1} parent=0 // pred_region
    _
  $region25: #{decoder_forward.1} parent=0 // pred_fallthru
    _
  // Predicated region
  $region26: #{decoder_forward.1} parent=0 // pred_check
    _
  $region27: #{decoder_forward.1} parent=0 // pred_check_branch
    %35 = sbr.rel (0) target = $region29
  $region28: #{decoder_forward.1} parent=0 // pred_region
    _
  $region29: #{decoder_forward.1} parent=0 // pred_fallthru
    _
  // Predicated region
  $region30: #{decoder_forward.1} parent=0 // pred_check
    _
  $region31: #{decoder_forward.1} parent=0 // pred_check_branch
    %37 = sbr.rel (0) target = $region33
  $region32: #{decoder_forward.1} parent=0 // pred_region
    _
  $region33: #{decoder_forward.1} parent=0 // pred_fallthru
    _
  // Predicated region
  $region34: #{decoder_forward.1} parent=0 // pred_check
    _
  $region35: #{decoder_forward.1} parent=0 // pred_check_branch
    %39 = sbr.rel (0) target = $region37
  $region36: #{decoder_forward.1} parent=0 // pred_region
    _
  $region37: #{decoder_forward.1} parent=0 // pred_fallthru
    _
  // Predicated region
  $region38: #{decoder_forward.1} parent=0 // pred_check
    _
  $region39: #{decoder_forward.1} parent=0 // pred_check_branch
    %41 = sbr.rel (0) target = $region41
  $region40: #{decoder_forward.1} parent=0 // pred_region
    _
  $region41: #{decoder_forward.1} parent=0 // pred_fallthru
    _
  // Predicated region
  $region42: #{decoder_forward.1} parent=0 // pred_check
    _
  $region43: #{decoder_forward.1} parent=0 // pred_check_branch
    %43 = sbr.rel (0) target = $region45
  $region44: #{decoder_forward.1} parent=0 // pred_region
    _
  $region45: #{decoder_forward.1} parent=0 // pred_fallthru
    _
  // Predicated region
  $region46: #{decoder_forward.1} parent=0 // pred_check
    _
  $region47: #{decoder_forward.1} parent=0 // pred_check_branch
    %45 = sbr.rel (0) target = $region49
  $region48: #{decoder_forward.1} parent=0 // pred_region
    _
  $region49: #{decoder_forward.1} parent=0 // pred_fallthru
    _
  // Predicated region
  $region50: #{decoder_forward.1} parent=0 // pred_check
    _
  $region51: #{decoder_forward.1} parent=0 // pred_check_branch
    %47 = sbr.rel (0) target = $region53
  $region52: #{decoder_forward.1} parent=0 // pred_region
    _
  $region53: #{decoder_forward.1} parent=0 // pred_fallthru
    _
  // Predicated region
  $region54: #{decoder_forward.1} parent=0 // pred_check
    _
  $region55: #{decoder_forward.1} parent=0 // pred_check_branch
    %49 = sbr.rel (0) target = $region57
  $region56: #{decoder_forward.1} parent=0 // pred_region
    _
  $region57: #{decoder_forward.1} parent=0 // pred_fallthru
    _
  // Predicated region
  $region58: #{decoder_forward.1} parent=0 // pred_check
    _
  $region59: #{decoder_forward.1} parent=0 // pred_check_branch
    %51 = sbr.rel (0) target = $region61
  $region60: #{decoder_forward.1} parent=0 // pred_region
    _
  $region61: #{decoder_forward.1} parent=0 // pred_fallthru
    _
  %p52 = scmp.eq.s32.totalorder 0, 0
  // Predicated region
  $region62: #{decoder_forward.1} parent=0 // pred_check
    %p53 = pneg %p52
  $region63: #{decoder_forward.1} parent=0 // pred_check_branch
    %55 = sbr.rel (%p53) target = $region65
  $region64: #{decoder_forward.1} parent=0 // pred_region
    %v56 = vld [vmem:[%s1] sm:$0xff]
    %v57 = vld [vmem:[%s1 + $0x8] sm:$0xff]
    %58 = vst [vmem:[%s16] sm:$0xff] %v56
    %59 = vst [vmem:[%s16 + $0x8] sm:$0xff] %v57
  $region65: #{decoder_forward.1} parent=0 // pred_fallthru
    _
  %v60 = vld [vmem:[%s9] sm:$0xff]
  %v61 = vld [vmem:[%s9 + $0x8] sm:$0xf]
  %v62 = vld [vmem:[%s4] sm:$0x1]
  %v63 = vld [vmem:[%s4 + $0x1] sm:$0x1]
  %v64 = vld [vmem:[%s4 + $0x2] sm:$0x1]
  %v65 = vld [vmem:[%s4 + $0x3] sm:$0x1]
  %v66 = vld [vmem:[%s4 + $0x4] sm:$0x1]
  %v67 = vld [vmem:[%s4 + $0x5] sm:$0x1]
  %v68 = vld [vmem:[%s4 + $0x6] sm:$0x1]
  %v69 = vld [vmem:[%s4 + $0x7] sm:$0x1]
  %v70 = vld [vmem:[%s12] sm:$0x1]
  %v71 = vld [vmem:[%s14] sm:$0x1]
  %v72 = vld [vmem:[%s16] sm:$0xff]
  %s73 = scalar_lea.vmem %s16, 8
  %v74 = vld [vmem:[%s73] sm:$0xff]
  %v75 = vld [vmem:[%s0] sm:$0xff]
  %v76 = vld [vmem:[%s5] sm:$0xff]
  %v77 = vld [vmem:[%s5 + $0x8] sm:$0xff]
  %v78 = vld [vmem:[%s5 + $0x10] sm:$0xff]
  %v79 = vld [vmem:[%s5 + $0x18] sm:$0xff]
  %v80 = vld [vmem:[%s5 + $0x20] sm:$0xff]
  %v81 = vld [vmem:[%s5 + $0x28] sm:$0xff]
  %v82 = vld [vmem:[%s5 + $0x30] sm:$0xff]
  %v83 = vld [vmem:[%s5 + $0x38] sm:$0xff]
  %v84 = vld [vmem:[%s5 + $0x40] sm:$0xff]
  %v85 = vld [vmem:[%s5 + $0x48] sm:$0xff]
  %v86 = vld [vmem:[%s5 + $0x50] sm:$0xff]
  %v87 = vld [vmem:[%s5 + $0x58] sm:$0xff]
  %v88 = vld [vmem:[%s5 + $0x60] sm:$0xff]
  %v89 = vld [vmem:[%s5 + $0x68] sm:$0xff]
  %v90 = vld [vmem:[%s5 + $0x70] sm:$0xff]
  %v91 = vld [vmem:[%s5 + $0x78] sm:$0xff]
  %v92 = vld [vmem:[%s5 + $0x80] sm:$0xff]
  %v93 = vld [vmem:[%s5 + $0x88] sm:$0xff]
  %v94 = vld [vmem:[%s5 + $0x90] sm:$0xff]
  %v95 = vld [vmem:[%s5 + $0x98] sm:$0xff]
  %v96 = vld [vmem:[%s5 + $0xa0] sm:$0xff]
  %v97 = vld [vmem:[%s5 + $0xa8] sm:$0xff]
  %v98 = vld [vmem:[%s5 + $0xb0] sm:$0xff]
  %v99 = vld [vmem:[%s5 + $0xb8] sm:$0xff]
  %v100 = vld [vmem:[%s5 + $0xc0] sm:$0xff]
  %v101 = vld [vmem:[%s5 + $0xc8] sm:$0xff]
  %v102 = vld [vmem:[%s5 + $0xd0] sm:$0xff]
  %v103 = vld [vmem:[%s5 + $0xd8] sm:$0xff]
  %v104 = vld [vmem:[%s5 + $0xe0] sm:$0xff]
  %v105 = vld [vmem:[%s5 + $0xe8] sm:$0xff]
  %v106 = vld [vmem:[%s5 + $0xf0] sm:$0xff]
  %v107 = vld [vmem:[%s5 + $0xf8] sm:$0xff]
  %v108 = vld [vmem:[%s5 + $0x100] sm:$0xff]
  %v109 = vld [vmem:[%s5 + $0x108] sm:$0xff]
  %v110 = vld [vmem:[%s5 + $0x110] sm:$0xff]
  %v111 = vld [vmem:[%s5 + $0x118] sm:$0xff]
  %v112 = vld [vmem:[%s5 + $0x120] sm:$0xff]
  %v113 = vld [vmem:[%s5 + $0x128] sm:$0xff]
  %v114 = vld [vmem:[%s5 + $0x130] sm:$0xff]
  %v115 = vld [vmem:[%s5 + $0x138] sm:$0xff]
  %v116 = vld [vmem:[%s5 + $0x140] sm:$0xff]
  %v117 = vld [vmem:[%s5 + $0x148] sm:$0xff]
  %v118 = vld [vmem:[%s5 + $0x150] sm:$0xff]
  %v119 = vld [vmem:[%s5 + $0x158] sm:$0xff]
  %v120 = vld [vmem:[%s5 + $0x160] sm:$0xff]
  %v121 = vld [vmem:[%s5 + $0x168] sm:$0xff]
  %v122 = vld [vmem:[%s5 + $0x170] sm:$0xff]
  %v123 = vld [vmem:[%s5 + $0x178] sm:$0xff]
  %v126 = vlaneseq
  %v127 = vshrl.u32 %v126, 7
  %v128 = vsub.s32 0, %v127
  %v129 = vrot.slane %v60, %v128
  %v130 = vlaneseq
  %v131 = vshrl.u32 %v130, 7
  %v132 = vsub.s32 4, %v131
  %v133 = vrot.slane %v60, %v132
  %v134 = vlaneseq
  %v135 = vshrl.u32 %v134, 7
  %v136 = vsub.s32 0, %v135
  %v137 = vrot.slane %v61, %v136
  %v141 = vlaneseq
  %v142 = vshrl.u32 %v141, 7
  %v143 = vsub.s32 0, %v142
  %v144 = vrot.slane %v129, %v143
  %v145 = vlaneseq
  %v146 = vshrl.u32 %v145, 7
  %v147 = vsub.s32 0, %v146
  %v148 = vrot.slane %v133, %v147
  %v149 = vlaneseq
  %v150 = vshrl.u32 %v149, 7
  %v151 = vsub.s32 0, %v150
  %v152 = vrot.slane %v137, %v151
  %153 = vmatprep.subr.mxu0 %v77
  %154 = vmatpush1.msra.mxu0 %v76
  %155 = vmatprep.subr.mxu0 %v80
  %156 = vmatpush1.msra.mxu0 %v79
  %157 = vmatprep.subr.mxu0 %v83
  %158 = vmatpush1.msra.mxu0 %v82
  %159 = vmatprep.subr.mxu0 %v86
  %160 = vmatpush1.msra.mxu0 %v85
  %161 = vmatprep.subr.mxu0 %v89
  %162 = vmatpush1.msra.mxu0 %v88
  %163 = vmatprep.subr.mxu0 %v92
  %164 = vmatpush1.msra.mxu0 %v91
  %165 = vmatprep.subr.mxu0 %v95
  %166 = vmatpush1.msra.mxu0 %v94
  %167 = vmatprep.subr.mxu0 %v98
  %168 = vmatpush1.msra.mxu0 %v97
  %169 = vmatprep.subr.mxu0 %v101
  %170 = vmatpush1.msra.mxu0 %v100
  %171 = vmatprep.subr.mxu0 %v104
  %172 = vmatpush1.msra.mxu0 %v103
  %173 = vmatprep.subr.mxu0 %v107
  %174 = vmatpush1.msra.mxu0 %v106
  %175 = vmatprep.subr.mxu0 %v110
  %176 = vmatpush1.msra.mxu0 %v109
  %177 = vmatprep.subr.mxu0 %v113
  %178 = vmatpush1.msra.mxu0 %v112
  %179 = vmatprep.subr.mxu0 %v116
  %180 = vmatpush1.msra.mxu0 %v115
  %181 = vmatprep.subr.mxu0 %v119
  %182 = vmatpush1.msra.mxu0 %v118
  %183 = vmatprep.subr.mxu0 %v122
  %184 = vmatpush1.msra.mxu0 %v121
  %185 = vmatprep.subr.mxu0 0.0
  %186 = vmatpush1.msra.mxu0 0.0
  %187 = vmatprep.subr.mxu0 0.0
  %188 = vmatpush1.msra.mxu0 0.0
  %189 = vmatprep.subr.mxu0 0.0
  %190 = vmatpush1.msra.mxu0 0.0
  %191 = vmatprep.subr.mxu0 0.0
  %192 = vmatpush1.msra.mxu0 0.0
  %193 = vmatprep.subr.mxu0 0.0
  %194 = vmatpush1.msra.mxu0 0.0
  %195 = vmatprep.subr.mxu0 0.0
  %196 = vmatpush1.msra.mxu0 0.0
  %197 = vmatprep.subr.mxu0 0.0
  %198 = vmatpush1.msra.mxu0 0.0
  %199 = vmatprep.subr.mxu0 0.0
  %200 = vmatpush1.msra.mxu0 0.0
  %201 = vmatprep.subr.mxu0 0.0
  %202 = vmatpush1.msra.mxu0 0.0
  %203 = vmatprep.subr.mxu0 0.0
  %204 = vmatpush1.msra.mxu0 0.0
  %205 = vmatprep.subr.mxu0 0.0
  %206 = vmatpush1.msra.mxu0 0.0
  %207 = vmatprep.subr.mxu0 0.0
  %208 = vmatpush1.msra.mxu0 0.0
  %209 = vmatprep.subr.mxu0 0.0
  %210 = vmatpush1.msra.mxu0 0.0
  %211 = vmatprep.subr.mxu0 0.0
  %212 = vmatpush1.msra.mxu0 0.0
  %213 = vmatprep.subr.mxu0 0.0
  %214 = vmatpush1.msra.mxu0 0.0
  %215 = vmatprep.subr.mxu0 0.0
  %216 = vmatpush1.msra.mxu0 0.0
  %217 = vmatprep.mubr.f32.mxu0 0.0
  %218 = vmatmul.mubr.f32.gmra.mrb[0].mxu0 %v75
  %v219 = vpop.f32.mrb[0].mxu0
  %v220 = vadd.f32 %v144, %v219
  %v221 = vpop.f32.mrb[0].mxu0
  %v222 = vadd.f32 %v148, %v221
  %223 = vdwg.mxu0
  %224 = vmatprep.subr.mxu0 0.0
  %225 = vmatpush1.msra.mxu0 %v78
  %226 = vmatprep.subr.mxu0 0.0
  %227 = vmatpush1.msra.mxu0 %v81
  %228 = vmatprep.subr.mxu0 0.0
  %229 = vmatpush1.msra.mxu0 %v84
  %230 = vmatprep.subr.mxu0 0.0
  %231 = vmatpush1.msra.mxu0 %v87
  %232 = vmatprep.subr.mxu0 0.0
  %233 = vmatpush1.msra.mxu0 %v90
  %234 = vmatprep.subr.mxu0 0.0
  %235 = vmatpush1.msra.mxu0 %v93
  %236 = vmatprep.subr.mxu0 0.0
  %237 = vmatpush1.msra.mxu0 %v96
  %238 = vmatprep.subr.mxu0 0.0
  %239 = vmatpush1.msra.mxu0 %v99
  %240 = vmatprep.subr.mxu0 0.0
  %241 = vmatpush1.msra.mxu0 %v102
  %242 = vmatprep.subr.mxu0 0.0
  %243 = vmatpush1.msra.mxu0 %v105
  %244 = vmatprep.subr.mxu0 0.0
  %245 = vmatpush1.msra.mxu0 %v108
  %246 = vmatprep.subr.mxu0 0.0
  %247 = vmatpush1.msra.mxu0 %v111
  %248 = vmatprep.subr.mxu0 0.0
  %249 = vmatpush1.msra.mxu0 %v114
  %250 = vmatprep.subr.mxu0 0.0
  %251 = vmatpush1.msra.mxu0 %v117
  %252 = vmatprep.subr.mxu0 0.0
  %253 = vmatpush1.msra.mxu0 %v120
  %254 = vmatprep.subr.mxu0 0.0
  %255 = vmatpush1.msra.mxu0 %v123
  %256 = vmatprep.subr.mxu0 0.0
  %257 = vmatpush1.msra.mxu0 0.0
  %258 = vmatprep.subr.mxu0 0.0
  %259 = vmatpush1.msra.mxu0 0.0
  %260 = vmatprep.subr.mxu0 0.0
  %261 = vmatpush1.msra.mxu0 0.0
  %262 = vmatprep.subr.mxu0 0.0
  %263 = vmatpush1.msra.mxu0 0.0
  %264 = vmatprep.subr.mxu0 0.0
  %265 = vmatpush1.msra.mxu0 0.0
  %266 = vmatprep.subr.mxu0 0.0
  %267 = vmatpush1.msra.mxu0 0.0
  %268 = vmatprep.subr.mxu0 0.0
  %269 = vmatpush1.msra.mxu0 0.0
  %270 = vmatprep.subr.mxu0 0.0
  %271 = vmatpush1.msra.mxu0 0.0
  %272 = vmatprep.subr.mxu0 0.0
  %273 = vmatpush1.msra.mxu0 0.0
  %274 = vmatprep.subr.mxu0 0.0
  %275 = vmatpush1.msra.mxu0 0.0
  %276 = vmatprep.subr.mxu0 0.0
  %277 = vmatpush1.msra.mxu0 0.0
  %278 = vmatprep.subr.mxu0 0.0
  %279 = vmatpush1.msra.mxu0 0.0
  %280 = vmatprep.subr.mxu0 0.0
  %281 = vmatpush1.msra.mxu0 0.0
  %282 = vmatprep.subr.mxu0 0.0
  %283 = vmatpush1.msra.mxu0 0.0
  %284 = vmatprep.subr.mxu0 0.0
  %285 = vmatpush1.msra.mxu0 0.0
  %286 = vmatprep.subr.mxu0 0.0
  %287 = vmatpush1.msra.mxu0 0.0
  %288 = vmatprep.mubr.f32.mxu0 0.0
  %289 = vmatmul.mubr.f32.gmra.mrb[0].mxu0 %v75
  %v290 = vpop.f32.mrb[0].mxu0
  %v291 = vadd.f32 %v152, %v290
  %v292 = vpop.f32.mrb[0].mxu0
  %293 = vdwg.mxu0
  %v294 = vld [vmem:[%s6] sm:$0xff]
  %v295 = vld [vmem:[%s6 + $0x8] sm:$0xff]
  %v296 = vld [vmem:[%s6 + $0x10] sm:$0xff]
  %v297 = vld [vmem:[%s6 + $0x18] sm:$0xff]
  %v298 = vld [vmem:[%s6 + $0x20] sm:$0xff]
  %v299 = vld [vmem:[%s6 + $0x28] sm:$0xff]
  %v300 = vld [vmem:[%s6 + $0x30] sm:$0xff]
  %v301 = vld [vmem:[%s6 + $0x38] sm:$0xff]
  %v302 = vld [vmem:[%s6 + $0x40] sm:$0xff]
  %v303 = vld [vmem:[%s6 + $0x48] sm:$0xff]
  %v304 = vld [vmem:[%s6 + $0x50] sm:$0xff]
  %v305 = vld [vmem:[%s6 + $0x58] sm:$0xff]
  %v306 = vld [vmem:[%s6 + $0x60] sm:$0xff]
  %v307 = vld [vmem:[%s6 + $0x68] sm:$0xff]
  %v308 = vld [vmem:[%s6 + $0x70] sm:$0xff]
  %v309 = vld [vmem:[%s6 + $0x78] sm:$0xff]
  %v310 = vld [vmem:[%s6 + $0x80] sm:$0xff]
  %v311 = vld [vmem:[%s6 + $0x88] sm:$0xff]
  %v312 = vld [vmem:[%s6 + $0x90] sm:$0xff]
  %v313 = vld [vmem:[%s6 + $0x98] sm:$0xff]
  %v314 = vld [vmem:[%s6 + $0xa0] sm:$0xff]
  %v315 = vld [vmem:[%s6 + $0xa8] sm:$0xff]
  %v316 = vld [vmem:[%s6 + $0xb0] sm:$0xff]
  %v317 = vld [vmem:[%s6 + $0xb8] sm:$0xff]
  %v318 = vld [vmem:[%s6 + $0xc0] sm:$0xff]
  %v319 = vld [vmem:[%s6 + $0xc8] sm:$0xff]
  %v320 = vld [vmem:[%s6 + $0xd0] sm:$0xff]
  %v321 = vld [vmem:[%s6 + $0xd8] sm:$0xff]
  %v322 = vld [vmem:[%s6 + $0xe0] sm:$0xff]
  %v323 = vld [vmem:[%s6 + $0xe8] sm:$0xff]
  %v324 = vld [vmem:[%s6 + $0xf0] sm:$0xff]
  %v325 = vld [vmem:[%s6 + $0xf8] sm:$0xff]
  %v326 = vld [vmem:[%s6 + $0x100] sm:$0xff]
  %v327 = vld [vmem:[%s6 + $0x108] sm:$0xff]
  %v328 = vld [vmem:[%s6 + $0x110] sm:$0xff]
  %v329 = vld [vmem:[%s6 + $0x118] sm:$0xff]
  %v330 = vld [vmem:[%s6 + $0x120] sm:$0xff]
  %v331 = vld [vmem:[%s6 + $0x128] sm:$0xff]
  %v332 = vld [vmem:[%s6 + $0x130] sm:$0xff]
  %v333 = vld [vmem:[%s6 + $0x138] sm:$0xff]
  %v334 = vld [vmem:[%s6 + $0x140] sm:$0xff]
  %v335 = vld [vmem:[%s6 + $0x148] sm:$0xff]
  %v336 = vld [vmem:[%s6 + $0x150] sm:$0xff]
  %v337 = vld [vmem:[%s6 + $0x158] sm:$0xff]
  %v338 = vld [vmem:[%s6 + $0x160] sm:$0xff]
  %v339 = vld [vmem:[%s6 + $0x168] sm:$0xff]
  %v340 = vld [vmem:[%s6 + $0x170] sm:$0xff]
  %v341 = vld [vmem:[%s6 + $0x178] sm:$0xff]
  %v342 = vlaneseq
  %v343 = vshrl.u32 %v342, 7
  %v344 = vsub.s32 1, %v343
  %v345 = vrot.slane %v60, %v344
  %v346 = vlaneseq
  %v347 = vshrl.u32 %v346, 7
  %v348 = vsub.s32 5, %v347
  %v349 = vrot.slane %v60, %v348
  %v350 = vlaneseq
  %v351 = vshrl.u32 %v350, 7
  %v352 = vsub.s32 1, %v351
  %v353 = vrot.slane %v61, %v352
  %v357 = vlaneseq
  %v358 = vshrl.u32 %v357, 7
  %v359 = vsub.s32 1, %v358
  %v360 = vrot.slane %v345, %v359
  %v361 = vlaneseq
  %v362 = vshrl.u32 %v361, 7
  %v363 = vsub.s32 1, %v362
  %v364 = vrot.slane %v349, %v363
  %v365 = vlaneseq
  %v366 = vshrl.u32 %v365, 7
  %v367 = vsub.s32 1, %v366
  %v368 = vrot.slane %v353, %v367
  %369 = vmatprep.subr.mxu0 %v295
  %370 = vmatpush1.msra.mxu0 %v294
  %371 = vmatprep.subr.mxu0 %v298
  %372 = vmatpush1.msra.mxu0 %v297
  %373 = vmatprep.subr.mxu0 %v301
  %374 = vmatpush1.msra.mxu0 %v300
  %375 = vmatprep.subr.mxu0 %v304
  %376 = vmatpush1.msra.mxu0 %v303
  %377 = vmatprep.subr.mxu0 %v307
  %378 = vmatpush1.msra.mxu0 %v306
  %379 = vmatprep.subr.mxu0 %v310
  %380 = vmatpush1.msra.mxu0 %v309
  %381 = vmatprep.subr.mxu0 %v313
  %382 = vmatpush1.msra.mxu0 %v312
  %383 = vmatprep.subr.mxu0 %v316
  %384 = vmatpush1.msra.mxu0 %v315
  %385 = vmatprep.subr.mxu0 %v319
  %386 = vmatpush1.msra.mxu0 %v318
  %387 = vmatprep.subr.mxu0 %v322
  %388 = vmatpush1.msra.mxu0 %v321
  %389 = vmatprep.subr.mxu0 %v325
  %390 = vmatpush1.msra.mxu0 %v324
  %391 = vmatprep.subr.mxu0 %v328
  %392 = vmatpush1.msra.mxu0 %v327
  %393 = vmatprep.subr.mxu0 %v331
  %394 = vmatpush1.msra.mxu0 %v330
  %395 = vmatprep.subr.mxu0 %v334
  %396 = vmatpush1.msra.mxu0 %v333
  %397 = vmatprep.subr.mxu0 %v337
  %398 = vmatpush1.msra.mxu0 %v336
  %399 = vmatprep.subr.mxu0 %v340
  %400 = vmatpush1.msra.mxu0 %v339
  %401 = vmatprep.subr.mxu0 0.0
  %402 = vmatpush1.msra.mxu0 0.0
  %403 = vmatprep.subr.mxu0 0.0
  %404 = vmatpush1.msra.mxu0 0.0
  %405 = vmatprep.subr.mxu0 0.0
  %406 = vmatpush1.msra.mxu0 0.0
  %407 = vmatprep.subr.mxu0 0.0
  %408 = vmatpush1.msra.mxu0 0.0
  %409 = vmatprep.subr.mxu0 0.0
  %410 = vmatpush1.msra.mxu0 0.0
  %411 = vmatprep.subr.mxu0 0.0
  %412 = vmatpush1.msra.mxu0 0.0
  %413 = vmatprep.subr.mxu0 0.0
  %414 = vmatpush1.msra.mxu0 0.0
  %415 = vmatprep.subr.mxu0 0.0
  %416 = vmatpush1.msra.mxu0 0.0
  %417 = vmatprep.subr.mxu0 0.0
  %418 = vmatpush1.msra.mxu0 0.0
  %419 = vmatprep.subr.mxu0 0.0
  %420 = vmatpush1.msra.mxu0 0.0
  %421 = vmatprep.subr.mxu0 0.0
  %422 = vmatpush1.msra.mxu0 0.0
  %423 = vmatprep.subr.mxu0 0.0
  %424 = vmatpush1.msra.mxu0 0.0
  %425 = vmatprep.subr.mxu0 0.0
  %426 = vmatpush1.msra.mxu0 0.0
  %427 = vmatprep.subr.mxu0 0.0
  %428 = vmatpush1.msra.mxu0 0.0
  %429 = vmatprep.subr.mxu0 0.0
  %430 = vmatpush1.msra.mxu0 0.0
  %431 = vmatprep.subr.mxu0 0.0
  %432 = vmatpush1.msra.mxu0 0.0
  %433 = vmatprep.mubr.f32.mxu0 0.0
  %434 = vmatmul.mubr.f32.gmra.mrb[0].mxu0 %v72
  %v435 = vpop.f32.mrb[0].mxu0
  %v436 = vadd.f32 %v360, %v435
  %v437 = vpop.f32.mrb[0].mxu0
  %v438 = vadd.f32 %v364, %v437
  %439 = vdwg.mxu0
  %440 = vmatprep.subr.mxu0 0.0
  %441 = vmatpush1.msra.mxu0 %v296
  %442 = vmatprep.subr.mxu0 0.0
  %443 = vmatpush1.msra.mxu0 %v299
  %444 = vmatprep.subr.mxu0 0.0
  %445 = vmatpush1.msra.mxu0 %v302
  %446 = vmatprep.subr.mxu0 0.0
  %447 = vmatpush1.msra.mxu0 %v305
  %448 = vmatprep.subr.mxu0 0.0
  %449 = vmatpush1.msra.mxu0 %v308
  %450 = vmatprep.subr.mxu0 0.0
  %451 = vmatpush1.msra.mxu0 %v311
  %452 = vmatprep.subr.mxu0 0.0
  %453 = vmatpush1.msra.mxu0 %v314
  %454 = vmatprep.subr.mxu0 0.0
  %455 = vmatpush1.msra.mxu0 %v317
  %456 = vmatprep.subr.mxu0 0.0
  %457 = vmatpush1.msra.mxu0 %v320
  %458 = vmatprep.subr.mxu0 0.0
  %459 = vmatpush1.msra.mxu0 %v323
  %460 = vmatprep.subr.mxu0 0.0
  %461 = vmatpush1.msra.mxu0 %v326
  %462 = vmatprep.subr.mxu0 0.0
  %463 = vmatpush1.msra.mxu0 %v329
  %464 = vmatprep.subr.mxu0 0.0
  %465 = vmatpush1.msra.mxu0 %v332
  %466 = vmatprep.subr.mxu0 0.0
  %467 = vmatpush1.msra.mxu0 %v335
  %468 = vmatprep.subr.mxu0 0.0
  %469 = vmatpush1.msra.mxu0 %v338
  %470 = vmatprep.subr.mxu0 0.0
  %471 = vmatpush1.msra.mxu0 %v341
  %472 = vmatprep.subr.mxu0 0.0
  %473 = vmatpush1.msra.mxu0 0.0
  %474 = vmatprep.subr.mxu0 0.0
  %475 = vmatpush1.msra.mxu0 0.0
  %476 = vmatprep.subr.mxu0 0.0
  %477 = vmatpush1.msra.mxu0 0.0
  %478 = vmatprep.subr.mxu0 0.0
  %479 = vmatpush1.msra.mxu0 0.0
  %480 = vmatprep.subr.mxu0 0.0
  %481 = vmatpush1.msra.mxu0 0.0
  %482 = vmatprep.subr.mxu0 0.0
  %483 = vmatpush1.msra.mxu0 0.0
  %484 = vmatprep.subr.mxu0 0.0
  %485 = vmatpush1.msra.mxu0 0.0
  %486 = vmatprep.subr.mxu0 0.0
  %487 = vmatpush1.msra.mxu0 0.0
  %488 = vmatprep.subr.mxu0 0.0
  %489 = vmatpush1.msra.mxu0 0.0
  %490 = vmatprep.subr.mxu0 0.0
  %491 = vmatpush1.msra.mxu0 0.0
  %492 = vmatprep.subr.mxu0 0.0
  %493 = vmatpush1.msra.mxu0 0.0
  %494 = vmatprep.subr.mxu0 0.0
  %495 = vmatpush1.msra.mxu0 0.0
  %496 = vmatprep.subr.mxu0 0.0
  %497 = vmatpush1.msra.mxu0 0.0
  %498 = vmatprep.subr.mxu0 0.0
  %499 = vmatpush1.msra.mxu0 0.0
  %500 = vmatprep.subr.mxu0 0.0
  %501 = vmatpush1.msra.mxu0 0.0
  %502 = vmatprep.subr.mxu0 0.0
  %503 = vmatpush1.msra.mxu0 0.0
  %504 = vmatprep.mubr.f32.mxu0 0.0
  %505 = vmatmul.mubr.f32.gmra.mrb[0].mxu0 %v72
  %v506 = vpop.f32.mrb[0].mxu0
  %v507 = vadd.f32 %v368, %v506
  %v508 = vpop.f32.mrb[0].mxu0
  %509 = vdwg.mxu0
  %v510 = vadd.f32 %v220, %v436
  %v511 = vxor.u32 %v510, 2147483648
  %v512 = vmul.f32 %v511, 1.442695
  %v513 = vpow.pop %v512
  %v514 = vadd.f32 %v513, 1.0
  %v515 = vrcp.pop %v514
  %v516 = vmul.f32 1.0, %v515
  %v517 = vadd.f32 %v222, %v438
  %v518 = vxor.u32 %v517, 2147483648
  %v519 = vmul.f32 %v518, 1.442695
  %v520 = vpow.pop %v519
  %v521 = vadd.f32 %v520, 1.0
  %v522 = vrcp.pop %v521
  %v523 = vmul.f32 1.0, %v522
  %v524 = vmul.f32 %v516, %v507
  %v525 = vadd.f32 %v291, %v524
  %v526 = vtanh.pop %v525
  %v527 = vsub.f32 1.0, %v523
  %v528 = vmul.f32 %v527, %v526
  %v529 = vmul.f32 %v523, %v72
  %v530 = vadd.f32 %v528, %v529
  %v531 = vld [vmem:[%s7] sm:$0xff]
  %v532 = vld [vmem:[%s7 + $0x8] sm:$0xff]
  %v533 = vld [vmem:[%s7 + $0x10] sm:$0xff]
  %v534 = vld [vmem:[%s7 + $0x18] sm:$0xff]
  %v535 = vld [vmem:[%s7 + $0x20] sm:$0xff]
  %v536 = vld [vmem:[%s7 + $0x28] sm:$0xff]
  %v537 = vld [vmem:[%s7 + $0x30] sm:$0xff]
  %v538 = vld [vmem:[%s7 + $0x38] sm:$0xff]
  %v539 = vld [vmem:[%s7 + $0x40] sm:$0xff]
  %v540 = vld [vmem:[%s7 + $0x48] sm:$0xff]
  %v541 = vld [vmem:[%s7 + $0x50] sm:$0xff]
  %v542 = vld [vmem:[%s7 + $0x58] sm:$0xff]
  %v543 = vld [vmem:[%s7 + $0x60] sm:$0xff]
  %v544 = vld [vmem:[%s7 + $0x68] sm:$0xff]
  %v545 = vld [vmem:[%s7 + $0x70] sm:$0xff]
  %v546 = vld [vmem:[%s7 + $0x78] sm:$0xff]
  %v547 = vld [vmem:[%s7 + $0x80] sm:$0xff]
  %v548 = vld [vmem:[%s7 + $0x88] sm:$0xff]
  %v549 = vld [vmem:[%s7 + $0x90] sm:$0xff]
  %v550 = vld [vmem:[%s7 + $0x98] sm:$0xff]
  %v551 = vld [vmem:[%s7 + $0xa0] sm:$0xff]
  %v552 = vld [vmem:[%s7 + $0xa8] sm:$0xff]
  %v553 = vld [vmem:[%s7 + $0xb0] sm:$0xff]
  %v554 = vld [vmem:[%s7 + $0xb8] sm:$0xff]
  %v555 = vld [vmem:[%s7 + $0xc0] sm:$0xff]
  %v556 = vld [vmem:[%s7 + $0xc8] sm:$0xff]
  %v557 = vld [vmem:[%s7 + $0xd0] sm:$0xff]
  %v558 = vld [vmem:[%s7 + $0xd8] sm:$0xff]
  %v559 = vld [vmem:[%s7 + $0xe0] sm:$0xff]
  %v560 = vld [vmem:[%s7 + $0xe8] sm:$0xff]
  %v561 = vld [vmem:[%s7 + $0xf0] sm:$0xff]
  %v562 = vld [vmem:[%s7 + $0xf8] sm:$0xff]
  %v563 = vld [vmem:[%s7 + $0x100] sm:$0xff]
  %v564 = vld [vmem:[%s7 + $0x108] sm:$0xff]
  %v565 = vld [vmem:[%s7 + $0x110] sm:$0xff]
  %v566 = vld [vmem:[%s7 + $0x118] sm:$0xff]
  %v567 = vld [vmem:[%s7 + $0x120] sm:$0xff]
  %v568 = vld [vmem:[%s7 + $0x128] sm:$0xff]
  %v569 = vld [vmem:[%s7 + $0x130] sm:$0xff]
  %v570 = vld [vmem:[%s7 + $0x138] sm:$0xff]
  %v571 = vld [vmem:[%s7 + $0x140] sm:$0xff]
  %v572 = vld [vmem:[%s7 + $0x148] sm:$0xff]
  %v573 = vld [vmem:[%s7 + $0x150] sm:$0xff]
  %v574 = vld [vmem:[%s7 + $0x158] sm:$0xff]
  %v575 = vld [vmem:[%s7 + $0x160] sm:$0xff]
  %v576 = vld [vmem:[%s7 + $0x168] sm:$0xff]
  %v577 = vld [vmem:[%s7 + $0x170] sm:$0xff]
  %v578 = vld [vmem:[%s7 + $0x178] sm:$0xff]
  %v579 = vlaneseq
  %v580 = vshrl.u32 %v579, 7
  %v581 = vsub.s32 2, %v580
  %v582 = vrot.slane %v60, %v581
  %v583 = vlaneseq
  %v584 = vshrl.u32 %v583, 7
  %v585 = vsub.s32 6, %v584
  %v586 = vrot.slane %v60, %v585
  %v587 = vlaneseq
  %v588 = vshrl.u32 %v587, 7
  %v589 = vsub.s32 2, %v588
  %v590 = vrot.slane %v61, %v589
  %v594 = vlaneseq
  %v595 = vshrl.u32 %v594, 7
  %v596 = vsub.s32 2, %v595
  %v597 = vrot.slane %v582, %v596
  %v598 = vlaneseq
  %v599 = vshrl.u32 %v598, 7
  %v600 = vsub.s32 2, %v599
  %v601 = vrot.slane %v586, %v600
  %v602 = vlaneseq
  %v603 = vshrl.u32 %v602, 7
  %v604 = vsub.s32 2, %v603
  %v605 = vrot.slane %v590, %v604
  %606 = vmatprep.subr.mxu0 %v532
  %607 = vmatpush1.msra.mxu0 %v531
  %608 = vmatprep.subr.mxu0 %v535
  %609 = vmatpush1.msra.mxu0 %v534
  %610 = vmatprep.subr.mxu0 %v538
  %611 = vmatpush1.msra.mxu0 %v537
  %612 = vmatprep.subr.mxu0 %v541
  %613 = vmatpush1.msra.mxu0 %v540
  %614 = vmatprep.subr.mxu0 %v544
  %615 = vmatpush1.msra.mxu0 %v543
  %616 = vmatprep.subr.mxu0 %v547
  %617 = vmatpush1.msra.mxu0 %v546
  %618 = vmatprep.subr.mxu0 %v550
  %619 = vmatpush1.msra.mxu0 %v549
  %620 = vmatprep.subr.mxu0 %v553
  %621 = vmatpush1.msra.mxu0 %v552
  %622 = vmatprep.subr.mxu0 %v556
  %623 = vmatpush1.msra.mxu0 %v555
  %624 = vmatprep.subr.mxu0 %v559
  %625 = vmatpush1.msra.mxu0 %v558
  %626 = vmatprep.subr.mxu0 %v562
  %627 = vmatpush1.msra.mxu0 %v561
  %628 = vmatprep.subr.mxu0 %v565
  %629 = vmatpush1.msra.mxu0 %v564
  %630 = vmatprep.subr.mxu0 %v568
  %631 = vmatpush1.msra.mxu0 %v567
  %632 = vmatprep.subr.mxu0 %v571
  %633 = vmatpush1.msra.mxu0 %v570
  %634 = vmatprep.subr.mxu0 %v574
  %635 = vmatpush1.msra.mxu0 %v573
  %636 = vmatprep.subr.mxu0 %v577
  %637 = vmatpush1.msra.mxu0 %v576
  %638 = vmatprep.subr.mxu0 0.0
  %639 = vmatpush1.msra.mxu0 0.0
  %640 = vmatprep.subr.mxu0 0.0
  %641 = vmatpush1.msra.mxu0 0.0
  %642 = vmatprep.subr.mxu0 0.0
  %643 = vmatpush1.msra.mxu0 0.0
  %644 = vmatprep.subr.mxu0 0.0
  %645 = vmatpush1.msra.mxu0 0.0
  %646 = vmatprep.subr.mxu0 0.0
  %647 = vmatpush1.msra.mxu0 0.0
  %648 = vmatprep.subr.mxu0 0.0
  %649 = vmatpush1.msra.mxu0 0.0
  %650 = vmatprep.subr.mxu0 0.0
  %651 = vmatpush1.msra.mxu0 0.0
  %652 = vmatprep.subr.mxu0 0.0
  %653 = vmatpush1.msra.mxu0 0.0
  %654 = vmatprep.subr.mxu0 0.0
  %655 = vmatpush1.msra.mxu0 0.0
  %656 = vmatprep.subr.mxu0 0.0
  %657 = vmatpush1.msra.mxu0 0.0
  %658 = vmatprep.subr.mxu0 0.0
  %659 = vmatpush1.msra.mxu0 0.0
  %660 = vmatprep.subr.mxu0 0.0
  %661 = vmatpush1.msra.mxu0 0.0
  %662 = vmatprep.subr.mxu0 0.0
  %663 = vmatpush1.msra.mxu0 0.0
  %664 = vmatprep.subr.mxu0 0.0
  %665 = vmatpush1.msra.mxu0 0.0
  %666 = vmatprep.subr.mxu0 0.0
  %667 = vmatpush1.msra.mxu0 0.0
  %668 = vmatprep.subr.mxu0 0.0
  %669 = vmatpush1.msra.mxu0 0.0
  %670 = vmatprep.mubr.f32.mxu0 0.0
  %671 = vmatmul.mubr.f32.gmra.mrb[0].mxu0 %v530
  %v672 = vpop.f32.mrb[0].mxu0
  %v673 = vadd.f32 %v597, %v672
  %v674 = vpop.f32.mrb[0].mxu0
  %v675 = vadd.f32 %v601, %v674
  %676 = vdwg.mxu0
  %677 = vmatprep.subr.mxu0 0.0
  %678 = vmatpush1.msra.mxu0 %v533
  %679 = vmatprep.subr.mxu0 0.0
  %680 = vmatpush1.msra.mxu0 %v536
  %681 = vmatprep.subr.mxu0 0.0
  %682 = vmatpush1.msra.mxu0 %v539
  %683 = vmatprep.subr.mxu0 0.0
  %684 = vmatpush1.msra.mxu0 %v542
  %685 = vmatprep.subr.mxu0 0.0
  %686 = vmatpush1.msra.mxu0 %v545
  %687 = vmatprep.subr.mxu0 0.0
  %688 = vmatpush1.msra.mxu0 %v548
  %689 = vmatprep.subr.mxu0 0.0
  %690 = vmatpush1.msra.mxu0 %v551
  %691 = vmatprep.subr.mxu0 0.0
  %692 = vmatpush1.msra.mxu0 %v554
  %693 = vmatprep.subr.mxu0 0.0
  %694 = vmatpush1.msra.mxu0 %v557
  %695 = vmatprep.subr.mxu0 0.0
  %696 = vmatpush1.msra.mxu0 %v560
  %697 = vmatprep.subr.mxu0 0.0
  %698 = vmatpush1.msra.mxu0 %v563
  %699 = vmatprep.subr.mxu0 0.0
  %700 = vmatpush1.msra.mxu0 %v566
  %701 = vmatprep.subr.mxu0 0.0
  %702 = vmatpush1.msra.mxu0 %v569
  %703 = vmatprep.subr.mxu0 0.0
  %704 = vmatpush1.msra.mxu0 %v572
  %705 = vmatprep.subr.mxu0 0.0
  %706 = vmatpush1.msra.mxu0 %v575
  %707 = vmatprep.subr.mxu0 0.0
  %708 = vmatpush1.msra.mxu0 %v578
  %709 = vmatprep.subr.mxu0 0.0
  %710 = vmatpush1.msra.mxu0 0.0
  %711 = vmatprep.subr.mxu0 0.0
  %712 = vmatpush1.msra.mxu0 0.0
  %713 = vmatprep.subr.mxu0 0.0
  %714 = vmatpush1.msra.mxu0 0.0
  %715 = vmatprep.subr.mxu0 0.0
  %716 = vmatpush1.msra.mxu0 0.0
  %717 = vmatprep.subr.mxu0 0.0
  %718 = vmatpush1.msra.mxu0 0.0
  %719 = vmatprep.subr.mxu0 0.0
  %720 = vmatpush1.msra.mxu0 0.0
  %721 = vmatprep.subr.mxu0 0.0
  %722 = vmatpush1.msra.mxu0 0.0
  %723 = vmatprep.subr.mxu0 0.0
  %724 = vmatpush1.msra.mxu0 0.0
  %725 = vmatprep.subr.mxu0 0.0
  %726 = vmatpush1.msra.mxu0 0.0
  %727 = vmatprep.subr.mxu0 0.0
  %728 = vmatpush1.msra.mxu0 0.0
  %729 = vmatprep.subr.mxu0 0.0
  %730 = vmatpush1.msra.mxu0 0.0
  %731 = vmatprep.subr.mxu0 0.0
  %732 = vmatpush1.msra.mxu0 0.0
  %733 = vmatprep.subr.mxu0 0.0
  %734 = vmatpush1.msra.mxu0 0.0
  %735 = vmatprep.subr.mxu0 0.0
  %736 = vmatpush1.msra.mxu0 0.0
  %737 = vmatprep.subr.mxu0 0.0
  %738 = vmatpush1.msra.mxu0 0.0
  %739 = vmatprep.subr.mxu0 0.0
  %740 = vmatpush1.msra.mxu0 0.0
  %741 = vmatprep.mubr.f32.mxu0 0.0
  %742 = vmatmul.mubr.f32.gmra.mrb[0].mxu0 %v530
  %v743 = vpop.f32.mrb[0].mxu0
  %v744 = vadd.f32 %v605, %v743
  %v745 = vpop.f32.mrb[0].mxu0
  %746 = vdwg.mxu0
  %v747 = vld [vmem:[%s8] sm:$0xff]
  %v748 = vld [vmem:[%s8 + $0x8] sm:$0xff]
  %v749 = vld [vmem:[%s8 + $0x10] sm:$0xff]
  %v750 = vld [vmem:[%s8 + $0x18] sm:$0xff]
  %v751 = vld [vmem:[%s8 + $0x20] sm:$0xff]
  %v752 = vld [vmem:[%s8 + $0x28] sm:$0xff]
  %v753 = vld [vmem:[%s8 + $0x30] sm:$0xff]
  %v754 = vld [vmem:[%s8 + $0x38] sm:$0xff]
  %v755 = vld [vmem:[%s8 + $0x40] sm:$0xff]
  %v756 = vld [vmem:[%s8 + $0x48] sm:$0xff]
  %v757 = vld [vmem:[%s8 + $0x50] sm:$0xff]
  %v758 = vld [vmem:[%s8 + $0x58] sm:$0xff]
  %v759 = vld [vmem:[%s8 + $0x60] sm:$0xff]
  %v760 = vld [vmem:[%s8 + $0x68] sm:$0xff]
  %v761 = vld [vmem:[%s8 + $0x70] sm:$0xff]
  %v762 = vld [vmem:[%s8 + $0x78] sm:$0xff]
  %v763 = vld [vmem:[%s8 + $0x80] sm:$0xff]
  %v764 = vld [vmem:[%s8 + $0x88] sm:$0xff]
  %v765 = vld [vmem:[%s8 + $0x90] sm:$0xff]
  %v766 = vld [vmem:[%s8 + $0x98] sm:$0xff]
  %v767 = vld [vmem:[%s8 + $0xa0] sm:$0xff]
  %v768 = vld [vmem:[%s8 + $0xa8] sm:$0xff]
  %v769 = vld [vmem:[%s8 + $0xb0] sm:$0xff]
  %v770 = vld [vmem:[%s8 + $0xb8] sm:$0xff]
  %v771 = vld [vmem:[%s8 + $0xc0] sm:$0xff]
  %v772 = vld [vmem:[%s8 + $0xc8] sm:$0xff]
  %v773 = vld [vmem:[%s8 + $0xd0] sm:$0xff]
  %v774 = vld [vmem:[%s8 + $0xd8] sm:$0xff]
  %v775 = vld [vmem:[%s8 + $0xe0] sm:$0xff]
  %v776 = vld [vmem:[%s8 + $0xe8] sm:$0xff]
  %v777 = vld [vmem:[%s8 + $0xf0] sm:$0xff]
  %v778 = vld [vmem:[%s8 + $0xf8] sm:$0xff]
  %v779 = vld [vmem:[%s8 + $0x100] sm:$0xff]
  %v780 = vld [vmem:[%s8 + $0x108] sm:$0xff]
  %v781 = vld [vmem:[%s8 + $0x110] sm:$0xff]
  %v782 = vld [vmem:[%s8 + $0x118] sm:$0xff]
  %v783 = vld [vmem:[%s8 + $0x120] sm:$0xff]
  %v784 = vld [vmem:[%s8 + $0x128] sm:$0xff]
  %v785 = vld [vmem:[%s8 + $0x130] sm:$0xff]
  %v786 = vld [vmem:[%s8 + $0x138] sm:$0xff]
  %v787 = vld [vmem:[%s8 + $0x140] sm:$0xff]
  %v788 = vld [vmem:[%s8 + $0x148] sm:$0xff]
  %v789 = vld [vmem:[%s8 + $0x150] sm:$0xff]
  %v790 = vld [vmem:[%s8 + $0x158] sm:$0xff]
  %v791 = vld [vmem:[%s8 + $0x160] sm:$0xff]
  %v792 = vld [vmem:[%s8 + $0x168] sm:$0xff]
  %v793 = vld [vmem:[%s8 + $0x170] sm:$0xff]
  %v794 = vld [vmem:[%s8 + $0x178] sm:$0xff]
  %v795 = vlaneseq
  %v796 = vshrl.u32 %v795, 7
  %v797 = vsub.s32 3, %v796
  %v798 = vrot.slane %v60, %v797
  %v799 = vlaneseq
  %v800 = vshrl.u32 %v799, 7
  %v801 = vsub.s32 7, %v800
  %v802 = vrot.slane %v60, %v801
  %v803 = vlaneseq
  %v804 = vshrl.u32 %v803, 7
  %v805 = vsub.s32 3, %v804
  %v806 = vrot.slane %v61, %v805
  %v810 = vlaneseq
  %v811 = vshrl.u32 %v810, 7
  %v812 = vsub.s32 3, %v811
  %v813 = vrot.slane %v798, %v812
  %v814 = vlaneseq
  %v815 = vshrl.u32 %v814, 7
  %v816 = vsub.s32 3, %v815
  %v817 = vrot.slane %v802, %v816
  %v818 = vlaneseq
  %v819 = vshrl.u32 %v818, 7
  %v820 = vsub.s32 3, %v819
  %v821 = vrot.slane %v806, %v820
  %822 = vmatprep.subr.mxu0 %v748
  %823 = vmatpush1.msra.mxu0 %v747
  %824 = vmatprep.subr.mxu0 %v751
  %825 = vmatpush1.msra.mxu0 %v750
  %826 = vmatprep.subr.mxu0 %v754
  %827 = vmatpush1.msra.mxu0 %v753
  %828 = vmatprep.subr.mxu0 %v757
  %829 = vmatpush1.msra.mxu0 %v756
  %830 = vmatprep.subr.mxu0 %v760
  %831 = vmatpush1.msra.mxu0 %v759
  %832 = vmatprep.subr.mxu0 %v763
  %833 = vmatpush1.msra.mxu0 %v762
  %834 = vmatprep.subr.mxu0 %v766
  %835 = vmatpush1.msra.mxu0 %v765
  %836 = vmatprep.subr.mxu0 %v769
  %837 = vmatpush1.msra.mxu0 %v768
  %838 = vmatprep.subr.mxu0 %v772
  %839 = vmatpush1.msra.mxu0 %v771
  %840 = vmatprep.subr.mxu0 %v775
  %841 = vmatpush1.msra.mxu0 %v774
  %842 = vmatprep.subr.mxu0 %v778
  %843 = vmatpush1.msra.mxu0 %v777
  %844 = vmatprep.subr.mxu0 %v781
  %845 = vmatpush1.msra.mxu0 %v780
  %846 = vmatprep.subr.mxu0 %v784
  %847 = vmatpush1.msra.mxu0 %v783
  %848 = vmatprep.subr.mxu0 %v787
  %849 = vmatpush1.msra.mxu0 %v786
  %850 = vmatprep.subr.mxu0 %v790
  %851 = vmatpush1.msra.mxu0 %v789
  %852 = vmatprep.subr.mxu0 %v793
  %853 = vmatpush1.msra.mxu0 %v792
  %854 = vmatprep.subr.mxu0 0.0
  %855 = vmatpush1.msra.mxu0 0.0
  %856 = vmatprep.subr.mxu0 0.0
  %857 = vmatpush1.msra.mxu0 0.0
  %858 = vmatprep.subr.mxu0 0.0
  %859 = vmatpush1.msra.mxu0 0.0
  %860 = vmatprep.subr.mxu0 0.0
  %861 = vmatpush1.msra.mxu0 0.0
  %862 = vmatprep.subr.mxu0 0.0
  %863 = vmatpush1.msra.mxu0 0.0
  %864 = vmatprep.subr.mxu0 0.0
  %865 = vmatpush1.msra.mxu0 0.0
  %866 = vmatprep.subr.mxu0 0.0
  %867 = vmatpush1.msra.mxu0 0.0
  %868 = vmatprep.subr.mxu0 0.0
  %869 = vmatpush1.msra.mxu0 0.0
  %870 = vmatprep.subr.mxu0 0.0
  %871 = vmatpush1.msra.mxu0 0.0
  %872 = vmatprep.subr.mxu0 0.0
  %873 = vmatpush1.msra.mxu0 0.0
  %874 = vmatprep.subr.mxu0 0.0
  %875 = vmatpush1.msra.mxu0 0.0
  %876 = vmatprep.subr.mxu0 0.0
  %877 = vmatpush1.msra.mxu0 0.0
  %878 = vmatprep.subr.mxu0 0.0
  %879 = vmatpush1.msra.mxu0 0.0
  %880 = vmatprep.subr.mxu0 0.0
  %881 = vmatpush1.msra.mxu0 0.0
  %882 = vmatprep.subr.mxu0 0.0
  %883 = vmatpush1.msra.mxu0 0.0
  %884 = vmatprep.subr.mxu0 0.0
  %885 = vmatpush1.msra.mxu0 0.0
  %886 = vmatprep.mubr.f32.mxu0 0.0
  %887 = vmatmul.mubr.f32.gmra.mrb[0].mxu0 %v74
  %v888 = vpop.f32.mrb[0].mxu0
  %v889 = vadd.f32 %v813, %v888
  %v890 = vpop.f32.mrb[0].mxu0
  %v891 = vadd.f32 %v817, %v890
  %892 = vdwg.mxu0
  %893 = vmatprep.subr.mxu0 0.0
  %894 = vmatpush1.msra.mxu0 %v749
  %895 = vmatprep.subr.mxu0 0.0
  %896 = vmatpush1.msra.mxu0 %v752
  %897 = vmatprep.subr.mxu0 0.0
  %898 = vmatpush1.msra.mxu0 %v755
  %899 = vmatprep.subr.mxu0 0.0
  %900 = vmatpush1.msra.mxu0 %v758
  %901 = vmatprep.subr.mxu0 0.0
  %902 = vmatpush1.msra.mxu0 %v761
  %903 = vmatprep.subr.mxu0 0.0
  %904 = vmatpush1.msra.mxu0 %v764
  %905 = vmatprep.subr.mxu0 0.0
  %906 = vmatpush1.msra.mxu0 %v767
  %907 = vmatprep.subr.mxu0 0.0
  %908 = vmatpush1.msra.mxu0 %v770
  %909 = vmatprep.subr.mxu0 0.0
  %910 = vmatpush1.msra.mxu0 %v773
  %911 = vmatprep.subr.mxu0 0.0
  %912 = vmatpush1.msra.mxu0 %v776
  %913 = vmatprep.subr.mxu0 0.0
  %914 = vmatpush1.msra.mxu0 %v779
  %915 = vmatprep.subr.mxu0 0.0
  %916 = vmatpush1.msra.mxu0 %v782
  %917 = vmatprep.subr.mxu0 0.0
  %918 = vmatpush1.msra.mxu0 %v785
  %919 = vmatprep.subr.mxu0 0.0
  %920 = vmatpush1.msra.mxu0 %v788
  %921 = vmatprep.subr.mxu0 0.0
  %922 = vmatpush1.msra.mxu0 %v791
  %923 = vmatprep.subr.mxu0 0.0
  %924 = vmatpush1.msra.mxu0 %v794
  %925 = vmatprep.subr.mxu0 0.0
  %926 = vmatpush1.msra.mxu0 0.0
  %927 = vmatprep.subr.mxu0 0.0
  %928 = vmatpush1.msra.mxu0 0.0
  %929 = vmatprep.subr.mxu0 0.0
  %930 = vmatpush1.msra.mxu0 0.0
  %931 = vmatprep.subr.mxu0 0.0
  %932 = vmatpush1.msra.mxu0 0.0
  %933 = vmatprep.subr.mxu0 0.0
  %934 = vmatpush1.msra.mxu0 0.0
  %935 = vmatprep.subr.mxu0 0.0
  %936 = vmatpush1.msra.mxu0 0.0
  %937 = vmatprep.subr.mxu0 0.0
  %938 = vmatpush1.msra.mxu0 0.0
  %939 = vmatprep.subr.mxu0 0.0
  %940 = vmatpush1.msra.mxu0 0.0
  %941 = vmatprep.subr.mxu0 0.0
  %942 = vmatpush1.msra.mxu0 0.0
  %943 = vmatprep.subr.mxu0 0.0
  %944 = vmatpush1.msra.mxu0 0.0
  %945 = vmatprep.subr.mxu0 0.0
  %946 = vmatpush1.msra.mxu0 0.0
  %947 = vmatprep.subr.mxu0 0.0
  %948 = vmatpush1.msra.mxu0 0.0
  %949 = vmatprep.subr.mxu0 0.0
  %950 = vmatpush1.msra.mxu0 0.0
  %951 = vmatprep.subr.mxu0 0.0
  %952 = vmatpush1.msra.mxu0 0.0
  %953 = vmatprep.subr.mxu0 0.0
  %954 = vmatpush1.msra.mxu0 0.0
  %955 = vmatprep.subr.mxu0 0.0
  %956 = vmatpush1.msra.mxu0 0.0
  %957 = vmatprep.mubr.f32.mxu0 0.0
  %958 = vmatmul.mubr.f32.gmra.mrb[0].mxu0 %v74
  %v959 = vpop.f32.mrb[0].mxu0
  %v960 = vadd.f32 %v821, %v959
  %v961 = vpop.f32.mrb[0].mxu0
  %962 = vdwg.mxu0
  %v963 = vadd.f32 %v673, %v889
  %v964 = vxor.u32 %v963, 2147483648
  %v965 = vmul.f32 %v964, 1.442695
  %v966 = vpow.pop %v965
  %v967 = vadd.f32 %v966, 1.0
  %v968 = vrcp.pop %v967
  %v969 = vmul.f32 1.0, %v968
  %v970 = vadd.f32 %v675, %v891
  %v971 = vxor.u32 %v970, 2147483648
  %v972 = vmul.f32 %v971, 1.442695
  %v973 = vpow.pop %v972
  %v974 = vadd.f32 %v973, 1.0
  %v975 = vrcp.pop %v974
  %v976 = vmul.f32 1.0, %v975
  %v977 = vmul.f32 %v969, %v960
  %v978 = vadd.f32 %v744, %v977
  %v979 = vtanh.pop %v978
  %v980 = vsub.f32 1.0, %v976
  %v981 = vmul.f32 %v980, %v979
  %v982 = vmul.f32 %v976, %v74
  %v983 = vadd.f32 %v981, %v982
  %v985 = vcombine.high %v983, %v983
  %v987 = vunpack.c.l.s4 1966171168
  %v988 = vunpack.c.0.s8 %v987
  %v989 = vlaneseq
  %v990 = vshrl.u32 %v989, 7
  %v991 = vsub.s32 %v988, %v990
  %v992 = vrot.slane %v983, %v991
  %v994 = vunpack.c.l.s4 1966171168
  %v995 = vunpack.c.0.s8 %v994
  %v996 = vlaneseq
  %v997 = vshrl.u32 %v996, 7
  %v998 = vsub.s32 %v995, %v997
  %v999 = vrot.slane %v985, %v998
  %v1000 = vcombine.high %v992, %v992
  %v1001 = vcombine.high %v999, %v999
  %v1003 = vunpack.c.l.s4 1966171168
  %v1004 = vunpack.c.0.s8 %v1003
  %v1005 = vlaneseq
  %v1006 = vshrl.u32 %v1005, 7
  %v1007 = vsub.s32 %v1004, %v1006
  %v1008 = vrot.slane %v992, %v1007
  %v1010 = vunpack.c.l.s4 1966171168
  %v1011 = vunpack.c.0.s8 %v1010
  %v1012 = vlaneseq
  %v1013 = vshrl.u32 %v1012, 7
  %v1014 = vsub.s32 %v1011, %v1013
  %v1015 = vrot.slane %v999, %v1014
  %v1017 = vunpack.c.l.s4 1966171168
  %v1018 = vunpack.c.0.s8 %v1017
  %v1019 = vlaneseq
  %v1020 = vshrl.u32 %v1019, 7
  %v1021 = vsub.s32 %v1018, %v1020
  %v1022 = vrot.slane %v1000, %v1021
  %v1024 = vunpack.c.l.s4 1966171168
  %v1025 = vunpack.c.0.s8 %v1024
  %v1026 = vlaneseq
  %v1027 = vshrl.u32 %v1026, 7
  %v1028 = vsub.s32 %v1025, %v1027
  %v1029 = vrot.slane %v1001, %v1028
  %v1030 = vcombine.high %v1008, %v1008
  %v1031 = vcombine.high %v1015, %v1015
  %v1032 = vcombine.high %v1022, %v1022
  %v1033 = vcombine.high %v1029, %v1029
  %v1042 = vld [vmem:[%s2] sm:$0xff]
  %v1043 = vld [vmem:[%s2 + $0x8] sm:$0xff]
  %v1044 = vld [vmem:[%s2 + $0x10] sm:$0xff]
  %v1045 = vld [vmem:[%s2 + $0x18] sm:$0xff]
  %v1046 = vld [vmem:[%s2 + $0x20] sm:$0xff]
  %v1047 = vld [vmem:[%s2 + $0x28] sm:$0xff]
  %v1048 = vld [vmem:[%s2 + $0x30] sm:$0xff]
  %v1049 = vld [vmem:[%s2 + $0x38] sm:$0xff]
  %v1050 = vld [vmem:[%s2 + $0x40] sm:$0xff]
  %v1051 = vld [vmem:[%s2 + $0x48] sm:$0xff]
  %v1052 = vld [vmem:[%s2 + $0x50] sm:$0xff]
  %v1053 = vld [vmem:[%s2 + $0x58] sm:$0xff]
  %v1054 = vld [vmem:[%s2 + $0x60] sm:$0xff]
  %v1055 = vld [vmem:[%s2 + $0x68] sm:$0xff]
  %v1056 = vld [vmem:[%s2 + $0x70] sm:$0xff]
  %v1057 = vld [vmem:[%s2 + $0x78] sm:$0xff]
  %v1058 = vld [vmem:[%s2 + $0x80] sm:$0xff]
  %v1059 = vld [vmem:[%s2 + $0x88] sm:$0xff]
  %v1060 = vld [vmem:[%s2 + $0x90] sm:$0xff]
  %v1061 = vld [vmem:[%s2 + $0x98] sm:$0xff]
  %v1062 = vld [vmem:[%s2 + $0xa0] sm:$0xff]
  %v1063 = vld [vmem:[%s2 + $0xa8] sm:$0xff]
  %v1064 = vld [vmem:[%s2 + $0xb0] sm:$0xff]
  %v1065 = vld [vmem:[%s2 + $0xb8] sm:$0xff]
  %v1066 = vld [vmem:[%s2 + $0xc0] sm:$0xff]
  %v1067 = vld [vmem:[%s2 + $0xc8] sm:$0xff]
  %v1068 = vld [vmem:[%s2 + $0xd0] sm:$0xff]
  %v1069 = vld [vmem:[%s2 + $0xd8] sm:$0xff]
  %v1070 = vld [vmem:[%s2 + $0xe0] sm:$0xff]
  %v1071 = vld [vmem:[%s2 + $0xe8] sm:$0xff]
  %v1072 = vld [vmem:[%s2 + $0xf0] sm:$0xff]
  %v1073 = vld [vmem:[%s2 + $0xf8] sm:$0xff]
  %v1074 = vld [vmem:[%s2 + $0x100] sm:$0xff]
  %v1075 = vld [vmem:[%s2 + $0x108] sm:$0xff]
  %v1076 = vld [vmem:[%s2 + $0x110] sm:$0xff]
  %v1077 = vld [vmem:[%s2 + $0x118] sm:$0xff]
  %v1078 = vld [vmem:[%s2 + $0x120] sm:$0xff]
  %v1079 = vld [vmem:[%s2 + $0x128] sm:$0xff]
  %v1080 = vld [vmem:[%s2 + $0x130] sm:$0xff]
  %v1081 = vld [vmem:[%s2 + $0x138] sm:$0xff]
  %v1082 = vld [vmem:[%s2 + $0x140] sm:$0xff]
  %v1083 = vld [vmem:[%s2 + $0x148] sm:$0xff]
  %v1084 = vld [vmem:[%s2 + $0x150] sm:$0xff]
  %v1085 = vld [vmem:[%s2 + $0x158] sm:$0xff]
  %v1086 = vld [vmem:[%s2 + $0x160] sm:$0xff]
  %v1087 = vld [vmem:[%s2 + $0x168] sm:$0xff]
  %v1088 = vld [vmem:[%s2 + $0x170] sm:$0xff]
  %v1089 = vld [vmem:[%s2 + $0x178] sm:$0xff]
  %v1090 = vld [vmem:[%s2 + $0x180] sm:$0xff]
  %v1091 = vld [vmem:[%s2 + $0x188] sm:$0xff]
  %v1092 = vld [vmem:[%s2 + $0x190] sm:$0xff]
  %v1093 = vld [vmem:[%s2 + $0x198] sm:$0xff]
  %v1094 = vld [vmem:[%s2 + $0x1a0] sm:$0xff]
  %v1095 = vld [vmem:[%s2 + $0x1a8] sm:$0xff]
  %v1096 = vld [vmem:[%s2 + $0x1b0] sm:$0xff]
  %v1097 = vld [vmem:[%s2 + $0x1b8] sm:$0xff]
  %v1098 = vld [vmem:[%s2 + $0x1c0] sm:$0xff]
  %v1099 = vld [vmem:[%s2 + $0x1c8] sm:$0xff]
  %v1100 = vld [vmem:[%s2 + $0x1d0] sm:$0xff]
  %v1101 = vld [vmem:[%s2 + $0x1d8] sm:$0xff]
  %v1102 = vld [vmem:[%s2 + $0x1e0] sm:$0xff]
  %v1103 = vld [vmem:[%s2 + $0x1e8] sm:$0xff]
  %v1104 = vld [vmem:[%s2 + $0x1f0] sm:$0xff]
  %v1105 = vld [vmem:[%s2 + $0x1f8] sm:$0xff]
  %v1106 = vld [vmem:[%s2 + $0x200] sm:$0xff]
  %v1107 = vld [vmem:[%s2 + $0x208] sm:$0xff]
  %v1108 = vld [vmem:[%s2 + $0x210] sm:$0xff]
  %v1109 = vld [vmem:[%s2 + $0x218] sm:$0xff]
  %v1110 = vld [vmem:[%s2 + $0x220] sm:$0xff]
  %v1111 = vld [vmem:[%s2 + $0x228] sm:$0xff]
  %v1112 = vld [vmem:[%s2 + $0x230] sm:$0xff]
  %v1113 = vld [vmem:[%s2 + $0x238] sm:$0xff]
  %v1114 = vld [vmem:[%s2 + $0x240] sm:$0xff]
  %v1115 = vld [vmem:[%s2 + $0x248] sm:$0xff]
  %v1116 = vld [vmem:[%s2 + $0x250] sm:$0xff]
  %v1117 = vld [vmem:[%s2 + $0x258] sm:$0xff]
  %v1118 = vld [vmem:[%s2 + $0x260] sm:$0xff]
  %v1119 = vld [vmem:[%s2 + $0x268] sm:$0xff]
  %v1120 = vld [vmem:[%s2 + $0x270] sm:$0xff]
  %v1121 = vld [vmem:[%s2 + $0x278] sm:$0xff]
  %v1122 = vld [vmem:[%s2 + $0x280] sm:$0xff]
  %v1123 = vld [vmem:[%s2 + $0x288] sm:$0xff]
  %v1124 = vld [vmem:[%s2 + $0x290] sm:$0xff]
  %v1125 = vld [vmem:[%s2 + $0x298] sm:$0xff]
  %v1126 = vld [vmem:[%s2 + $0x2a0] sm:$0xff]
  %v1127 = vld [vmem:[%s2 + $0x2a8] sm:$0xff]
  %v1128 = vld [vmem:[%s2 + $0x2b0] sm:$0xff]
  %v1129 = vld [vmem:[%s2 + $0x2b8] sm:$0xff]
  %v1130 = vld [vmem:[%s2 + $0x2c0] sm:$0xff]
  %v1131 = vld [vmem:[%s2 + $0x2c8] sm:$0xff]
  %v1132 = vld [vmem:[%s2 + $0x2d0] sm:$0xff]
  %v1133 = vld [vmem:[%s2 + $0x2d8] sm:$0xff]
  %v1134 = vld [vmem:[%s2 + $0x2e0] sm:$0xff]
  %v1135 = vld [vmem:[%s2 + $0x2e8] sm:$0xff]
  %v1136 = vld [vmem:[%s2 + $0x2f0] sm:$0xff]
  %v1137 = vld [vmem:[%s2 + $0x2f8] sm:$0xff]
  %v1138 = vld [vmem:[%s2 + $0x300] sm:$0xff]
  %v1139 = vld [vmem:[%s2 + $0x308] sm:$0xff]
  %v1140 = vld [vmem:[%s2 + $0x310] sm:$0xff]
  %v1141 = vld [vmem:[%s2 + $0x318] sm:$0xff]
  %v1142 = vld [vmem:[%s2 + $0x320] sm:$0xff]
  %v1143 = vld [vmem:[%s2 + $0x328] sm:$0xff]
  %v1144 = vld [vmem:[%s2 + $0x330] sm:$0xff]
  %v1145 = vld [vmem:[%s2 + $0x338] sm:$0xff]
  %v1146 = vld [vmem:[%s2 + $0x340] sm:$0xff]
  %v1147 = vld [vmem:[%s2 + $0x348] sm:$0xff]
  %v1148 = vld [vmem:[%s2 + $0x350] sm:$0xff]
  %v1149 = vld [vmem:[%s2 + $0x358] sm:$0xff]
  %v1150 = vld [vmem:[%s2 + $0x360] sm:$0xff]
  %v1151 = vld [vmem:[%s2 + $0x368] sm:$0xff]
  %v1152 = vld [vmem:[%s2 + $0x370] sm:$0xff]
  %v1153 = vld [vmem:[%s2 + $0x378] sm:$0xff]
  %v1154 = vld [vmem:[%s2 + $0x380] sm:$0xff]
  %v1155 = vld [vmem:[%s2 + $0x388] sm:$0xff]
  %v1156 = vld [vmem:[%s2 + $0x390] sm:$0xff]
  %v1157 = vld [vmem:[%s2 + $0x398] sm:$0xff]
  %v1158 = vld [vmem:[%s2 + $0x3a0] sm:$0xff]
  %v1159 = vld [vmem:[%s2 + $0x3a8] sm:$0xff]
  %v1160 = vld [vmem:[%s2 + $0x3b0] sm:$0xff]
  %v1161 = vld [vmem:[%s2 + $0x3b8] sm:$0xff]
  %v1162 = vld [vmem:[%s2 + $0x3c0] sm:$0xff]
  %v1163 = vld [vmem:[%s2 + $0x3c8] sm:$0xff]
  %v1164 = vld [vmem:[%s2 + $0x3d0] sm:$0xff]
  %v1165 = vld [vmem:[%s2 + $0x3d8] sm:$0xff]
  %v1166 = vld [vmem:[%s2 + $0x3e0] sm:$0xff]
  %v1167 = vld [vmem:[%s2 + $0x3e8] sm:$0xff]
  %v1168 = vld [vmem:[%s2 + $0x3f0] sm:$0xff]
  %v1169 = vld [vmem:[%s2 + $0x3f8] sm:$0xff]
  %1170 = vmatprep.subr.mxu0 0.0
  %1171 = vmatpush1.msra.mxu0 %v1042
  %1172 = vmatprep.subr.mxu0 0.0
  %1173 = vmatpush1.msra.mxu0 %v1043
  %1174 = vmatprep.subr.mxu0 0.0
  %1175 = vmatpush1.msra.mxu0 %v1044
  %1176 = vmatprep.subr.mxu0 0.0
  %1177 = vmatpush1.msra.mxu0 %v1045
  %1178 = vmatprep.subr.mxu0 0.0
  %1179 = vmatpush1.msra.mxu0 %v1046
  %1180 = vmatprep.subr.mxu0 0.0
  %1181 = vmatpush1.msra.mxu0 %v1047
  %1182 = vmatprep.subr.mxu0 0.0
  %1183 = vmatpush1.msra.mxu0 %v1048
  %1184 = vmatprep.subr.mxu0 0.0
  %1185 = vmatpush1.msra.mxu0 %v1049
  %1186 = vmatprep.subr.mxu0 0.0
  %1187 = vmatpush1.msra.mxu0 %v1050
  %1188 = vmatprep.subr.mxu0 0.0
  %1189 = vmatpush1.msra.mxu0 %v1051
  %1190 = vmatprep.subr.mxu0 0.0
  %1191 = vmatpush1.msra.mxu0 %v1052
  %1192 = vmatprep.subr.mxu0 0.0
  %1193 = vmatpush1.msra.mxu0 %v1053
  %1194 = vmatprep.subr.mxu0 0.0
  %1195 = vmatpush1.msra.mxu0 %v1054
  %1196 = vmatprep.subr.mxu0 0.0
  %1197 = vmatpush1.msra.mxu0 %v1055
  %1198 = vmatprep.subr.mxu0 0.0
  %1199 = vmatpush1.msra.mxu0 %v1056
  %1200 = vmatprep.subr.mxu0 0.0
  %1201 = vmatpush1.msra.mxu0 %v1057
  %1202 = vmatprep.subr.mxu0 0.0
  %1203 = vmatpush1.msra.mxu0 0.0
  %1204 = vmatprep.subr.mxu0 0.0
  %1205 = vmatpush1.msra.mxu0 0.0
  %1206 = vmatprep.subr.mxu0 0.0
  %1207 = vmatpush1.msra.mxu0 0.0
  %1208 = vmatprep.subr.mxu0 0.0
  %1209 = vmatpush1.msra.mxu0 0.0
  %1210 = vmatprep.subr.mxu0 0.0
  %1211 = vmatpush1.msra.mxu0 0.0
  %1212 = vmatprep.subr.mxu0 0.0
  %1213 = vmatpush1.msra.mxu0 0.0
  %1214 = vmatprep.subr.mxu0 0.0
  %1215 = vmatpush1.msra.mxu0 0.0
  %1216 = vmatprep.subr.mxu0 0.0
  %1217 = vmatpush1.msra.mxu0 0.0
  %1218 = vmatprep.subr.mxu0 0.0
  %1219 = vmatpush1.msra.mxu0 0.0
  %1220 = vmatprep.subr.mxu0 0.0
  %1221 = vmatpush1.msra.mxu0 0.0
  %1222 = vmatprep.subr.mxu0 0.0
  %1223 = vmatpush1.msra.mxu0 0.0
  %1224 = vmatprep.subr.mxu0 0.0
  %1225 = vmatpush1.msra.mxu0 0.0
  %1226 = vmatprep.subr.mxu0 0.0
  %1227 = vmatpush1.msra.mxu0 0.0
  %1228 = vmatprep.subr.mxu0 0.0
  %1229 = vmatpush1.msra.mxu0 0.0
  %1230 = vmatprep.subr.mxu0 0.0
  %1231 = vmatpush1.msra.mxu0 0.0
  %1232 = vmatprep.subr.mxu0 0.0
  %1233 = vmatpush1.msra.mxu0 0.0
  %1234 = vmatprep.mubr.f32.mxu0 0.0
  %1235 = vmatmul.mubr.f32.gmra.mrb[0].mxu0 %v1008
  %v1236 = vpop.f32.mrb[0].mxu0
  %v1237 = vadd.f32 %v62, %v1236
  %v1238 = vpop.f32.mrb[0].mxu0
  %1239 = vdwg.mxu0
  %1240 = vmatprep.subr.mxu0 0.0
  %1241 = vmatpush1.msra.mxu0 %v1058
  %1242 = vmatprep.subr.mxu0 0.0
  %1243 = vmatpush1.msra.mxu0 %v1059
  %1244 = vmatprep.subr.mxu0 0.0
  %1245 = vmatpush1.msra.mxu0 %v1060
  %1246 = vmatprep.subr.mxu0 0.0
  %1247 = vmatpush1.msra.mxu0 %v1061
  %1248 = vmatprep.subr.mxu0 0.0
  %1249 = vmatpush1.msra.mxu0 %v1062
  %1250 = vmatprep.subr.mxu0 0.0
  %1251 = vmatpush1.msra.mxu0 %v1063
  %1252 = vmatprep.subr.mxu0 0.0
  %1253 = vmatpush1.msra.mxu0 %v1064
  %1254 = vmatprep.subr.mxu0 0.0
  %1255 = vmatpush1.msra.mxu0 %v1065
  %1256 = vmatprep.subr.mxu0 0.0
  %1257 = vmatpush1.msra.mxu0 %v1066
  %1258 = vmatprep.subr.mxu0 0.0
  %1259 = vmatpush1.msra.mxu0 %v1067
  %1260 = vmatprep.subr.mxu0 0.0
  %1261 = vmatpush1.msra.mxu0 %v1068
  %1262 = vmatprep.subr.mxu0 0.0
  %1263 = vmatpush1.msra.mxu0 %v1069
  %1264 = vmatprep.subr.mxu0 0.0
  %1265 = vmatpush1.msra.mxu0 %v1070
  %1266 = vmatprep.subr.mxu0 0.0
  %1267 = vmatpush1.msra.mxu0 %v1071
  %1268 = vmatprep.subr.mxu0 0.0
  %1269 = vmatpush1.msra.mxu0 %v1072
  %1270 = vmatprep.subr.mxu0 0.0
  %1271 = vmatpush1.msra.mxu0 %v1073
  %1272 = vmatprep.subr.mxu0 0.0
  %1273 = vmatpush1.msra.mxu0 0.0
  %1274 = vmatprep.subr.mxu0 0.0
  %1275 = vmatpush1.msra.mxu0 0.0
  %1276 = vmatprep.subr.mxu0 0.0
  %1277 = vmatpush1.msra.mxu0 0.0
  %1278 = vmatprep.subr.mxu0 0.0
  %1279 = vmatpush1.msra.mxu0 0.0
  %1280 = vmatprep.subr.mxu0 0.0
  %1281 = vmatpush1.msra.mxu0 0.0
  %1282 = vmatprep.subr.mxu0 0.0
  %1283 = vmatpush1.msra.mxu0 0.0
  %1284 = vmatprep.subr.mxu0 0.0
  %1285 = vmatpush1.msra.mxu0 0.0
  %1286 = vmatprep.subr.mxu0 0.0
  %1287 = vmatpush1.msra.mxu0 0.0
  %1288 = vmatprep.subr.mxu0 0.0
  %1289 = vmatpush1.msra.mxu0 0.0
  %1290 = vmatprep.subr.mxu0 0.0
  %1291 = vmatpush1.msra.mxu0 0.0
  %1292 = vmatprep.subr.mxu0 0.0
  %1293 = vmatpush1.msra.mxu0 0.0
  %1294 = vmatprep.subr.mxu0 0.0
  %1295 = vmatpush1.msra.mxu0 0.0
  %1296 = vmatprep.subr.mxu0 0.0
  %1297 = vmatpush1.msra.mxu0 0.0
  %1298 = vmatprep.subr.mxu0 0.0
  %1299 = vmatpush1.msra.mxu0 0.0
  %1300 = vmatprep.subr.mxu0 0.0
  %1301 = vmatpush1.msra.mxu0 0.0
  %1302 = vmatprep.subr.mxu0 0.0
  %1303 = vmatpush1.msra.mxu0 0.0
  %1304 = vmatprep.mubr.f32.mxu0 0.0
  %1305 = vmatmul.mubr.f32.gmra.mrb[0].mxu0 %v1022
  %v1306 = vpop.f32.mrb[0].mxu0
  %v1307 = vadd.f32 %v63, %v1306
  %v1308 = vpop.f32.mrb[0].mxu0
  %1309 = vdwg.mxu0
  %1310 = vmatprep.subr.mxu0 0.0
  %1311 = vmatpush1.msra.mxu0 %v1074
  %1312 = vmatprep.subr.mxu0 0.0
  %1313 = vmatpush1.msra.mxu0 %v1075
  %1314 = vmatprep.subr.mxu0 0.0
  %1315 = vmatpush1.msra.mxu0 %v1076
  %1316 = vmatprep.subr.mxu0 0.0
  %1317 = vmatpush1.msra.mxu0 %v1077
  %1318 = vmatprep.subr.mxu0 0.0
  %1319 = vmatpush1.msra.mxu0 %v1078
  %1320 = vmatprep.subr.mxu0 0.0
  %1321 = vmatpush1.msra.mxu0 %v1079
  %1322 = vmatprep.subr.mxu0 0.0
  %1323 = vmatpush1.msra.mxu0 %v1080
  %1324 = vmatprep.subr.mxu0 0.0
  %1325 = vmatpush1.msra.mxu0 %v1081
  %1326 = vmatprep.subr.mxu0 0.0
  %1327 = vmatpush1.msra.mxu0 %v1082
  %1328 = vmatprep.subr.mxu0 0.0
  %1329 = vmatpush1.msra.mxu0 %v1083
  %1330 = vmatprep.subr.mxu0 0.0
  %1331 = vmatpush1.msra.mxu0 %v1084
  %1332 = vmatprep.subr.mxu0 0.0
  %1333 = vmatpush1.msra.mxu0 %v1085
  %1334 = vmatprep.subr.mxu0 0.0
  %1335 = vmatpush1.msra.mxu0 %v1086
  %1336 = vmatprep.subr.mxu0 0.0
  %1337 = vmatpush1.msra.mxu0 %v1087
  %1338 = vmatprep.subr.mxu0 0.0
  %1339 = vmatpush1.msra.mxu0 %v1088
  %1340 = vmatprep.subr.mxu0 0.0
  %1341 = vmatpush1.msra.mxu0 %v1089
  %1342 = vmatprep.subr.mxu0 0.0
  %1343 = vmatpush1.msra.mxu0 0.0
  %1344 = vmatprep.subr.mxu0 0.0
  %1345 = vmatpush1.msra.mxu0 0.0
  %1346 = vmatprep.subr.mxu0 0.0
  %1347 = vmatpush1.msra.mxu0 0.0
  %1348 = vmatprep.subr.mxu0 0.0
  %1349 = vmatpush1.msra.mxu0 0.0
  %1350 = vmatprep.subr.mxu0 0.0
  %1351 = vmatpush1.msra.mxu0 0.0
  %1352 = vmatprep.subr.mxu0 0.0
  %1353 = vmatpush1.msra.mxu0 0.0
  %1354 = vmatprep.subr.mxu0 0.0
  %1355 = vmatpush1.msra.mxu0 0.0
  %1356 = vmatprep.subr.mxu0 0.0
  %1357 = vmatpush1.msra.mxu0 0.0
  %1358 = vmatprep.subr.mxu0 0.0
  %1359 = vmatpush1.msra.mxu0 0.0
  %1360 = vmatprep.subr.mxu0 0.0
  %1361 = vmatpush1.msra.mxu0 0.0
  %1362 = vmatprep.subr.mxu0 0.0
  %1363 = vmatpush1.msra.mxu0 0.0
  %1364 = vmatprep.subr.mxu0 0.0
  %1365 = vmatpush1.msra.mxu0 0.0
  %1366 = vmatprep.subr.mxu0 0.0
  %1367 = vmatpush1.msra.mxu0 0.0
  %1368 = vmatprep.subr.mxu0 0.0
  %1369 = vmatpush1.msra.mxu0 0.0
  %1370 = vmatprep.subr.mxu0 0.0
  %1371 = vmatpush1.msra.mxu0 0.0
  %1372 = vmatprep.subr.mxu0 0.0
  %1373 = vmatpush1.msra.mxu0 0.0
  %1374 = vmatprep.mubr.f32.mxu0 0.0
  %1375 = vmatmul.mubr.f32.gmra.mrb[0].mxu0 %v1030
  %v1376 = vpop.f32.mrb[0].mxu0
  %v1377 = vadd.f32 %v64, %v1376
  %v1378 = vpop.f32.mrb[0].mxu0
  %1379 = vdwg.mxu0
  %1380 = vmatprep.subr.mxu0 0.0
  %1381 = vmatpush1.msra.mxu0 %v1090
  %1382 = vmatprep.subr.mxu0 0.0
  %1383 = vmatpush1.msra.mxu0 %v1091
  %1384 = vmatprep.subr.mxu0 0.0
  %1385 = vmatpush1.msra.mxu0 %v1092
  %1386 = vmatprep.subr.mxu0 0.0
  %1387 = vmatpush1.msra.mxu0 %v1093
  %1388 = vmatprep.subr.mxu0 0.0
  %1389 = vmatpush1.msra.mxu0 %v1094
  %1390 = vmatprep.subr.mxu0 0.0
  %1391 = vmatpush1.msra.mxu0 %v1095
  %1392 = vmatprep.subr.mxu0 0.0
  %1393 = vmatpush1.msra.mxu0 %v1096
  %1394 = vmatprep.subr.mxu0 0.0
  %1395 = vmatpush1.msra.mxu0 %v1097
  %1396 = vmatprep.subr.mxu0 0.0
  %1397 = vmatpush1.msra.mxu0 %v1098
  %1398 = vmatprep.subr.mxu0 0.0
  %1399 = vmatpush1.msra.mxu0 %v1099
  %1400 = vmatprep.subr.mxu0 0.0
  %1401 = vmatpush1.msra.mxu0 %v1100
  %1402 = vmatprep.subr.mxu0 0.0
  %1403 = vmatpush1.msra.mxu0 %v1101
  %1404 = vmatprep.subr.mxu0 0.0
  %1405 = vmatpush1.msra.mxu0 %v1102
  %1406 = vmatprep.subr.mxu0 0.0
  %1407 = vmatpush1.msra.mxu0 %v1103
  %1408 = vmatprep.subr.mxu0 0.0
  %1409 = vmatpush1.msra.mxu0 %v1104
  %1410 = vmatprep.subr.mxu0 0.0
  %1411 = vmatpush1.msra.mxu0 %v1105
  %1412 = vmatprep.subr.mxu0 0.0
  %1413 = vmatpush1.msra.mxu0 0.0
  %1414 = vmatprep.subr.mxu0 0.0
  %1415 = vmatpush1.msra.mxu0 0.0
  %1416 = vmatprep.subr.mxu0 0.0
  %1417 = vmatpush1.msra.mxu0 0.0
  %1418 = vmatprep.subr.mxu0 0.0
  %1419 = vmatpush1.msra.mxu0 0.0
  %1420 = vmatprep.subr.mxu0 0.0
  %1421 = vmatpush1.msra.mxu0 0.0
  %1422 = vmatprep.subr.mxu0 0.0
  %1423 = vmatpush1.msra.mxu0 0.0
  %1424 = vmatprep.subr.mxu0 0.0
  %1425 = vmatpush1.msra.mxu0 0.0
  %1426 = vmatprep.subr.mxu0 0.0
  %1427 = vmatpush1.msra.mxu0 0.0
  %1428 = vmatprep.subr.mxu0 0.0
  %1429 = vmatpush1.msra.mxu0 0.0
  %1430 = vmatprep.subr.mxu0 0.0
  %1431 = vmatpush1.msra.mxu0 0.0
  %1432 = vmatprep.subr.mxu0 0.0
  %1433 = vmatpush1.msra.mxu0 0.0
  %1434 = vmatprep.subr.mxu0 0.0
  %1435 = vmatpush1.msra.mxu0 0.0
  %1436 = vmatprep.subr.mxu0 0.0
  %1437 = vmatpush1.msra.mxu0 0.0
  %1438 = vmatprep.subr.mxu0 0.0
  %1439 = vmatpush1.msra.mxu0 0.0
  %1440 = vmatprep.subr.mxu0 0.0
  %1441 = vmatpush1.msra.mxu0 0.0
  %1442 = vmatprep.subr.mxu0 0.0
  %1443 = vmatpush1.msra.mxu0 0.0
  %1444 = vmatprep.mubr.f32.mxu0 0.0
  %1445 = vmatmul.mubr.f32.gmra.mrb[0].mxu0 %v1032
  %v1446 = vpop.f32.mrb[0].mxu0
  %v1447 = vadd.f32 %v65, %v1446
  %v1448 = vpop.f32.mrb[0].mxu0
  %1449 = vdwg.mxu0
  %1450 = vmatprep.subr.mxu0 0.0
  %1451 = vmatpush1.msra.mxu0 %v1106
  %1452 = vmatprep.subr.mxu0 0.0
  %1453 = vmatpush1.msra.mxu0 %v1107
  %1454 = vmatprep.subr.mxu0 0.0
  %1455 = vmatpush1.msra.mxu0 %v1108
  %1456 = vmatprep.subr.mxu0 0.0
  %1457 = vmatpush1.msra.mxu0 %v1109
  %1458 = vmatprep.subr.mxu0 0.0
  %1459 = vmatpush1.msra.mxu0 %v1110
  %1460 = vmatprep.subr.mxu0 0.0
  %1461 = vmatpush1.msra.mxu0 %v1111
  %1462 = vmatprep.subr.mxu0 0.0
  %1463 = vmatpush1.msra.mxu0 %v1112
  %1464 = vmatprep.subr.mxu0 0.0
  %1465 = vmatpush1.msra.mxu0 %v1113
  %1466 = vmatprep.subr.mxu0 0.0
  %1467 = vmatpush1.msra.mxu0 %v1114
  %1468 = vmatprep.subr.mxu0 0.0
  %1469 = vmatpush1.msra.mxu0 %v1115
  %1470 = vmatprep.subr.mxu0 0.0
  %1471 = vmatpush1.msra.mxu0 %v1116
  %1472 = vmatprep.subr.mxu0 0.0
  %1473 = vmatpush1.msra.mxu0 %v1117
  %1474 = vmatprep.subr.mxu0 0.0
  %1475 = vmatpush1.msra.mxu0 %v1118
  %1476 = vmatprep.subr.mxu0 0.0
  %1477 = vmatpush1.msra.mxu0 %v1119
  %1478 = vmatprep.subr.mxu0 0.0
  %1479 = vmatpush1.msra.mxu0 %v1120
  %1480 = vmatprep.subr.mxu0 0.0
  %1481 = vmatpush1.msra.mxu0 %v1121
  %1482 = vmatprep.subr.mxu0 0.0
  %1483 = vmatpush1.msra.mxu0 0.0
  %1484 = vmatprep.subr.mxu0 0.0
  %1485 = vmatpush1.msra.mxu0 0.0
  %1486 = vmatprep.subr.mxu0 0.0
  %1487 = vmatpush1.msra.mxu0 0.0
  %1488 = vmatprep.subr.mxu0 0.0
  %1489 = vmatpush1.msra.mxu0 0.0
  %1490 = vmatprep.subr.mxu0 0.0
  %1491 = vmatpush1.msra.mxu0 0.0
  %1492 = vmatprep.subr.mxu0 0.0
  %1493 = vmatpush1.msra.mxu0 0.0
  %1494 = vmatprep.subr.mxu0 0.0
  %1495 = vmatpush1.msra.mxu0 0.0
  %1496 = vmatprep.subr.mxu0 0.0
  %1497 = vmatpush1.msra.mxu0 0.0
  %1498 = vmatprep.subr.mxu0 0.0
  %1499 = vmatpush1.msra.mxu0 0.0
  %1500 = vmatprep.subr.mxu0 0.0
  %1501 = vmatpush1.msra.mxu0 0.0
  %1502 = vmatprep.subr.mxu0 0.0
  %1503 = vmatpush1.msra.mxu0 0.0
  %1504 = vmatprep.subr.mxu0 0.0
  %1505 = vmatpush1.msra.mxu0 0.0
  %1506 = vmatprep.subr.mxu0 0.0
  %1507 = vmatpush1.msra.mxu0 0.0
  %1508 = vmatprep.subr.mxu0 0.0
  %1509 = vmatpush1.msra.mxu0 0.0
  %1510 = vmatprep.subr.mxu0 0.0
  %1511 = vmatpush1.msra.mxu0 0.0
  %1512 = vmatprep.subr.mxu0 0.0
  %1513 = vmatpush1.msra.mxu0 0.0
  %1514 = vmatprep.mubr.f32.mxu0 0.0
  %1515 = vmatmul.mubr.f32.gmra.mrb[0].mxu0 %v1015
  %v1516 = vpop.f32.mrb[0].mxu0
  %v1517 = vadd.f32 %v66, %v1516
  %v1518 = vpop.f32.mrb[0].mxu0
  %1519 = vdwg.mxu0
  %1520 = vmatprep.subr.mxu0 0.0
  %1521 = vmatpush1.msra.mxu0 %v1122
  %1522 = vmatprep.subr.mxu0 0.0
  %1523 = vmatpush1.msra.mxu0 %v1123
  %1524 = vmatprep.subr.mxu0 0.0
  %1525 = vmatpush1.msra.mxu0 %v1124
  %1526 = vmatprep.subr.mxu0 0.0
  %1527 = vmatpush1.msra.mxu0 %v1125
  %1528 = vmatprep.subr.mxu0 0.0
  %1529 = vmatpush1.msra.mxu0 %v1126
  %1530 = vmatprep.subr.mxu0 0.0
  %1531 = vmatpush1.msra.mxu0 %v1127
  %1532 = vmatprep.subr.mxu0 0.0
  %1533 = vmatpush1.msra.mxu0 %v1128
  %1534 = vmatprep.subr.mxu0 0.0
  %1535 = vmatpush1.msra.mxu0 %v1129
  %1536 = vmatprep.subr.mxu0 0.0
  %1537 = vmatpush1.msra.mxu0 %v1130
  %1538 = vmatprep.subr.mxu0 0.0
  %1539 = vmatpush1.msra.mxu0 %v1131
  %1540 = vmatprep.subr.mxu0 0.0
  %1541 = vmatpush1.msra.mxu0 %v1132
  %1542 = vmatprep.subr.mxu0 0.0
  %1543 = vmatpush1.msra.mxu0 %v1133
  %1544 = vmatprep.subr.mxu0 0.0
  %1545 = vmatpush1.msra.mxu0 %v1134
  %1546 = vmatprep.subr.mxu0 0.0
  %1547 = vmatpush1.msra.mxu0 %v1135
  %1548 = vmatprep.subr.mxu0 0.0
  %1549 = vmatpush1.msra.mxu0 %v1136
  %1550 = vmatprep.subr.mxu0 0.0
  %1551 = vmatpush1.msra.mxu0 %v1137
  %1552 = vmatprep.subr.mxu0 0.0
  %1553 = vmatpush1.msra.mxu0 0.0
  %1554 = vmatprep.subr.mxu0 0.0
  %1555 = vmatpush1.msra.mxu0 0.0
  %1556 = vmatprep.subr.mxu0 0.0
  %1557 = vmatpush1.msra.mxu0 0.0
  %1558 = vmatprep.subr.mxu0 0.0
  %1559 = vmatpush1.msra.mxu0 0.0
  %1560 = vmatprep.subr.mxu0 0.0
  %1561 = vmatpush1.msra.mxu0 0.0
  %1562 = vmatprep.subr.mxu0 0.0
  %1563 = vmatpush1.msra.mxu0 0.0
  %1564 = vmatprep.subr.mxu0 0.0
  %1565 = vmatpush1.msra.mxu0 0.0
  %1566 = vmatprep.subr.mxu0 0.0
  %1567 = vmatpush1.msra.mxu0 0.0
  %1568 = vmatprep.subr.mxu0 0.0
  %1569 = vmatpush1.msra.mxu0 0.0
  %1570 = vmatprep.subr.mxu0 0.0
  %1571 = vmatpush1.msra.mxu0 0.0
  %1572 = vmatprep.subr.mxu0 0.0
  %1573 = vmatpush1.msra.mxu0 0.0
  %1574 = vmatprep.subr.mxu0 0.0
  %1575 = vmatpush1.msra.mxu0 0.0
  %1576 = vmatprep.subr.mxu0 0.0
  %1577 = vmatpush1.msra.mxu0 0.0
  %1578 = vmatprep.subr.mxu0 0.0
  %1579 = vmatpush1.msra.mxu0 0.0
  %1580 = vmatprep.subr.mxu0 0.0
  %1581 = vmatpush1.msra.mxu0 0.0
  %1582 = vmatprep.subr.mxu0 0.0
  %1583 = vmatpush1.msra.mxu0 0.0
  %1584 = vmatprep.mubr.f32.mxu0 0.0
  %1585 = vmatmul.mubr.f32.gmra.mrb[0].mxu0 %v1029
  %v1586 = vpop.f32.mrb[0].mxu0
  %v1587 = vadd.f32 %v67, %v1586
  %v1588 = vpop.f32.mrb[0].mxu0
  %1589 = vdwg.mxu0
  %1590 = vmatprep.subr.mxu0 0.0
  %1591 = vmatpush1.msra.mxu0 %v1138
  %1592 = vmatprep.subr.mxu0 0.0
  %1593 = vmatpush1.msra.mxu0 %v1139
  %1594 = vmatprep.subr.mxu0 0.0
  %1595 = vmatpush1.msra.mxu0 %v1140
  %1596 = vmatprep.subr.mxu0 0.0
  %1597 = vmatpush1.msra.mxu0 %v1141
  %1598 = vmatprep.subr.mxu0 0.0
  %1599 = vmatpush1.msra.mxu0 %v1142
  %1600 = vmatprep.subr.mxu0 0.0
  %1601 = vmatpush1.msra.mxu0 %v1143
  %1602 = vmatprep.subr.mxu0 0.0
  %1603 = vmatpush1.msra.mxu0 %v1144
  %1604 = vmatprep.subr.mxu0 0.0
  %1605 = vmatpush1.msra.mxu0 %v1145
  %1606 = vmatprep.subr.mxu0 0.0
  %1607 = vmatpush1.msra.mxu0 %v1146
  %1608 = vmatprep.subr.mxu0 0.0
  %1609 = vmatpush1.msra.mxu0 %v1147
  %1610 = vmatprep.subr.mxu0 0.0
  %1611 = vmatpush1.msra.mxu0 %v1148
  %1612 = vmatprep.subr.mxu0 0.0
  %1613 = vmatpush1.msra.mxu0 %v1149
  %1614 = vmatprep.subr.mxu0 0.0
  %1615 = vmatpush1.msra.mxu0 %v1150
  %1616 = vmatprep.subr.mxu0 0.0
  %1617 = vmatpush1.msra.mxu0 %v1151
  %1618 = vmatprep.subr.mxu0 0.0
  %1619 = vmatpush1.msra.mxu0 %v1152
  %1620 = vmatprep.subr.mxu0 0.0
  %1621 = vmatpush1.msra.mxu0 %v1153
  %1622 = vmatprep.subr.mxu0 0.0
  %1623 = vmatpush1.msra.mxu0 0.0
  %1624 = vmatprep.subr.mxu0 0.0
  %1625 = vmatpush1.msra.mxu0 0.0
  %1626 = vmatprep.subr.mxu0 0.0
  %1627 = vmatpush1.msra.mxu0 0.0
  %1628 = vmatprep.subr.mxu0 0.0
  %1629 = vmatpush1.msra.mxu0 0.0
  %1630 = vmatprep.subr.mxu0 0.0
  %1631 = vmatpush1.msra.mxu0 0.0
  %1632 = vmatprep.subr.mxu0 0.0
  %1633 = vmatpush1.msra.mxu0 0.0
  %1634 = vmatprep.subr.mxu0 0.0
  %1635 = vmatpush1.msra.mxu0 0.0
  %1636 = vmatprep.subr.mxu0 0.0
  %1637 = vmatpush1.msra.mxu0 0.0
  %1638 = vmatprep.subr.mxu0 0.0
  %1639 = vmatpush1.msra.mxu0 0.0
  %1640 = vmatprep.subr.mxu0 0.0
  %1641 = vmatpush1.msra.mxu0 0.0
  %1642 = vmatprep.subr.mxu0 0.0
  %1643 = vmatpush1.msra.mxu0 0.0
  %1644 = vmatprep.subr.mxu0 0.0
  %1645 = vmatpush1.msra.mxu0 0.0
  %1646 = vmatprep.subr.mxu0 0.0
  %1647 = vmatpush1.msra.mxu0 0.0
  %1648 = vmatprep.subr.mxu0 0.0
  %1649 = vmatpush1.msra.mxu0 0.0
  %1650 = vmatprep.subr.mxu0 0.0
  %1651 = vmatpush1.msra.mxu0 0.0
  %1652 = vmatprep.subr.mxu0 0.0
  %1653 = vmatpush1.msra.mxu0 0.0
  %1654 = vmatprep.mubr.f32.mxu0 0.0
  %1655 = vmatmul.mubr.f32.gmra.mrb[0].mxu0 %v1031
  %v1656 = vpop.f32.mrb[0].mxu0
  %v1657 = vadd.f32 %v68, %v1656
  %v1658 = vpop.f32.mrb[0].mxu0
  %1659 = vdwg.mxu0
  %1660 = vmatprep.subr.mxu0 0.0
  %1661 = vmatpush1.msra.mxu0 %v1154
  %1662 = vmatprep.subr.mxu0 0.0
  %1663 = vmatpush1.msra.mxu0 %v1155
  %1664 = vmatprep.subr.mxu0 0.0
  %1665 = vmatpush1.msra.mxu0 %v1156
  %1666 = vmatprep.subr.mxu0 0.0
  %1667 = vmatpush1.msra.mxu0 %v1157
  %1668 = vmatprep.subr.mxu0 0.0
  %1669 = vmatpush1.msra.mxu0 %v1158
  %1670 = vmatprep.subr.mxu0 0.0
  %1671 = vmatpush1.msra.mxu0 %v1159
  %1672 = vmatprep.subr.mxu0 0.0
  %1673 = vmatpush1.msra.mxu0 %v1160
  %1674 = vmatprep.subr.mxu0 0.0
  %1675 = vmatpush1.msra.mxu0 %v1161
  %1676 = vmatprep.subr.mxu0 0.0
  %1677 = vmatpush1.msra.mxu0 %v1162
  %1678 = vmatprep.subr.mxu0 0.0
  %1679 = vmatpush1.msra.mxu0 %v1163
  %1680 = vmatprep.subr.mxu0 0.0
  %1681 = vmatpush1.msra.mxu0 %v1164
  %1682 = vmatprep.subr.mxu0 0.0
  %1683 = vmatpush1.msra.mxu0 %v1165
  %1684 = vmatprep.subr.mxu0 0.0
  %1685 = vmatpush1.msra.mxu0 %v1166
  %1686 = vmatprep.subr.mxu0 0.0
  %1687 = vmatpush1.msra.mxu0 %v1167
  %1688 = vmatprep.subr.mxu0 0.0
  %1689 = vmatpush1.msra.mxu0 %v1168
  %1690 = vmatprep.subr.mxu0 0.0
  %1691 = vmatpush1.msra.mxu0 %v1169
  %1692 = vmatprep.subr.mxu0 0.0
  %1693 = vmatpush1.msra.mxu0 0.0
  %1694 = vmatprep.subr.mxu0 0.0
  %1695 = vmatpush1.msra.mxu0 0.0
  %1696 = vmatprep.subr.mxu0 0.0
  %1697 = vmatpush1.msra.mxu0 0.0
  %1698 = vmatprep.subr.mxu0 0.0
  %1699 = vmatpush1.msra.mxu0 0.0
  %1700 = vmatprep.subr.mxu0 0.0
  %1701 = vmatpush1.msra.mxu0 0.0
  %1702 = vmatprep.subr.mxu0 0.0
  %1703 = vmatpush1.msra.mxu0 0.0
  %1704 = vmatprep.subr.mxu0 0.0
  %1705 = vmatpush1.msra.mxu0 0.0
  %1706 = vmatprep.subr.mxu0 0.0
  %1707 = vmatpush1.msra.mxu0 0.0
  %1708 = vmatprep.subr.mxu0 0.0
  %1709 = vmatpush1.msra.mxu0 0.0
  %1710 = vmatprep.subr.mxu0 0.0
  %1711 = vmatpush1.msra.mxu0 0.0
  %1712 = vmatprep.subr.mxu0 0.0
  %1713 = vmatpush1.msra.mxu0 0.0
  %1714 = vmatprep.subr.mxu0 0.0
  %1715 = vmatpush1.msra.mxu0 0.0
  %1716 = vmatprep.subr.mxu0 0.0
  %1717 = vmatpush1.msra.mxu0 0.0
  %1718 = vmatprep.subr.mxu0 0.0
  %1719 = vmatpush1.msra.mxu0 0.0
  %1720 = vmatprep.subr.mxu0 0.0
  %1721 = vmatpush1.msra.mxu0 0.0
  %1722 = vmatprep.subr.mxu0 0.0
  %1723 = vmatpush1.msra.mxu0 0.0
  %1724 = vmatprep.mubr.f32.mxu0 0.0
  %1725 = vmatmul.mubr.f32.gmra.mrb[0].mxu0 %v1033
  %v1726 = vpop.f32.mrb[0].mxu0
  %v1727 = vadd.f32 %v69, %v1726
  %v1728 = vpop.f32.mrb[0].mxu0
  %1729 = vdwg.mxu0
  %vm1730 = vcmask 1040384
  %v1731 = vsel %vm1730, %v1237, -inf
  %1732 = vmax.xlane.f32.xlu0 %v1731
  %v1733 = vpop.xlane.xlu0 %1732
  %v1734 = vsel %vm1730, %v1307, -inf
  %1735 = vmax.xlane.f32.xlu0 %v1734
  %v1736 = vpop.xlane.xlu0 %1735
  %v1737 = vsel %vm1730, %v1377, -inf
  %1738 = vmax.xlane.f32.xlu0 %v1737
  %v1739 = vpop.xlane.xlu0 %1738
  %v1740 = vsel %vm1730, %v1447, -inf
  %1741 = vmax.xlane.f32.xlu0 %v1740
  %v1742 = vpop.xlane.xlu0 %1741
  %v1743 = vsel %vm1730, %v1517, -inf
  %1744 = vmax.xlane.f32.xlu0 %v1743
  %v1745 = vpop.xlane.xlu0 %1744
  %v1746 = vsel %vm1730, %v1587, -inf
  %1747 = vmax.xlane.f32.xlu0 %v1746
  %v1748 = vpop.xlane.xlu0 %1747
  %v1749 = vsel %vm1730, %v1657, -inf
  %1750 = vmax.xlane.f32.xlu0 %v1749
  %v1751 = vpop.xlane.xlu0 %1750
  %v1752 = vsel %vm1730, %v1727, -inf
  %1753 = vmax.xlane.f32.xlu0 %v1752
  %v1754 = vpop.xlane.xlu0 %1753
  %v1755 = vsub.f32 %v1237, %v1733
  %v1756 = vsub.f32 %v1307, %v1736
  %v1757 = vsub.f32 %v1377, %v1739
  %v1758 = vsub.f32 %v1447, %v1742
  %v1759 = vsub.f32 %v1517, %v1745
  %v1760 = vsub.f32 %v1587, %v1748
  %v1761 = vsub.f32 %v1657, %v1751
  %v1762 = vsub.f32 %v1727, %v1754
  %v1763 = vmul.f32 %v1755, 1.442695
  %v1764 = vpow.pop %v1763
  %v1765 = vmul.f32 %v1756, 1.442695
  %v1766 = vpow.pop %v1765
  %v1767 = vmul.f32 %v1757, 1.442695
  %v1768 = vpow.pop %v1767
  %v1769 = vmul.f32 %v1758, 1.442695
  %v1770 = vpow.pop %v1769
  %v1771 = vmul.f32 %v1759, 1.442695
  %v1772 = vpow.pop %v1771
  %v1773 = vmul.f32 %v1760, 1.442695
  %v1774 = vpow.pop %v1773
  %v1775 = vmul.f32 %v1761, 1.442695
  %v1776 = vpow.pop %v1775
  %v1777 = vmul.f32 %v1762, 1.442695
  %v1778 = vpow.pop %v1777
  %v1779 = vsel %vm1730, %v1764, 0.0
  %1780 = vadd.xlane.f32.xlu0 %v1779
  %v1781 = vpop.xlane.xlu0 %1780
  %v1782 = vsel %vm1730, %v1766, 0.0
  %1783 = vadd.xlane.f32.xlu0 %v1782
  %v1784 = vpop.xlane.xlu0 %1783
  %v1785 = vsel %vm1730, %v1768, 0.0
  %1786 = vadd.xlane.f32.xlu0 %v1785
  %v1787 = vpop.xlane.xlu0 %1786
  %v1788 = vsel %vm1730, %v1770, 0.0
  %1789 = vadd.xlane.f32.xlu0 %v1788
  %v1790 = vpop.xlane.xlu0 %1789
  %v1791 = vsel %vm1730, %v1772, 0.0
  %1792 = vadd.xlane.f32.xlu0 %v1791
  %v1793 = vpop.xlane.xlu0 %1792
  %v1794 = vsel %vm1730, %v1774, 0.0
  %1795 = vadd.xlane.f32.xlu0 %v1794
  %v1796 = vpop.xlane.xlu0 %1795
  %v1797 = vsel %vm1730, %v1776, 0.0
  %1798 = vadd.xlane.f32.xlu0 %v1797
  %v1799 = vpop.xlane.xlu0 %1798
  %v1800 = vsel %vm1730, %v1778, 0.0
  %1801 = vadd.xlane.f32.xlu0 %v1800
  %v1802 = vpop.xlane.xlu0 %1801
  %v1803 = vrcp.pop %v1781
  %v1804 = vrcp.pop %v1784
  %v1805 = vrcp.pop %v1787
  %v1806 = vrcp.pop %v1790
  %v1807 = vrcp.pop %v1793
  %v1808 = vrcp.pop %v1796
  %v1809 = vrcp.pop %v1799
  %v1810 = vrcp.pop %v1802
  %v1811 = vmul.f32 %v1764, %v1803
  %v1812 = vmul.f32 %v1766, %v1804
  %v1813 = vmul.f32 %v1768, %v1805
  %v1814 = vmul.f32 %v1770, %v1806
  %v1815 = vmul.f32 %v1772, %v1807
  %v1816 = vmul.f32 %v1774, %v1808
  %v1817 = vmul.f32 %v1776, %v1809
  %v1818 = vmul.f32 %v1778, %v1810
  %v1819 = vld [vmem:[%s3] sm:$0xff]
  %v1820 = vld [vmem:[%s3 + $0x8] sm:$0xff]
  %v1821 = vld [vmem:[%s3 + $0x10] sm:$0xff]
  %v1822 = vld [vmem:[%s3 + $0x18] sm:$0xff]
  %v1823 = vld [vmem:[%s3 + $0x20] sm:$0xff]
  %v1824 = vld [vmem:[%s3 + $0x28] sm:$0xff]
  %v1825 = vld [vmem:[%s3 + $0x30] sm:$0xff]
  %v1826 = vld [vmem:[%s3 + $0x38] sm:$0xff]
  %v1827 = vld [vmem:[%s3 + $0x40] sm:$0xff]
  %v1828 = vld [vmem:[%s3 + $0x48] sm:$0xff]
  %v1829 = vld [vmem:[%s3 + $0x50] sm:$0xff]
  %v1830 = vld [vmem:[%s3 + $0x58] sm:$0xff]
  %v1831 = vld [vmem:[%s3 + $0x60] sm:$0xff]
  %v1832 = vld [vmem:[%s3 + $0x68] sm:$0xff]
  %v1833 = vld [vmem:[%s3 + $0x70] sm:$0xff]
  %v1834 = vld [vmem:[%s3 + $0x78] sm:$0xff]
  %v1835 = vld [vmem:[%s3 + $0x80] sm:$0xff]
  %v1836 = vld [vmem:[%s3 + $0x88] sm:$0xff]
  %v1837 = vld [vmem:[%s3 + $0x90] sm:$0xff]
  %v1838 = vld [vmem:[%s3 + $0x98] sm:$0xff]
  %v1839 = vld [vmem:[%s3 + $0xa0] sm:$0xff]
  %v1840 = vld [vmem:[%s3 + $0xa8] sm:$0xff]
  %v1841 = vld [vmem:[%s3 + $0xb0] sm:$0xff]
  %v1842 = vld [vmem:[%s3 + $0xb8] sm:$0xff]
  %v1843 = vld [vmem:[%s3 + $0xc0] sm:$0xff]
  %v1844 = vld [vmem:[%s3 + $0xc8] sm:$0xff]
  %v1845 = vld [vmem:[%s3 + $0xd0] sm:$0xff]
  %v1846 = vld [vmem:[%s3 + $0xd8] sm:$0xff]
  %v1847 = vld [vmem:[%s3 + $0xe0] sm:$0xff]
  %v1848 = vld [vmem:[%s3 + $0xe8] sm:$0xff]
  %v1849 = vld [vmem:[%s3 + $0xf0] sm:$0xff]
  %v1850 = vld [vmem:[%s3 + $0xf8] sm:$0xff]
  %v1851 = vld [vmem:[%s3 + $0x100] sm:$0xff]
  %v1852 = vld [vmem:[%s3 + $0x108] sm:$0xff]
  %v1853 = vld [vmem:[%s3 + $0x110] sm:$0xff]
  %v1854 = vld [vmem:[%s3 + $0x118] sm:$0xff]
  %v1855 = vld [vmem:[%s3 + $0x120] sm:$0xff]
  %v1856 = vld [vmem:[%s3 + $0x128] sm:$0xff]
  %v1857 = vld [vmem:[%s3 + $0x130] sm:$0xff]
  %v1858 = vld [vmem:[%s3 + $0x138] sm:$0xff]
  %v1859 = vld [vmem:[%s3 + $0x140] sm:$0xff]
  %v1860 = vld [vmem:[%s3 + $0x148] sm:$0xff]
  %v1861 = vld [vmem:[%s3 + $0x150] sm:$0xff]
  %v1862 = vld [vmem:[%s3 + $0x158] sm:$0xff]
  %v1863 = vld [vmem:[%s3 + $0x160] sm:$0xff]
  %v1864 = vld [vmem:[%s3 + $0x168] sm:$0xff]
  %v1865 = vld [vmem:[%s3 + $0x170] sm:$0xff]
  %v1866 = vld [vmem:[%s3 + $0x178] sm:$0xff]
  %v1867 = vld [vmem:[%s3 + $0x180] sm:$0xff]
  %v1868 = vld [vmem:[%s3 + $0x188] sm:$0xff]
  %v1869 = vld [vmem:[%s3 + $0x190] sm:$0xff]
  %v1870 = vld [vmem:[%s3 + $0x198] sm:$0xff]
  %v1871 = vld [vmem:[%s3 + $0x1a0] sm:$0xff]
  %v1872 = vld [vmem:[%s3 + $0x1a8] sm:$0xff]
  %v1873 = vld [vmem:[%s3 + $0x1b0] sm:$0xff]
  %v1874 = vld [vmem:[%s3 + $0x1b8] sm:$0xff]
  %v1875 = vld [vmem:[%s3 + $0x1c0] sm:$0xff]
  %v1876 = vld [vmem:[%s3 + $0x1c8] sm:$0xff]
  %v1877 = vld [vmem:[%s3 + $0x1d0] sm:$0xff]
  %v1878 = vld [vmem:[%s3 + $0x1d8] sm:$0xff]
  %v1879 = vld [vmem:[%s3 + $0x1e0] sm:$0xff]
  %v1880 = vld [vmem:[%s3 + $0x1e8] sm:$0xff]
  %v1881 = vld [vmem:[%s3 + $0x1f0] sm:$0xff]
  %v1882 = vld [vmem:[%s3 + $0x1f8] sm:$0xff]
  %v1883 = vld [vmem:[%s3 + $0x200] sm:$0xff]
  %v1884 = vld [vmem:[%s3 + $0x208] sm:$0xff]
  %v1885 = vld [vmem:[%s3 + $0x210] sm:$0xff]
  %v1886 = vld [vmem:[%s3 + $0x218] sm:$0xff]
  %v1887 = vld [vmem:[%s3 + $0x220] sm:$0xff]
  %v1888 = vld [vmem:[%s3 + $0x228] sm:$0xff]
  %v1889 = vld [vmem:[%s3 + $0x230] sm:$0xff]
  %v1890 = vld [vmem:[%s3 + $0x238] sm:$0xff]
  %v1891 = vld [vmem:[%s3 + $0x240] sm:$0xff]
  %v1892 = vld [vmem:[%s3 + $0x248] sm:$0xff]
  %v1893 = vld [vmem:[%s3 + $0x250] sm:$0xff]
  %v1894 = vld [vmem:[%s3 + $0x258] sm:$0xff]
  %v1895 = vld [vmem:[%s3 + $0x260] sm:$0xff]
  %v1896 = vld [vmem:[%s3 + $0x268] sm:$0xff]
  %v1897 = vld [vmem:[%s3 + $0x270] sm:$0xff]
  %v1898 = vld [vmem:[%s3 + $0x278] sm:$0xff]
  %v1899 = vld [vmem:[%s3 + $0x280] sm:$0xff]
  %v1900 = vld [vmem:[%s3 + $0x288] sm:$0xff]
  %v1901 = vld [vmem:[%s3 + $0x290] sm:$0xff]
  %v1902 = vld [vmem:[%s3 + $0x298] sm:$0xff]
  %v1903 = vld [vmem:[%s3 + $0x2a0] sm:$0xff]
  %v1904 = vld [vmem:[%s3 + $0x2a8] sm:$0xff]
  %v1905 = vld [vmem:[%s3 + $0x2b0] sm:$0xff]
  %v1906 = vld [vmem:[%s3 + $0x2b8] sm:$0xff]
  %v1907 = vld [vmem:[%s3 + $0x2c0] sm:$0xff]
  %v1908 = vld [vmem:[%s3 + $0x2c8] sm:$0xff]
  %v1909 = vld [vmem:[%s3 + $0x2d0] sm:$0xff]
  %v1910 = vld [vmem:[%s3 + $0x2d8] sm:$0xff]
  %v1911 = vld [vmem:[%s3 + $0x2e0] sm:$0xff]
  %v1912 = vld [vmem:[%s3 + $0x2e8] sm:$0xff]
  %v1913 = vld [vmem:[%s3 + $0x2f0] sm:$0xff]
  %v1914 = vld [vmem:[%s3 + $0x2f8] sm:$0xff]
  %v1915 = vld [vmem:[%s3 + $0x300] sm:$0xff]
  %v1916 = vld [vmem:[%s3 + $0x308] sm:$0xff]
  %v1917 = vld [vmem:[%s3 + $0x310] sm:$0xff]
  %v1918 = vld [vmem:[%s3 + $0x318] sm:$0xff]
  %v1919 = vld [vmem:[%s3 + $0x320] sm:$0xff]
  %v1920 = vld [vmem:[%s3 + $0x328] sm:$0xff]
  %v1921 = vld [vmem:[%s3 + $0x330] sm:$0xff]
  %v1922 = vld [vmem:[%s3 + $0x338] sm:$0xff]
  %v1923 = vld [vmem:[%s3 + $0x340] sm:$0xff]
  %v1924 = vld [vmem:[%s3 + $0x348] sm:$0xff]
  %v1925 = vld [vmem:[%s3 + $0x350] sm:$0xff]
  %v1926 = vld [vmem:[%s3 + $0x358] sm:$0xff]
  %v1927 = vld [vmem:[%s3 + $0x360] sm:$0xff]
  %v1928 = vld [vmem:[%s3 + $0x368] sm:$0xff]
  %v1929 = vld [vmem:[%s3 + $0x370] sm:$0xff]
  %v1930 = vld [vmem:[%s3 + $0x378] sm:$0xff]
  %v1931 = vld [vmem:[%s3 + $0x380] sm:$0xff]
  %v1932 = vld [vmem:[%s3 + $0x388] sm:$0xff]
  %v1933 = vld [vmem:[%s3 + $0x390] sm:$0xff]
  %v1934 = vld [vmem:[%s3 + $0x398] sm:$0xff]
  %v1935 = vld [vmem:[%s3 + $0x3a0] sm:$0xff]
  %v1936 = vld [vmem:[%s3 + $0x3a8] sm:$0xff]
  %v1937 = vld [vmem:[%s3 + $0x3b0] sm:$0xff]
  %v1938 = vld [vmem:[%s3 + $0x3b8] sm:$0xff]
  %v1939 = vld [vmem:[%s3 + $0x3c0] sm:$0xff]
  %v1940 = vld [vmem:[%s3 + $0x3c8] sm:$0xff]
  %v1941 = vld [vmem:[%s3 + $0x3d0] sm:$0xff]
  %v1942 = vld [vmem:[%s3 + $0x3d8] sm:$0xff]
  %v1943 = vld [vmem:[%s3 + $0x3e0] sm:$0xff]
  %v1944 = vld [vmem:[%s3 + $0x3e8] sm:$0xff]
  %v1945 = vld [vmem:[%s3 + $0x3f0] sm:$0xff]
  %v1946 = vld [vmem:[%s3 + $0x3f8] sm:$0xff]
  %1947 = vmatprep.subr.mxu0 0.0
  %1948 = vmatpush1.msra.mxu0 %v1819
  %1949 = vmatprep.subr.mxu0 0.0
  %1950 = vmatpush1.msra.mxu0 %v1820
  %1951 = vmatprep.subr.mxu0 0.0
  %1952 = vmatpush1.msra.mxu0 %v1821
  %1953 = vmatprep.subr.mxu0 0.0
  %1954 = vmatpush1.msra.mxu0 %v1822
  %1955 = vmatprep.subr.mxu0 0.0
  %1956 = vmatpush1.msra.mxu0 %v1823
  %1957 = vmatprep.subr.mxu0 0.0
  %1958 = vmatpush1.msra.mxu0 %v1824
  %1959 = vmatprep.subr.mxu0 0.0
  %1960 = vmatpush1.msra.mxu0 %v1825
  %1961 = vmatprep.subr.mxu0 0.0
  %1962 = vmatpush1.msra.mxu0 %v1826
  %1963 = vmatprep.subr.mxu0 0.0
  %1964 = vmatpush1.msra.mxu0 %v1827
  %1965 = vmatprep.subr.mxu0 0.0
  %1966 = vmatpush1.msra.mxu0 %v1828
  %1967 = vmatprep.subr.mxu0 0.0
  %1968 = vmatpush1.msra.mxu0 %v1829
  %1969 = vmatprep.subr.mxu0 0.0
  %1970 = vmatpush1.msra.mxu0 %v1830
  %1971 = vmatprep.subr.mxu0 0.0
  %1972 = vmatpush1.msra.mxu0 %v1831
  %1973 = vmatprep.subr.mxu0 0.0
  %1974 = vmatpush1.msra.mxu0 %v1832
  %1975 = vmatprep.subr.mxu0 0.0
  %1976 = vmatpush1.msra.mxu0 %v1833
  %1977 = vmatprep.subr.mxu0 0.0
  %1978 = vmatpush1.msra.mxu0 %v1834
  %1979 = vmatprep.subr.mxu0 0.0
  %1980 = vmatpush1.msra.mxu0 0.0
  %1981 = vmatprep.subr.mxu0 0.0
  %1982 = vmatpush1.msra.mxu0 0.0
  %1983 = vmatprep.subr.mxu0 0.0
  %1984 = vmatpush1.msra.mxu0 0.0
  %1985 = vmatprep.subr.mxu0 0.0
  %1986 = vmatpush1.msra.mxu0 0.0
  %1987 = vmatprep.subr.mxu0 0.0
  %1988 = vmatpush1.msra.mxu0 0.0
  %1989 = vmatprep.subr.mxu0 0.0
  %1990 = vmatpush1.msra.mxu0 0.0
  %1991 = vmatprep.subr.mxu0 0.0
  %1992 = vmatpush1.msra.mxu0 0.0
  %1993 = vmatprep.subr.mxu0 0.0
  %1994 = vmatpush1.msra.mxu0 0.0
  %1995 = vmatprep.subr.mxu0 0.0
  %1996 = vmatpush1.msra.mxu0 0.0
  %1997 = vmatprep.subr.mxu0 0.0
  %1998 = vmatpush1.msra.mxu0 0.0
  %1999 = vmatprep.subr.mxu0 0.0
  %2000 = vmatpush1.msra.mxu0 0.0
  %2001 = vmatprep.subr.mxu0 0.0
  %2002 = vmatpush1.msra.mxu0 0.0
  %2003 = vmatprep.subr.mxu0 0.0
  %2004 = vmatpush1.msra.mxu0 0.0
  %2005 = vmatprep.subr.mxu0 0.0
  %2006 = vmatpush1.msra.mxu0 0.0
  %2007 = vmatprep.subr.mxu0 0.0
  %2008 = vmatpush1.msra.mxu0 0.0
  %2009 = vmatprep.subr.mxu0 0.0
  %2010 = vmatpush1.msra.mxu0 0.0
  %2011 = vmatprep.mubr.f32.mxu0 0.0
  %2012 = vmatmul.mubr.f32.gmra.mrb[0].mxu0 %v1811
  %v2013 = vpop.f32.mrb[0].mxu0
  %v2014 = vadd.f32 0.0, %v2013
  %v2015 = vpop.f32.mrb[0].mxu0
  %2016 = vdwg.mxu0
  %2017 = vmatprep.subr.mxu0 0.0
  %2018 = vmatpush1.msra.mxu0 %v1835
  %2019 = vmatprep.subr.mxu0 0.0
  %2020 = vmatpush1.msra.mxu0 %v1836
  %2021 = vmatprep.subr.mxu0 0.0
  %2022 = vmatpush1.msra.mxu0 %v1837
  %2023 = vmatprep.subr.mxu0 0.0
  %2024 = vmatpush1.msra.mxu0 %v1838
  %2025 = vmatprep.subr.mxu0 0.0
  %2026 = vmatpush1.msra.mxu0 %v1839
  %2027 = vmatprep.subr.mxu0 0.0
  %2028 = vmatpush1.msra.mxu0 %v1840
  %2029 = vmatprep.subr.mxu0 0.0
  %2030 = vmatpush1.msra.mxu0 %v1841
  %2031 = vmatprep.subr.mxu0 0.0
  %2032 = vmatpush1.msra.mxu0 %v1842
  %2033 = vmatprep.subr.mxu0 0.0
  %2034 = vmatpush1.msra.mxu0 %v1843
  %2035 = vmatprep.subr.mxu0 0.0
  %2036 = vmatpush1.msra.mxu0 %v1844
  %2037 = vmatprep.subr.mxu0 0.0
  %2038 = vmatpush1.msra.mxu0 %v1845
  %2039 = vmatprep.subr.mxu0 0.0
  %2040 = vmatpush1.msra.mxu0 %v1846
  %2041 = vmatprep.subr.mxu0 0.0
  %2042 = vmatpush1.msra.mxu0 %v1847
  %2043 = vmatprep.subr.mxu0 0.0
  %2044 = vmatpush1.msra.mxu0 %v1848
  %2045 = vmatprep.subr.mxu0 0.0
  %2046 = vmatpush1.msra.mxu0 %v1849
  %2047 = vmatprep.subr.mxu0 0.0
  %2048 = vmatpush1.msra.mxu0 %v1850
  %2049 = vmatprep.subr.mxu0 0.0
  %2050 = vmatpush1.msra.mxu0 0.0
  %2051 = vmatprep.subr.mxu0 0.0
  %2052 = vmatpush1.msra.mxu0 0.0
  %2053 = vmatprep.subr.mxu0 0.0
  %2054 = vmatpush1.msra.mxu0 0.0
  %2055 = vmatprep.subr.mxu0 0.0
  %2056 = vmatpush1.msra.mxu0 0.0
  %2057 = vmatprep.subr.mxu0 0.0
  %2058 = vmatpush1.msra.mxu0 0.0
  %2059 = vmatprep.subr.mxu0 0.0
  %2060 = vmatpush1.msra.mxu0 0.0
  %2061 = vmatprep.subr.mxu0 0.0
  %2062 = vmatpush1.msra.mxu0 0.0
  %2063 = vmatprep.subr.mxu0 0.0
  %2064 = vmatpush1.msra.mxu0 0.0
  %2065 = vmatprep.subr.mxu0 0.0
  %2066 = vmatpush1.msra.mxu0 0.0
  %2067 = vmatprep.subr.mxu0 0.0
  %2068 = vmatpush1.msra.mxu0 0.0
  %2069 = vmatprep.subr.mxu0 0.0
  %2070 = vmatpush1.msra.mxu0 0.0
  %2071 = vmatprep.subr.mxu0 0.0
  %2072 = vmatpush1.msra.mxu0 0.0
  %2073 = vmatprep.subr.mxu0 0.0
  %2074 = vmatpush1.msra.mxu0 0.0
  %2075 = vmatprep.subr.mxu0 0.0
  %2076 = vmatpush1.msra.mxu0 0.0
  %2077 = vmatprep.subr.mxu0 0.0
  %2078 = vmatpush1.msra.mxu0 0.0
  %2079 = vmatprep.subr.mxu0 0.0
  %2080 = vmatpush1.msra.mxu0 0.0
  %2081 = vmatprep.mubr.f32.mxu0 0.0
  %2082 = vmatmul.mubr.f32.gmra.mrb[0].mxu0 %v1812
  %v2083 = vpop.f32.mrb[0].mxu0
  %v2084 = vadd.f32 0.0, %v2083
  %v2085 = vpop.f32.mrb[0].mxu0
  %2086 = vdwg.mxu0
  %2087 = vmatprep.subr.mxu0 0.0
  %2088 = vmatpush1.msra.mxu0 %v1851
  %2089 = vmatprep.subr.mxu0 0.0
  %2090 = vmatpush1.msra.mxu0 %v1852
  %2091 = vmatprep.subr.mxu0 0.0
  %2092 = vmatpush1.msra.mxu0 %v1853
  %2093 = vmatprep.subr.mxu0 0.0
  %2094 = vmatpush1.msra.mxu0 %v1854
  %2095 = vmatprep.subr.mxu0 0.0
  %2096 = vmatpush1.msra.mxu0 %v1855
  %2097 = vmatprep.subr.mxu0 0.0
  %2098 = vmatpush1.msra.mxu0 %v1856
  %2099 = vmatprep.subr.mxu0 0.0
  %2100 = vmatpush1.msra.mxu0 %v1857
  %2101 = vmatprep.subr.mxu0 0.0
  %2102 = vmatpush1.msra.mxu0 %v1858
  %2103 = vmatprep.subr.mxu0 0.0
  %2104 = vmatpush1.msra.mxu0 %v1859
  %2105 = vmatprep.subr.mxu0 0.0
  %2106 = vmatpush1.msra.mxu0 %v1860
  %2107 = vmatprep.subr.mxu0 0.0
  %2108 = vmatpush1.msra.mxu0 %v1861
  %2109 = vmatprep.subr.mxu0 0.0
  %2110 = vmatpush1.msra.mxu0 %v1862
  %2111 = vmatprep.subr.mxu0 0.0
  %2112 = vmatpush1.msra.mxu0 %v1863
  %2113 = vmatprep.subr.mxu0 0.0
  %2114 = vmatpush1.msra.mxu0 %v1864
  %2115 = vmatprep.subr.mxu0 0.0
  %2116 = vmatpush1.msra.mxu0 %v1865
  %2117 = vmatprep.subr.mxu0 0.0
  %2118 = vmatpush1.msra.mxu0 %v1866
  %2119 = vmatprep.subr.mxu0 0.0
  %2120 = vmatpush1.msra.mxu0 0.0
  %2121 = vmatprep.subr.mxu0 0.0
  %2122 = vmatpush1.msra.mxu0 0.0
  %2123 = vmatprep.subr.mxu0 0.0
  %2124 = vmatpush1.msra.mxu0 0.0
  %2125 = vmatprep.subr.mxu0 0.0
  %2126 = vmatpush1.msra.mxu0 0.0
  %2127 = vmatprep.subr.mxu0 0.0
  %2128 = vmatpush1.msra.mxu0 0.0
  %2129 = vmatprep.subr.mxu0 0.0
  %2130 = vmatpush1.msra.mxu0 0.0
  %2131 = vmatprep.subr.mxu0 0.0
  %2132 = vmatpush1.msra.mxu0 0.0
  %2133 = vmatprep.subr.mxu0 0.0
  %2134 = vmatpush1.msra.mxu0 0.0
  %2135 = vmatprep.subr.mxu0 0.0
  %2136 = vmatpush1.msra.mxu0 0.0
  %2137 = vmatprep.subr.mxu0 0.0
  %2138 = vmatpush1.msra.mxu0 0.0
  %2139 = vmatprep.subr.mxu0 0.0
  %2140 = vmatpush1.msra.mxu0 0.0
  %2141 = vmatprep.subr.mxu0 0.0
  %2142 = vmatpush1.msra.mxu0 0.0
  %2143 = vmatprep.subr.mxu0 0.0
  %2144 = vmatpush1.msra.mxu0 0.0
  %2145 = vmatprep.subr.mxu0 0.0
  %2146 = vmatpush1.msra.mxu0 0.0
  %2147 = vmatprep.subr.mxu0 0.0
  %2148 = vmatpush1.msra.mxu0 0.0
  %2149 = vmatprep.subr.mxu0 0.0
  %2150 = vmatpush1.msra.mxu0 0.0
  %2151 = vmatprep.mubr.f32.mxu0 0.0
  %2152 = vmatmul.mubr.f32.gmra.mrb[0].mxu0 %v1813
  %v2153 = vpop.f32.mrb[0].mxu0
  %v2154 = vadd.f32 0.0, %v2153
  %v2155 = vpop.f32.mrb[0].mxu0
  %2156 = vdwg.mxu0
  %2157 = vmatprep.subr.mxu0 0.0
  %2158 = vmatpush1.msra.mxu0 %v1867
  %2159 = vmatprep.subr.mxu0 0.0
  %2160 = vmatpush1.msra.mxu0 %v1868
  %2161 = vmatprep.subr.mxu0 0.0
  %2162 = vmatpush1.msra.mxu0 %v1869
  %2163 = vmatprep.subr.mxu0 0.0
  %2164 = vmatpush1.msra.mxu0 %v1870
  %2165 = vmatprep.subr.mxu0 0.0
  %2166 = vmatpush1.msra.mxu0 %v1871
  %2167 = vmatprep.subr.mxu0 0.0
  %2168 = vmatpush1.msra.mxu0 %v1872
  %2169 = vmatprep.subr.mxu0 0.0
  %2170 = vmatpush1.msra.mxu0 %v1873
  %2171 = vmatprep.subr.mxu0 0.0
  %2172 = vmatpush1.msra.mxu0 %v1874
  %2173 = vmatprep.subr.mxu0 0.0
  %2174 = vmatpush1.msra.mxu0 %v1875
  %2175 = vmatprep.subr.mxu0 0.0
  %2176 = vmatpush1.msra.mxu0 %v1876
  %2177 = vmatprep.subr.mxu0 0.0
  %2178 = vmatpush1.msra.mxu0 %v1877
  %2179 = vmatprep.subr.mxu0 0.0
  %2180 = vmatpush1.msra.mxu0 %v1878
  %2181 = vmatprep.subr.mxu0 0.0
  %2182 = vmatpush1.msra.mxu0 %v1879
  %2183 = vmatprep.subr.mxu0 0.0
  %2184 = vmatpush1.msra.mxu0 %v1880
  %2185 = vmatprep.subr.mxu0 0.0
  %2186 = vmatpush1.msra.mxu0 %v1881
  %2187 = vmatprep.subr.mxu0 0.0
  %2188 = vmatpush1.msra.mxu0 %v1882
  %2189 = vmatprep.subr.mxu0 0.0
  %2190 = vmatpush1.msra.mxu0 0.0
  %2191 = vmatprep.subr.mxu0 0.0
  %2192 = vmatpush1.msra.mxu0 0.0
  %2193 = vmatprep.subr.mxu0 0.0
  %2194 = vmatpush1.msra.mxu0 0.0
  %2195 = vmatprep.subr.mxu0 0.0
  %2196 = vmatpush1.msra.mxu0 0.0
  %2197 = vmatprep.subr.mxu0 0.0
  %2198 = vmatpush1.msra.mxu0 0.0
  %2199 = vmatprep.subr.mxu0 0.0
  %2200 = vmatpush1.msra.mxu0 0.0
  %2201 = vmatprep.subr.mxu0 0.0
  %2202 = vmatpush1.msra.mxu0 0.0
  %2203 = vmatprep.subr.mxu0 0.0
  %2204 = vmatpush1.msra.mxu0 0.0
  %2205 = vmatprep.subr.mxu0 0.0
  %2206 = vmatpush1.msra.mxu0 0.0
  %2207 = vmatprep.subr.mxu0 0.0
  %2208 = vmatpush1.msra.mxu0 0.0
  %2209 = vmatprep.subr.mxu0 0.0
  %2210 = vmatpush1.msra.mxu0 0.0
  %2211 = vmatprep.subr.mxu0 0.0
  %2212 = vmatpush1.msra.mxu0 0.0
  %2213 = vmatprep.subr.mxu0 0.0
  %2214 = vmatpush1.msra.mxu0 0.0
  %2215 = vmatprep.subr.mxu0 0.0
  %2216 = vmatpush1.msra.mxu0 0.0
  %2217 = vmatprep.subr.mxu0 0.0
  %2218 = vmatpush1.msra.mxu0 0.0
  %2219 = vmatprep.subr.mxu0 0.0
  %2220 = vmatpush1.msra.mxu0 0.0
  %2221 = vmatprep.mubr.f32.mxu0 0.0
  %2222 = vmatmul.mubr.f32.gmra.mrb[0].mxu0 %v1814
  %v2223 = vpop.f32.mrb[0].mxu0
  %v2224 = vadd.f32 0.0, %v2223
  %v2225 = vpop.f32.mrb[0].mxu0
  %2226 = vdwg.mxu0
  %2227 = vmatprep.subr.mxu0 0.0
  %2228 = vmatpush1.msra.mxu0 %v1883
  %2229 = vmatprep.subr.mxu0 0.0
  %2230 = vmatpush1.msra.mxu0 %v1884
  %2231 = vmatprep.subr.mxu0 0.0
  %2232 = vmatpush1.msra.mxu0 %v1885
  %2233 = vmatprep.subr.mxu0 0.0
  %2234 = vmatpush1.msra.mxu0 %v1886
  %2235 = vmatprep.subr.mxu0 0.0
  %2236 = vmatpush1.msra.mxu0 %v1887
  %2237 = vmatprep.subr.mxu0 0.0
  %2238 = vmatpush1.msra.mxu0 %v1888
  %2239 = vmatprep.subr.mxu0 0.0
  %2240 = vmatpush1.msra.mxu0 %v1889
  %2241 = vmatprep.subr.mxu0 0.0
  %2242 = vmatpush1.msra.mxu0 %v1890
  %2243 = vmatprep.subr.mxu0 0.0
  %2244 = vmatpush1.msra.mxu0 %v1891
  %2245 = vmatprep.subr.mxu0 0.0
  %2246 = vmatpush1.msra.mxu0 %v1892
  %2247 = vmatprep.subr.mxu0 0.0
  %2248 = vmatpush1.msra.mxu0 %v1893
  %2249 = vmatprep.subr.mxu0 0.0
  %2250 = vmatpush1.msra.mxu0 %v1894
  %2251 = vmatprep.subr.mxu0 0.0
  %2252 = vmatpush1.msra.mxu0 %v1895
  %2253 = vmatprep.subr.mxu0 0.0
  %2254 = vmatpush1.msra.mxu0 %v1896
  %2255 = vmatprep.subr.mxu0 0.0
  %2256 = vmatpush1.msra.mxu0 %v1897
  %2257 = vmatprep.subr.mxu0 0.0
  %2258 = vmatpush1.msra.mxu0 %v1898
  %2259 = vmatprep.subr.mxu0 0.0
  %2260 = vmatpush1.msra.mxu0 0.0
  %2261 = vmatprep.subr.mxu0 0.0
  %2262 = vmatpush1.msra.mxu0 0.0
  %2263 = vmatprep.subr.mxu0 0.0
  %2264 = vmatpush1.msra.mxu0 0.0
  %2265 = vmatprep.subr.mxu0 0.0
  %2266 = vmatpush1.msra.mxu0 0.0
  %2267 = vmatprep.subr.mxu0 0.0
  %2268 = vmatpush1.msra.mxu0 0.0
  %2269 = vmatprep.subr.mxu0 0.0
  %2270 = vmatpush1.msra.mxu0 0.0
  %2271 = vmatprep.subr.mxu0 0.0
  %2272 = vmatpush1.msra.mxu0 0.0
  %2273 = vmatprep.subr.mxu0 0.0
  %2274 = vmatpush1.msra.mxu0 0.0
  %2275 = vmatprep.subr.mxu0 0.0
  %2276 = vmatpush1.msra.mxu0 0.0
  %2277 = vmatprep.subr.mxu0 0.0
  %2278 = vmatpush1.msra.mxu0 0.0
  %2279 = vmatprep.subr.mxu0 0.0
  %2280 = vmatpush1.msra.mxu0 0.0
  %2281 = vmatprep.subr.mxu0 0.0
  %2282 = vmatpush1.msra.mxu0 0.0
  %2283 = vmatprep.subr.mxu0 0.0
  %2284 = vmatpush1.msra.mxu0 0.0
  %2285 = vmatprep.subr.mxu0 0.0
  %2286 = vmatpush1.msra.mxu0 0.0
  %2287 = vmatprep.subr.mxu0 0.0
  %2288 = vmatpush1.msra.mxu0 0.0
  %2289 = vmatprep.subr.mxu0 0.0
  %2290 = vmatpush1.msra.mxu0 0.0
  %2291 = vmatprep.mubr.f32.mxu0 0.0
  %2292 = vmatmul.mubr.f32.gmra.mrb[0].mxu0 %v1815
  %v2293 = vpop.f32.mrb[0].mxu0
  %v2294 = vadd.f32 0.0, %v2293
  %v2295 = vpop.f32.mrb[0].mxu0
  %2296 = vdwg.mxu0
  %2297 = vmatprep.subr.mxu0 0.0
  %2298 = vmatpush1.msra.mxu0 %v1899
  %2299 = vmatprep.subr.mxu0 0.0
  %2300 = vmatpush1.msra.mxu0 %v1900
  %2301 = vmatprep.subr.mxu0 0.0
  %2302 = vmatpush1.msra.mxu0 %v1901
  %2303 = vmatprep.subr.mxu0 0.0
  %2304 = vmatpush1.msra.mxu0 %v1902
  %2305 = vmatprep.subr.mxu0 0.0
  %2306 = vmatpush1.msra.mxu0 %v1903
  %2307 = vmatprep.subr.mxu0 0.0
  %2308 = vmatpush1.msra.mxu0 %v1904
  %2309 = vmatprep.subr.mxu0 0.0
  %2310 = vmatpush1.msra.mxu0 %v1905
  %2311 = vmatprep.subr.mxu0 0.0
  %2312 = vmatpush1.msra.mxu0 %v1906
  %2313 = vmatprep.subr.mxu0 0.0
  %2314 = vmatpush1.msra.mxu0 %v1907
  %2315 = vmatprep.subr.mxu0 0.0
  %2316 = vmatpush1.msra.mxu0 %v1908
  %2317 = vmatprep.subr.mxu0 0.0
  %2318 = vmatpush1.msra.mxu0 %v1909
  %2319 = vmatprep.subr.mxu0 0.0
  %2320 = vmatpush1.msra.mxu0 %v1910
  %2321 = vmatprep.subr.mxu0 0.0
  %2322 = vmatpush1.msra.mxu0 %v1911
  %2323 = vmatprep.subr.mxu0 0.0
  %2324 = vmatpush1.msra.mxu0 %v1912
  %2325 = vmatprep.subr.mxu0 0.0
  %2326 = vmatpush1.msra.mxu0 %v1913
  %2327 = vmatprep.subr.mxu0 0.0
  %2328 = vmatpush1.msra.mxu0 %v1914
  %2329 = vmatprep.subr.mxu0 0.0
  %2330 = vmatpush1.msra.mxu0 0.0
  %2331 = vmatprep.subr.mxu0 0.0
  %2332 = vmatpush1.msra.mxu0 0.0
  %2333 = vmatprep.subr.mxu0 0.0
  %2334 = vmatpush1.msra.mxu0 0.0
  %2335 = vmatprep.subr.mxu0 0.0
  %2336 = vmatpush1.msra.mxu0 0.0
  %2337 = vmatprep.subr.mxu0 0.0
  %2338 = vmatpush1.msra.mxu0 0.0
  %2339 = vmatprep.subr.mxu0 0.0
  %2340 = vmatpush1.msra.mxu0 0.0
  %2341 = vmatprep.subr.mxu0 0.0
  %2342 = vmatpush1.msra.mxu0 0.0
  %2343 = vmatprep.subr.mxu0 0.0
  %2344 = vmatpush1.msra.mxu0 0.0
  %2345 = vmatprep.subr.mxu0 0.0
  %2346 = vmatpush1.msra.mxu0 0.0
  %2347 = vmatprep.subr.mxu0 0.0
  %2348 = vmatpush1.msra.mxu0 0.0
  %2349 = vmatprep.subr.mxu0 0.0
  %2350 = vmatpush1.msra.mxu0 0.0
  %2351 = vmatprep.subr.mxu0 0.0
  %2352 = vmatpush1.msra.mxu0 0.0
  %2353 = vmatprep.subr.mxu0 0.0
  %2354 = vmatpush1.msra.mxu0 0.0
  %2355 = vmatprep.subr.mxu0 0.0
  %2356 = vmatpush1.msra.mxu0 0.0
  %2357 = vmatprep.subr.mxu0 0.0
  %2358 = vmatpush1.msra.mxu0 0.0
  %2359 = vmatprep.subr.mxu0 0.0
  %2360 = vmatpush1.msra.mxu0 0.0
  %2361 = vmatprep.mubr.f32.mxu0 0.0
  %2362 = vmatmul.mubr.f32.gmra.mrb[0].mxu0 %v1816
  %v2363 = vpop.f32.mrb[0].mxu0
  %v2364 = vadd.f32 0.0, %v2363
  %v2365 = vpop.f32.mrb[0].mxu0
  %2366 = vdwg.mxu0
  %2367 = vmatprep.subr.mxu0 0.0
  %2368 = vmatpush1.msra.mxu0 %v1915
  %2369 = vmatprep.subr.mxu0 0.0
  %2370 = vmatpush1.msra.mxu0 %v1916
  %2371 = vmatprep.subr.mxu0 0.0
  %2372 = vmatpush1.msra.mxu0 %v1917
  %2373 = vmatprep.subr.mxu0 0.0
  %2374 = vmatpush1.msra.mxu0 %v1918
  %2375 = vmatprep.subr.mxu0 0.0
  %2376 = vmatpush1.msra.mxu0 %v1919
  %2377 = vmatprep.subr.mxu0 0.0
  %2378 = vmatpush1.msra.mxu0 %v1920
  %2379 = vmatprep.subr.mxu0 0.0
  %2380 = vmatpush1.msra.mxu0 %v1921
  %2381 = vmatprep.subr.mxu0 0.0
  %2382 = vmatpush1.msra.mxu0 %v1922
  %2383 = vmatprep.subr.mxu0 0.0
  %2384 = vmatpush1.msra.mxu0 %v1923
  %2385 = vmatprep.subr.mxu0 0.0
  %2386 = vmatpush1.msra.mxu0 %v1924
  %2387 = vmatprep.subr.mxu0 0.0
  %2388 = vmatpush1.msra.mxu0 %v1925
  %2389 = vmatprep.subr.mxu0 0.0
  %2390 = vmatpush1.msra.mxu0 %v1926
  %2391 = vmatprep.subr.mxu0 0.0
  %2392 = vmatpush1.msra.mxu0 %v1927
  %2393 = vmatprep.subr.mxu0 0.0
  %2394 = vmatpush1.msra.mxu0 %v1928
  %2395 = vmatprep.subr.mxu0 0.0
  %2396 = vmatpush1.msra.mxu0 %v1929
  %2397 = vmatprep.subr.mxu0 0.0
  %2398 = vmatpush1.msra.mxu0 %v1930
  %2399 = vmatprep.subr.mxu0 0.0
  %2400 = vmatpush1.msra.mxu0 0.0
  %2401 = vmatprep.subr.mxu0 0.0
  %2402 = vmatpush1.msra.mxu0 0.0
  %2403 = vmatprep.subr.mxu0 0.0
  %2404 = vmatpush1.msra.mxu0 0.0
  %2405 = vmatprep.subr.mxu0 0.0
  %2406 = vmatpush1.msra.mxu0 0.0
  %2407 = vmatprep.subr.mxu0 0.0
  %2408 = vmatpush1.msra.mxu0 0.0
  %2409 = vmatprep.subr.mxu0 0.0
  %2410 = vmatpush1.msra.mxu0 0.0
  %2411 = vmatprep.subr.mxu0 0.0
  %2412 = vmatpush1.msra.mxu0 0.0
  %2413 = vmatprep.subr.mxu0 0.0
  %2414 = vmatpush1.msra.mxu0 0.0
  %2415 = vmatprep.subr.mxu0 0.0
  %2416 = vmatpush1.msra.mxu0 0.0
  %2417 = vmatprep.subr.mxu0 0.0
  %2418 = vmatpush1.msra.mxu0 0.0
  %2419 = vmatprep.subr.mxu0 0.0
  %2420 = vmatpush1.msra.mxu0 0.0
  %2421 = vmatprep.subr.mxu0 0.0
  %2422 = vmatpush1.msra.mxu0 0.0
  %2423 = vmatprep.subr.mxu0 0.0
  %2424 = vmatpush1.msra.mxu0 0.0
  %2425 = vmatprep.subr.mxu0 0.0
  %2426 = vmatpush1.msra.mxu0 0.0
  %2427 = vmatprep.subr.mxu0 0.0
  %2428 = vmatpush1.msra.mxu0 0.0
  %2429 = vmatprep.subr.mxu0 0.0
  %2430 = vmatpush1.msra.mxu0 0.0
  %2431 = vmatprep.mubr.f32.mxu0 0.0
  %2432 = vmatmul.mubr.f32.gmra.mrb[0].mxu0 %v1817
  %v2433 = vpop.f32.mrb[0].mxu0
  %v2434 = vadd.f32 0.0, %v2433
  %v2435 = vpop.f32.mrb[0].mxu0
  %2436 = vdwg.mxu0
  %2437 = vmatprep.subr.mxu0 0.0
  %2438 = vmatpush1.msra.mxu0 %v1931
  %2439 = vmatprep.subr.mxu0 0.0
  %2440 = vmatpush1.msra.mxu0 %v1932
  %2441 = vmatprep.subr.mxu0 0.0
  %2442 = vmatpush1.msra.mxu0 %v1933
  %2443 = vmatprep.subr.mxu0 0.0
  %2444 = vmatpush1.msra.mxu0 %v1934
  %2445 = vmatprep.subr.mxu0 0.0
  %2446 = vmatpush1.msra.mxu0 %v1935
  %2447 = vmatprep.subr.mxu0 0.0
  %2448 = vmatpush1.msra.mxu0 %v1936
  %2449 = vmatprep.subr.mxu0 0.0
  %2450 = vmatpush1.msra.mxu0 %v1937
  %2451 = vmatprep.subr.mxu0 0.0
  %2452 = vmatpush1.msra.mxu0 %v1938
  %2453 = vmatprep.subr.mxu0 0.0
  %2454 = vmatpush1.msra.mxu0 %v1939
  %2455 = vmatprep.subr.mxu0 0.0
  %2456 = vmatpush1.msra.mxu0 %v1940
  %2457 = vmatprep.subr.mxu0 0.0
  %2458 = vmatpush1.msra.mxu0 %v1941
  %2459 = vmatprep.subr.mxu0 0.0
  %2460 = vmatpush1.msra.mxu0 %v1942
  %2461 = vmatprep.subr.mxu0 0.0
  %2462 = vmatpush1.msra.mxu0 %v1943
  %2463 = vmatprep.subr.mxu0 0.0
  %2464 = vmatpush1.msra.mxu0 %v1944
  %2465 = vmatprep.subr.mxu0 0.0
  %2466 = vmatpush1.msra.mxu0 %v1945
  %2467 = vmatprep.subr.mxu0 0.0
  %2468 = vmatpush1.msra.mxu0 %v1946
  %2469 = vmatprep.subr.mxu0 0.0
  %2470 = vmatpush1.msra.mxu0 0.0
  %2471 = vmatprep.subr.mxu0 0.0
  %2472 = vmatpush1.msra.mxu0 0.0
  %2473 = vmatprep.subr.mxu0 0.0
  %2474 = vmatpush1.msra.mxu0 0.0
  %2475 = vmatprep.subr.mxu0 0.0
  %2476 = vmatpush1.msra.mxu0 0.0
  %2477 = vmatprep.subr.mxu0 0.0
  %2478 = vmatpush1.msra.mxu0 0.0
  %2479 = vmatprep.subr.mxu0 0.0
  %2480 = vmatpush1.msra.mxu0 0.0
  %2481 = vmatprep.subr.mxu0 0.0
  %2482 = vmatpush1.msra.mxu0 0.0
  %2483 = vmatprep.subr.mxu0 0.0
  %2484 = vmatpush1.msra.mxu0 0.0
  %2485 = vmatprep.subr.mxu0 0.0
  %2486 = vmatpush1.msra.mxu0 0.0
  %2487 = vmatprep.subr.mxu0 0.0
  %2488 = vmatpush1.msra.mxu0 0.0
  %2489 = vmatprep.subr.mxu0 0.0
  %2490 = vmatpush1.msra.mxu0 0.0
  %2491 = vmatprep.subr.mxu0 0.0
  %2492 = vmatpush1.msra.mxu0 0.0
  %2493 = vmatprep.subr.mxu0 0.0
  %2494 = vmatpush1.msra.mxu0 0.0
  %2495 = vmatprep.subr.mxu0 0.0
  %2496 = vmatpush1.msra.mxu0 0.0
  %2497 = vmatprep.subr.mxu0 0.0
  %2498 = vmatpush1.msra.mxu0 0.0
  %2499 = vmatprep.subr.mxu0 0.0
  %2500 = vmatpush1.msra.mxu0 0.0
  %2501 = vmatprep.mubr.f32.mxu0 0.0
  %2502 = vmatmul.mubr.f32.gmra.mrb[0].mxu0 %v1818
  %v2503 = vpop.f32.mrb[0].mxu0
  %v2504 = vadd.f32 0.0, %v2503
  %v2505 = vpop.f32.mrb[0].mxu0
  %2506 = vdwg.mxu0
  %v2507 = vld [vmem:[%s10] sm:$0xff]
  %v2508 = vld [vmem:[%s10 + $0x8] sm:$0xff]
  %v2509 = vld [vmem:[%s10 + $0x10] sm:$0xff]
  %v2510 = vld [vmem:[%s10 + $0x18] sm:$0xff]
  %v2511 = vld [vmem:[%s10 + $0x20] sm:$0xff]
  %v2512 = vld [vmem:[%s10 + $0x28] sm:$0xff]
  %v2513 = vld [vmem:[%s10 + $0x30] sm:$0xff]
  %v2514 = vld [vmem:[%s10 + $0x38] sm:$0xff]
  %v2515 = vld [vmem:[%s10 + $0x40] sm:$0xff]
  %v2516 = vld [vmem:[%s10 + $0x48] sm:$0xff]
  %v2517 = vld [vmem:[%s10 + $0x50] sm:$0xff]
  %v2518 = vld [vmem:[%s10 + $0x58] sm:$0xff]
  %v2519 = vld [vmem:[%s10 + $0x60] sm:$0xff]
  %v2520 = vld [vmem:[%s10 + $0x68] sm:$0xff]
  %v2521 = vld [vmem:[%s10 + $0x70] sm:$0xff]
  %v2522 = vld [vmem:[%s10 + $0x78] sm:$0xff]
  %v2523 = vld [vmem:[%s11] sm:$0xff]
  %v2524 = vld [vmem:[%s11 + $0x8] sm:$0xff]
  %v2525 = vld [vmem:[%s11 + $0x10] sm:$0xff]
  %v2526 = vld [vmem:[%s11 + $0x18] sm:$0xff]
  %v2527 = vld [vmem:[%s11 + $0x20] sm:$0xff]
  %v2528 = vld [vmem:[%s11 + $0x28] sm:$0xff]
  %v2529 = vld [vmem:[%s11 + $0x30] sm:$0xff]
  %v2530 = vld [vmem:[%s11 + $0x38] sm:$0xff]
  %v2531 = vld [vmem:[%s11 + $0x40] sm:$0xff]
  %v2532 = vld [vmem:[%s11 + $0x48] sm:$0xff]
  %v2533 = vld [vmem:[%s11 + $0x50] sm:$0xff]
  %v2534 = vld [vmem:[%s11 + $0x58] sm:$0xff]
  %v2535 = vld [vmem:[%s11 + $0x60] sm:$0xff]
  %v2536 = vld [vmem:[%s11 + $0x68] sm:$0xff]
  %v2537 = vld [vmem:[%s11 + $0x70] sm:$0xff]
  %v2538 = vld [vmem:[%s11 + $0x78] sm:$0xff]
  %v2547 = vrot.slane %v2084, 7
  %vm2548 = vcmask 1041409
  %v2549 = vsel %vm2548, %v2547, %v2014
  %v2550 = vrot.slane %v2154, 6
  %vm2551 = vcmask 1042434
  %v2552 = vsel %vm2551, %v2550, %v2549
  %v2553 = vrot.slane %v2224, 5
  %vm2554 = vcmask 1043459
  %v2555 = vsel %vm2554, %v2553, %v2552
  %v2556 = vrot.slane %v2294, 4
  %vm2557 = vcmask 1044484
  %v2558 = vsel %vm2557, %v2556, %v2555
  %v2559 = vrot.slane %v2364, 3
  %vm2560 = vcmask 1045509
  %v2561 = vsel %vm2560, %v2559, %v2558
  %v2562 = vrot.slane %v2434, 2
  %vm2563 = vcmask 1046534
  %v2564 = vsel %vm2563, %v2562, %v2561
  %v2565 = vrot.slane %v2504, 1
  %vm2566 = vcmask 1047559
  %v2567 = vsel %vm2566, %v2565, %v2564
  %2569 = vmatprep.subr.mxu0 0.0
  %2570 = vmatpush1.msra.mxu0 %v2523
  %2571 = vmatprep.subr.mxu0 0.0
  %2572 = vmatpush1.msra.mxu0 %v2524
  %2573 = vmatprep.subr.mxu0 0.0
  %2574 = vmatpush1.msra.mxu0 %v2525
  %2575 = vmatprep.subr.mxu0 0.0
  %2576 = vmatpush1.msra.mxu0 %v2526
  %2577 = vmatprep.subr.mxu0 0.0
  %2578 = vmatpush1.msra.mxu0 %v2527
  %2579 = vmatprep.subr.mxu0 0.0
  %2580 = vmatpush1.msra.mxu0 %v2528
  %2581 = vmatprep.subr.mxu0 0.0
  %2582 = vmatpush1.msra.mxu0 %v2529
  %2583 = vmatprep.subr.mxu0 0.0
  %2584 = vmatpush1.msra.mxu0 %v2530
  %2585 = vmatprep.subr.mxu0 0.0
  %2586 = vmatpush1.msra.mxu0 %v2531
  %2587 = vmatprep.subr.mxu0 0.0
  %2588 = vmatpush1.msra.mxu0 %v2532
  %2589 = vmatprep.subr.mxu0 0.0
  %2590 = vmatpush1.msra.mxu0 %v2533
  %2591 = vmatprep.subr.mxu0 0.0
  %2592 = vmatpush1.msra.mxu0 %v2534
  %2593 = vmatprep.subr.mxu0 0.0
  %2594 = vmatpush1.msra.mxu0 %v2535
  %2595 = vmatprep.subr.mxu0 0.0
  %2596 = vmatpush1.msra.mxu0 %v2536
  %2597 = vmatprep.subr.mxu0 0.0
  %2598 = vmatpush1.msra.mxu0 %v2537
  %2599 = vmatprep.subr.mxu0 0.0
  %2600 = vmatpush1.msra.mxu0 %v2538
  %2601 = vmatprep.subr.mxu0 0.0
  %2602 = vmatpush1.msra.mxu0 0.0
  %2603 = vmatprep.subr.mxu0 0.0
  %2604 = vmatpush1.msra.mxu0 0.0
  %2605 = vmatprep.subr.mxu0 0.0
  %2606 = vmatpush1.msra.mxu0 0.0
  %2607 = vmatprep.subr.mxu0 0.0
  %2608 = vmatpush1.msra.mxu0 0.0
  %2609 = vmatprep.subr.mxu0 0.0
  %2610 = vmatpush1.msra.mxu0 0.0
  %2611 = vmatprep.subr.mxu0 0.0
  %2612 = vmatpush1.msra.mxu0 0.0
  %2613 = vmatprep.subr.mxu0 0.0
  %2614 = vmatpush1.msra.mxu0 0.0
  %2615 = vmatprep.subr.mxu0 0.0
  %2616 = vmatpush1.msra.mxu0 0.0
  %2617 = vmatprep.subr.mxu0 0.0
  %2618 = vmatpush1.msra.mxu0 0.0
  %2619 = vmatprep.subr.mxu0 0.0
  %2620 = vmatpush1.msra.mxu0 0.0
  %2621 = vmatprep.subr.mxu0 0.0
  %2622 = vmatpush1.msra.mxu0 0.0
  %2623 = vmatprep.subr.mxu0 0.0
  %2624 = vmatpush1.msra.mxu0 0.0
  %2625 = vmatprep.subr.mxu0 0.0
  %2626 = vmatpush1.msra.mxu0 0.0
  %2627 = vmatprep.subr.mxu0 0.0
  %2628 = vmatpush1.msra.mxu0 0.0
  %2629 = vmatprep.subr.mxu0 0.0
  %2630 = vmatpush1.msra.mxu0 0.0
  %2631 = vmatprep.subr.mxu0 0.0
  %2632 = vmatpush1.msra.mxu0 0.0
  %2633 = vmatprep.mubr.f32.mxu0 0.0
  %2634 = vmatmul.mubr.f32.gmra.mrb[0].mxu0 %v2567
  %v2635 = vpop.f32.mrb[0].mxu0
  %v2636 = vadd.f32 0.0, %v2635
  %v2637 = vpop.f32.mrb[0].mxu0
  %2638 = vdwg.mxu0
  %2639 = vmatprep.subr.mxu0 0.0
  %2640 = vmatpush1.msra.mxu0 %v2507
  %2641 = vmatprep.subr.mxu0 0.0
  %2642 = vmatpush1.msra.mxu0 %v2508
  %2643 = vmatprep.subr.mxu0 0.0
  %2644 = vmatpush1.msra.mxu0 %v2509
  %2645 = vmatprep.subr.mxu0 0.0
  %2646 = vmatpush1.msra.mxu0 %v2510
  %2647 = vmatprep.subr.mxu0 0.0
  %2648 = vmatpush1.msra.mxu0 %v2511
  %2649 = vmatprep.subr.mxu0 0.0
  %2650 = vmatpush1.msra.mxu0 %v2512
  %2651 = vmatprep.subr.mxu0 0.0
  %2652 = vmatpush1.msra.mxu0 %v2513
  %2653 = vmatprep.subr.mxu0 0.0
  %2654 = vmatpush1.msra.mxu0 %v2514
  %2655 = vmatprep.subr.mxu0 0.0
  %2656 = vmatpush1.msra.mxu0 %v2515
  %2657 = vmatprep.subr.mxu0 0.0
  %2658 = vmatpush1.msra.mxu0 %v2516
  %2659 = vmatprep.subr.mxu0 0.0
  %2660 = vmatpush1.msra.mxu0 %v2517
  %2661 = vmatprep.subr.mxu0 0.0
  %2662 = vmatpush1.msra.mxu0 %v2518
  %2663 = vmatprep.subr.mxu0 0.0
  %2664 = vmatpush1.msra.mxu0 %v2519
  %2665 = vmatprep.subr.mxu0 0.0
  %2666 = vmatpush1.msra.mxu0 %v2520
  %2667 = vmatprep.subr.mxu0 0.0
  %2668 = vmatpush1.msra.mxu0 %v2521
  %2669 = vmatprep.subr.mxu0 0.0
  %2670 = vmatpush1.msra.mxu0 %v2522
  %2671 = vmatprep.subr.mxu0 0.0
  %2672 = vmatpush1.msra.mxu0 0.0
  %2673 = vmatprep.subr.mxu0 0.0
  %2674 = vmatpush1.msra.mxu0 0.0
  %2675 = vmatprep.subr.mxu0 0.0
  %2676 = vmatpush1.msra.mxu0 0.0
  %2677 = vmatprep.subr.mxu0 0.0
  %2678 = vmatpush1.msra.mxu0 0.0
  %2679 = vmatprep.subr.mxu0 0.0
  %2680 = vmatpush1.msra.mxu0 0.0
  %2681 = vmatprep.subr.mxu0 0.0
  %2682 = vmatpush1.msra.mxu0 0.0
  %2683 = vmatprep.subr.mxu0 0.0
  %2684 = vmatpush1.msra.mxu0 0.0
  %2685 = vmatprep.subr.mxu0 0.0
  %2686 = vmatpush1.msra.mxu0 0.0
  %2687 = vmatprep.subr.mxu0 0.0
  %2688 = vmatpush1.msra.mxu0 0.0
  %2689 = vmatprep.subr.mxu0 0.0
  %2690 = vmatpush1.msra.mxu0 0.0
  %2691 = vmatprep.subr.mxu0 0.0
  %2692 = vmatpush1.msra.mxu0 0.0
  %2693 = vmatprep.subr.mxu0 0.0
  %2694 = vmatpush1.msra.mxu0 0.0
  %2695 = vmatprep.subr.mxu0 0.0
  %2696 = vmatpush1.msra.mxu0 0.0
  %2697 = vmatprep.subr.mxu0 0.0
  %2698 = vmatpush1.msra.mxu0 0.0
  %2699 = vmatprep.subr.mxu0 0.0
  %2700 = vmatpush1.msra.mxu0 0.0
  %2701 = vmatprep.subr.mxu0 0.0
  %2702 = vmatpush1.msra.mxu0 0.0
  %2703 = vmatprep.mubr.f32.mxu0 0.0
  %2704 = vmatmul.mubr.f32.gmra.mrb[0].mxu0 %v983
  %v2705 = vpop.f32.mrb[0].mxu0
  %v2706 = vadd.f32 %v2636, %v2705
  %v2707 = vpop.f32.mrb[0].mxu0
  %2708 = vdwg.mxu0
  %v2710 = vlaneseq
  %v2711 = vshrl.u32 %v2710, 7
  %v2712 = vsub.s32 0, %v2711
  %v2713 = vrot.slane %v70, %v2712
  %v2715 = vadd.f32 %v2706, %v2713
  %v2716 = vtanh.pop %v2715
  %v2717 = vld [vmem:[%s13] sm:$0xff]
  %v2718 = vld [vmem:[%s13 + $0x8] sm:$0xff]
  %v2719 = vld [vmem:[%s13 + $0x10] sm:$0xff]
  %v2720 = vld [vmem:[%s13 + $0x18] sm:$0xff]
  %v2721 = vld [vmem:[%s13 + $0x20] sm:$0xff]
  %v2722 = vld [vmem:[%s13 + $0x28] sm:$0xff]
  %v2723 = vld [vmem:[%s13 + $0x30] sm:$0xff]
  %v2724 = vld [vmem:[%s13 + $0x38] sm:$0xff]
  %v2725 = vld [vmem:[%s13 + $0x40] sm:$0xff]
  %v2726 = vld [vmem:[%s13 + $0x48] sm:$0xff]
  %v2727 = vld [vmem:[%s13 + $0x50] sm:$0xff]
  %v2728 = vld [vmem:[%s13 + $0x58] sm:$0xff]
  %v2729 = vld [vmem:[%s13 + $0x60] sm:$0xff]
  %v2730 = vld [vmem:[%s13 + $0x68] sm:$0xff]
  %v2731 = vld [vmem:[%s13 + $0x70] sm:$0xff]
  %v2732 = vld [vmem:[%s13 + $0x78] sm:$0xff]
  %v2734 = vlaneseq
  %v2735 = vshrl.u32 %v2734, 7
  %v2736 = vsub.s32 0, %v2735
  %v2737 = vrot.slane %v71, %v2736
  %2739 = vmatprep.subr.mxu0 0.0
  %2740 = vmatpush1.msra.mxu0 %v2717
  %2741 = vmatprep.subr.mxu0 0.0
  %2742 = vmatpush1.msra.mxu0 %v2718
  %2743 = vmatprep.subr.mxu0 0.0
  %2744 = vmatpush1.msra.mxu0 %v2719
  %2745 = vmatprep.subr.mxu0 0.0
  %2746 = vmatpush1.msra.mxu0 %v2720
  %2747 = vmatprep.subr.mxu0 0.0
  %2748 = vmatpush1.msra.mxu0 %v2721
  %2749 = vmatprep.subr.mxu0 0.0
  %2750 = vmatpush1.msra.mxu0 %v2722
  %2751 = vmatprep.subr.mxu0 0.0
  %2752 = vmatpush1.msra.mxu0 %v2723
  %2753 = vmatprep.subr.mxu0 0.0
  %2754 = vmatpush1.msra.mxu0 %v2724
  %2755 = vmatprep.subr.mxu0 0.0
  %2756 = vmatpush1.msra.mxu0 %v2725
  %2757 = vmatprep.subr.mxu0 0.0
  %2758 = vmatpush1.msra.mxu0 %v2726
  %2759 = vmatprep.subr.mxu0 0.0
  %2760 = vmatpush1.msra.mxu0 %v2727
  %2761 = vmatprep.subr.mxu0 0.0
  %2762 = vmatpush1.msra.mxu0 %v2728
  %2763 = vmatprep.subr.mxu0 0.0
  %2764 = vmatpush1.msra.mxu0 %v2729
  %2765 = vmatprep.subr.mxu0 0.0
  %2766 = vmatpush1.msra.mxu0 %v2730
  %2767 = vmatprep.subr.mxu0 0.0
  %2768 = vmatpush1.msra.mxu0 %v2731
  %2769 = vmatprep.subr.mxu0 0.0
  %2770 = vmatpush1.msra.mxu0 %v2732
  %2771 = vmatprep.subr.mxu0 0.0
  %2772 = vmatpush1.msra.mxu0 0.0
  %2773 = vmatprep.subr.mxu0 0.0
  %2774 = vmatpush1.msra.mxu0 0.0
  %2775 = vmatprep.subr.mxu0 0.0
  %2776 = vmatpush1.msra.mxu0 0.0
  %2777 = vmatprep.subr.mxu0 0.0
  %2778 = vmatpush1.msra.mxu0 0.0
  %2779 = vmatprep.subr.mxu0 0.0
  %2780 = vmatpush1.msra.mxu0 0.0
  %2781 = vmatprep.subr.mxu0 0.0
  %2782 = vmatpush1.msra.mxu0 0.0
  %2783 = vmatprep.subr.mxu0 0.0
  %2784 = vmatpush1.msra.mxu0 0.0
  %2785 = vmatprep.subr.mxu0 0.0
  %2786 = vmatpush1.msra.mxu0 0.0
  %2787 = vmatprep.subr.mxu0 0.0
  %2788 = vmatpush1.msra.mxu0 0.0
  %2789 = vmatprep.subr.mxu0 0.0
  %2790 = vmatpush1.msra.mxu0 0.0
  %2791 = vmatprep.subr.mxu0 0.0
  %2792 = vmatpush1.msra.mxu0 0.0
  %2793 = vmatprep.subr.mxu0 0.0
  %2794 = vmatpush1.msra.mxu0 0.0
  %2795 = vmatprep.subr.mxu0 0.0
  %2796 = vmatpush1.msra.mxu0 0.0
  %2797 = vmatprep.subr.mxu0 0.0
  %2798 = vmatpush1.msra.mxu0 0.0
  %2799 = vmatprep.subr.mxu0 0.0
  %2800 = vmatpush1.msra.mxu0 0.0
  %2801 = vmatprep.subr.mxu0 0.0
  %2802 = vmatpush1.msra.mxu0 0.0
  %2803 = vmatprep.mubr.f32.mxu0 0.0
  %2804 = vmatmul.mubr.f32.gmra.mrb[0].mxu0 %v2716
  %v2805 = vpop.f32.mrb[0].mxu0
  %v2806 = vadd.f32 %v2737, %v2805
  %v2807 = vpop.f32.mrb[0].mxu0
  %2808 = vdwg.mxu0
  %2809 = vst [vmem:[%s15] sm:$0xff] %v2806
  %p2810 = scmp.lt.s32.totalorder 0, 1
  %s2811 = scalar_select %p2810, 1, 0
  %v2812 = vstv %s2811
  %vm2813 = vcmp.eq.s32.totalorder %v2812, 1
  %v2814 = vsel %vm2813, %v530, %v72
  %v2815 = vsel %vm2813, %v983, %v74
  %2816 = vst [vmem:[%s16] sm:$0xff] %v2814
  %2817 = vst [vmem:[%s73] sm:$0xff] %v2815
  // Predicated region
  $region66: #{decoder_forward.1} parent=0 // pred_check
    _
  $region67: #{decoder_forward.1} parent=0 // pred_check_branch
    %2819 = sbr.rel (0) target = $region69
  $region68: #{decoder_forward.1} parent=0 // pred_region
    _
  $region69: #{decoder_forward.1} parent=0 // pred_fallthru
    _
  // Predicated region
  $region70: #{decoder_forward.1} parent=0 // pred_check
    _
  $region71: #{decoder_forward.1} parent=0 // pred_check_branch
    %2821 = sbr.rel (0) target = $region73
  $region72: #{decoder_forward.1} parent=0 // pred_region
    _
  $region73: #{decoder_forward.1} parent=0 // pred_fallthru
    _
  // Predicated region
  $region74: #{decoder_forward.1} parent=0 // pred_check
    _
  $region75: #{decoder_forward.1} parent=0 // pred_check_branch
    %2823 = sbr.rel (0) target = $region77
  $region76: #{decoder_forward.1} parent=0 // pred_region
    _
  $region77: #{decoder_forward.1} parent=0 // pred_fallthru
    _
  // Predicated region
  $region78: #{decoder_forward.1} parent=0 // pred_check
    _
  $region79: #{decoder_forward.1} parent=0 // pred_check_branch
    %2825 = sbr.rel (0) target = $region81
  $region80: #{decoder_forward.1} parent=0 // pred_region
    _
  $region81: #{decoder_forward.1} parent=0 // pred_fallthru
    _

</llo_original>
